<compile_context>
chip_gen: v7x
topology: tpu7x:2x2x1
jax: 0.10.0
libtpu: 0.0.40
codegen_flags: <defaults>
</compile_context>

<pallas_src>
import math
from functools import partial

import jax
import jax.numpy as jnp
import numpy as np
from jax.experimental import pallas as pl
from jax.experimental.pallas import tpu as pltpu


# ----------------------------------------------------------------------------
# Host-side band-matrix construction (NumPy, done once per parameter set).
# Column layout everywhere: flat index = (y * W + x) * C + c.
# ----------------------------------------------------------------------------
def _band_conv3x3(w, H, W):
    """Conv2d(Cin->Cout, k=3, s=1, p=1) as a (H*W*Cin, H*W*Cout) matrix.

    w: (Cout, Cin, 3, 3) float32 numpy array.
    """
    band = np.zeros((H * W * w.shape[1], H * W * w.shape[0]), np.float32)
    for dy in range(3):
        for dx in range(3):
            s = np.zeros((H * W, H * W), np.float32)
            for oy in range(H):
                iy = oy + dy - 1
                if not 0 <= iy < H:
                    continue
                for ox in range(W):
                    ix = ox + dx - 1
                    if not 0 <= ix < W:
                        continue
                    s[iy * W + ix, oy * W + ox] = 1.0
            band += np.kron(s, w[:, :, dy, dx].T)          # (Cin, Cout) block
    return band


def _band_convT4(w, H, W):
    """ConvTranspose2d(Cin->Cout, k=4, s=2, p=1): (H*W*Cin, 4*H*W*Cout) matrix.

    w: (Cin, Cout, 4, 4) float32.  out[oy, ox] += in[iy, ix] @ w[:, :, ky, kx]
    with oy = 2*iy + ky - 1, ox = 2*ix + kx - 1 (PyTorch semantics).
    """
    Ho, Wo = 2 * H, 2 * W
    band = np.zeros((H * W * w.shape[0], Ho * Wo * w.shape[1]), np.float32)
    for ky in range(4):
        for kx in range(4):
            s = np.zeros((H * W, Ho * Wo), np.float32)
            for iy in range(H):
                oy = 2 * iy + ky - 1
                if not 0 <= oy < Ho:
                    continue
                for ix in range(W):
                    ox = 2 * ix + kx - 1
                    if not 0 <= ox < Wo:
                        continue
                    s[iy * W + ix, oy * Wo + ox] = 1.0
            band += np.kron(s, w[:, :, ky, kx])             # (Cin, Cout) block
    return band


def _bias_row(b, n_pix):
    return np.tile(np.asarray(b, np.float32), n_pix)[None, :]


def prepare_decoder(params, in_height, in_width):
    """Precompute bf16 band matrices + f32 bias rows (outside the jitted fwd)."""
    n_res, n_stages = len(params["res"]), len(params["convt"])
    H, W = in_height, in_width
    C = params["convt"][0]["w"].shape[0]
    mats, biases = [], []
    for p in params["res"]:
        for w, b in ((p["w1"], p["b1"]), (p["w2"], p["b2"])):
            w_np = np.asarray(jax.device_get(w), np.float32)
            mats.append(_band_conv3x3(w_np, H, W))
            biases.append(_bias_row(jax.device_get(b), H * W))
    Hc, Wc = H, W
    for p in params["convt"]:
        w_np = np.asarray(jax.device_get(p["w"]), np.float32)
        mats.append(_band_convT4(w_np, Hc, Wc))
        biases.append(_bias_row(jax.device_get(p["b"]), 4 * Hc * Wc))
        Hc, Wc = 2 * Hc, 2 * Wc
    return {
        "n_res": n_res, "n_stages": n_stages,
        "in_hw": (H, W), "in_ch": C,
        "out_hw": (Hc, Wc), "out_ch": params["convt"][-1]["w"].shape[1],
        "mats": [jnp.asarray(m, jnp.bfloat16) for m in mats],
        "biases": [jnp.asarray(b, jnp.float32) for b in biases],
    }


# ----------------------------------------------------------------------------
# Fully-fused decoder kernel: one grid step == one block of images.
# ----------------------------------------------------------------------------
def _make_decoder_kernel(n_res, n_stages):
    n_mats = 2 * n_res + n_stages

    def kernel(*refs):
        x_ref = refs[0]                         # (blk, Kin) f32
        w_refs = refs[1:1 + n_mats]             # bf16 band matrices
        b_refs = refs[1 + n_mats:1 + 2 * n_mats]  # (1, K) f32 bias rows
        out_ref = refs[1 + 2 * n_mats]          # (blk, Kout) f32

        def layer(h, i):
            # bf16 x bf16 MXU matmul, f32 accumulation; bias add in f32.
            return jnp.dot(h.astype(jnp.bfloat16), w_refs[i][...],
                           preferred_element_type=jnp.float32) + b_refs[i][...]

        h = x_ref[...].astype(jnp.float32)
        li = 0
        for _ in range(n_res):
            t = jnp.maximum(layer(h, li), 0.0)            # relu(conv1(x))
            h = jnp.maximum(h + layer(t, li + 1), 0.0)    # relu(x + conv2(t))
            li += 2
        for s in range(n_stages):
            h = layer(h, li)
            li += 1
            if s < n_stages - 1:
                h = jnp.maximum(h, 0.0)
        out_ref[...] = h

    return kernel


# ----------------------------------------------------------------------------
# Decoder_v1 forward
# ----------------------------------------------------------------------------
def decoder_forward(prep, x_nchw, imgs_per_block=64):
    N, C, H, W = x_nchw.shape
    assert (H, W) == prep["in_hw"] and C == prep["in_ch"], "input shape mismatch"
    mats, biases = prep["mats"], prep["biases"]
    k_in, k_out = mats[0].shape[0], mats[-1].shape[1]
    Ho, Wo = prep["out_hw"]
    Cf = prep["out_ch"]

    x2d = jnp.transpose(x_nchw, (0, 2, 3, 1)).reshape(N, k_in).astype(jnp.float32)

    # Image-block size: multiple of 8 rows; keep >= 2 grid steps when possible
    # so both v7x TensorCores get work on the ("parallel",) grid axis.
    blk = int(imgs_per_block)
    if N <= blk:
        blk = max(8, ((N + 15) // 16) * 8)
    n_blocks = -(-N // blk)
    n_pad = n_blocks * blk
    if n_pad != N:
        x2d = jnp.pad(x2d, ((0, n_pad - N), (0, 0)))

    def _const_spec(a):
        nd = a.ndim
        return pl.BlockSpec(a.shape, lambda n, _nd=nd: (0,) * _nd)

    in_specs = [pl.BlockSpec((blk, k_in), lambda n: (n, 0))]
    in_specs += [_const_spec(a) for a in mats]
    in_specs += [_const_spec(a) for a in biases]

    out2d = pl.pallas_call(
        _make_decoder_kernel(prep["n_res"], prep["n_stages"]),
        out_shape=jax.ShapeDtypeStruct((n_pad, k_out), jnp.float32),
        grid=(n_blocks,),
        in_specs=in_specs,
        out_specs=pl.BlockSpec((blk, k_out), lambda n: (n, 0)),
        compiler_params=pltpu.CompilerParams(
            dimension_semantics=("parallel",)),
    )(x2d, *mats, *biases)

    return out2d[:N].reshape(N, Ho, Wo, Cf).transpose(0, 3, 1, 2)


# ----------------------------------------------------------------------------
# Parameter init (PyTorch default init conventions)
# ----------------------------------------------------------------------------
def _conv_params(key, cout, cin, k):
    bound = 1.0 / math.sqrt(cin * k * k)
    kw, kb = jax.random.split(key)
    w = jax.random.uniform(kw, (cout, cin, k, k), jnp.float32, -bound, bound)
    b = jax.random.uniform(kb, (cout,), jnp.float32, -bound, bound)
    return w, b


def _convt_params(key, cin, cout, k):
    bound = 1.0 / math.sqrt(cout * k * k)   # PyTorch fan_in for ConvTranspose2d
    kw, kb = jax.random.split(key)
    w = jax.random.uniform(kw, (cin, cout, k, k), jnp.float32, -bound, bound)
    b = jax.random.uniform(kb, (cout,), jnp.float32, -bound, bound)
    return w, b


def init_decoder_params(key, num_channels, height, width, conv_hidden,
                        scale_factor, res_blocks):
    assert width % scale_factor == 0 and height % scale_factor == 0
    num_stages = int(math.log2(scale_factor))
    assert scale_factor == 2 ** num_stages
    channels = [2 ** s * conv_hidden for s in reversed(range(num_stages))]
    channels += [num_channels]

    params = {"res": [], "convt": []}
    for _ in range(res_blocks):
        key, k1, k2 = jax.random.split(key, 3)
        w1, b1 = _conv_params(k1, channels[0], channels[0], 3)
        w2, b2 = _conv_params(k2, channels[0], channels[0], 3)
        params["res"].append({"w1": w1, "b1": b1, "w2": w2, "b2": b2})
    for in_ch, out_ch in zip(channels, channels[1:]):
        key, kt = jax.random.split(key)
        w, b = _convt_params(kt, in_ch, out_ch, 4)
        params["convt"].append({"w": w, "b": b})
    return params


def _quantize_weights(params):
    """Round conv weights to bf16 (what the kernel uses); biases stay f32."""
    q = lambda a: a.astype(jnp.bfloat16).astype(jnp.float32)
    return {
        "res": [{"w1": q(p["w1"]), "b1": p["b1"], "w2": q(p["w2"]), "b2": p["b2"]}
                for p in params["res"]],
        "convt": [{"w": q(p["w"]), "b": p["b"]} for p in params["convt"]],
    }


# ----------------------------------------------------------------------------
# Plain-XLA reference (same PyTorch semantics) for the in-script numeric check
# ----------------------------------------------------------------------------
def reference_forward(params, x_nchw):
    dn = ("NHWC", "HWIO", "NHWC")
    prec = jax.lax.Precision.HIGHEST
    x = jnp.transpose(x_nchw, (0, 2, 3, 1)).astype(jnp.float32)

    def conv3(h, w, b):
        wh = jnp.transpose(w, (2, 3, 1, 0))
        return jax.lax.conv_general_dilated(
            h, wh, (1, 1), ((1, 1), (1, 1)),
            dimension_numbers=dn, precision=prec) + b

    def convt4(h, w, b):
        wh = jnp.transpose(jnp.flip(w, (2, 3)), (2, 3, 0, 1))
        return jax.lax.conv_general_dilated(
            h, wh, (1, 1), ((2, 2), (2, 2)), lhs_dilation=(2, 2),
            dimension_numbers=dn, precision=prec) + b

    for p in params["res"]:
        h = jax.nn.relu(conv3(x, p["w1"], p["b1"]))
        x = jax.nn.relu(x + conv3(h, p["w2"], p["b2"]))
    n = len(params["convt"])
    for i, p in enumerate(params["convt"]):
        x = convt4(x, p["w"], p["b"])
        if i < n - 1:
            x = jax.nn.relu(x)
    return jnp.transpose(x, (0, 3, 1, 2))


if __name__ == "__main__":
    # Config consistent with the module:
    # obs_space = Image(num_channels=3, height=16, width=16),
    # conv_hidden=8, scale_factor=4, res_blocks=2
    num_channels, height, width = 3, 16, 16
    conv_hidden, scale_factor, res_blocks = 8, 4, 2

    root = jax.random.PRNGKey(0)
    k_params, k_input = jax.random.split(root)
    params = init_decoder_params(k_params, num_channels, height, width,
                                 conv_hidden, scale_factor, res_blocks)
    # Kernel uses bf16 band weights; use the same (rounded) weights everywhere
    # so the reference check only measures kernel-side activation rounding.
    params = _quantize_weights(params)

    cur_h, cur_w = height // scale_factor, width // scale_factor
    cur_nc = conv_hidden * (scale_factor // 2)   # in_shape = (cur_nc, cur_h, cur_w)
    batch = 128                                  # 2 grid steps of 64 images
    x = jax.random.normal(k_input, (batch, cur_nc, cur_h, cur_w), jnp.float32)

    prep = prepare_decoder(params, cur_h, cur_w)   # host-side, once per params
    fwd = jax.jit(partial(decoder_forward, prep))
    y = fwd(x)
    jax.block_until_ready(y)
    assert y.shape == (batch, num_channels, height, width), y.shape
    assert y.dtype == jnp.float32

    y_ref = jax.jit(partial(reference_forward, params))(x)
    jax.block_until_ready(y_ref)
    err = float(jnp.max(jnp.abs(y - y_ref)))
    assert err < 5e-2, f"kernel/reference mismatch: max abs err = {err}"

    print("KERNEL_OK")
</pallas_src>

<mosaic_0001>
module attributes {stable_mosaic.version = 11 : i64} {
  func.func @kernel(%arg0: i32, %arg1: memref<64x256xf32, #tpu.memory_space<vmem>>, %arg2: memref<256x256xbf16, #tpu.memory_space<vmem>>, %arg3: memref<256x256xbf16, #tpu.memory_space<vmem>>, %arg4: memref<256x256xbf16, #tpu.memory_space<vmem>>, %arg5: memref<256x256xbf16, #tpu.memory_space<vmem>>, %arg6: memref<256x512xbf16, #tpu.memory_space<vmem>>, %arg7: memref<512x768xbf16, #tpu.memory_space<vmem>>, %arg8: memref<1x256xf32, #tpu.memory_space<vmem>>, %arg9: memref<1x256xf32, #tpu.memory_space<vmem>>, %arg10: memref<1x256xf32, #tpu.memory_space<vmem>>, %arg11: memref<1x256xf32, #tpu.memory_space<vmem>>, %arg12: memref<1x512xf32, #tpu.memory_space<vmem>>, %arg13: memref<1x768xf32, #tpu.memory_space<vmem>>, %arg14: memref<64x768xf32, #tpu.memory_space<vmem>>) attributes {dimension_semantics = [#tpu.dimension_semantics<parallel>], iteration_bounds = array<i64: 2>, scalar_prefetch = 0 : i64, scratch_operands = 0 : i64, tpu.core_type = #tpu.core_type<tc>, window_params = [{transform_indices = @transform_0, window_bounds = array<i64: 64, 256>}, {pipeline_mode = #tpu.pipeline_mode<synchronous>, transform_indices = @transform_1, window_bounds = array<i64: 256, 256>}, {pipeline_mode = #tpu.pipeline_mode<synchronous>, transform_indices = @transform_2, window_bounds = array<i64: 256, 256>}, {pipeline_mode = #tpu.pipeline_mode<synchronous>, transform_indices = @transform_3, window_bounds = array<i64: 256, 256>}, {pipeline_mode = #tpu.pipeline_mode<synchronous>, transform_indices = @transform_4, window_bounds = array<i64: 256, 256>}, {pipeline_mode = #tpu.pipeline_mode<synchronous>, transform_indices = @transform_5, window_bounds = array<i64: 256, 512>}, {pipeline_mode = #tpu.pipeline_mode<synchronous>, transform_indices = @transform_6, window_bounds = array<i64: 512, 768>}, {pipeline_mode = #tpu.pipeline_mode<synchronous>, transform_indices = @transform_7, window_bounds = array<i64: 1, 256>}, {pipeline_mode = #tpu.pipeline_mode<synchronous>, transform_indices = @transform_8, window_bounds = array<i64: 1, 256>}, {pipeline_mode = #tpu.pipeline_mode<synchronous>, transform_indices = @transform_9, window_bounds = array<i64: 1, 256>}, {pipeline_mode = #tpu.pipeline_mode<synchronous>, transform_indices = @transform_10, window_bounds = array<i64: 1, 256>}, {pipeline_mode = #tpu.pipeline_mode<synchronous>, transform_indices = @transform_11, window_bounds = array<i64: 1, 512>}, {pipeline_mode = #tpu.pipeline_mode<synchronous>, transform_indices = @transform_12, window_bounds = array<i64: 1, 768>}, {transform_indices = @transform_13, window_bounds = array<i64: 64, 768>}]} {
    %c0 = arith.constant 0 : index
    %c0_0 = arith.constant 0 : index
    %0 = vector.load %arg1[%c0, %c0_0] : memref<64x256xf32, #tpu.memory_space<vmem>>, vector<64x256xf32>
    %1 = arith.truncf %0 : vector<64x256xf32> to vector<64x256xbf16>
    %c0_1 = arith.constant 0 : index
    %c0_2 = arith.constant 0 : index
    %2 = vector.load %arg2[%c0_1, %c0_2] : memref<256x256xbf16, #tpu.memory_space<vmem>>, vector<256x256xbf16>
    %cst = arith.constant dense<0.000000e+00> : vector<64x256xf32>
    %3 = tpu.matmul %1, %2, %cst {dimension_numbers = #tpu.dot_dimension_numbers<[1], [0], [0], [1], [0, 0, 1, 1], [], []>} : vector<64x256xbf16>, vector<256x256xbf16>, vector<64x256xf32> -> vector<64x256xf32>
    %c0_3 = arith.constant 0 : index
    %c0_4 = arith.constant 0 : index
    %4 = vector.load %arg8[%c0_3, %c0_4] : memref<1x256xf32, #tpu.memory_space<vmem>>, vector<1x256xf32>
    %5 = vector.broadcast %4 : vector<1x256xf32> to vector<64x256xf32>
    %6 = arith.addf %3, %5 : vector<64x256xf32>
    %cst_5 = arith.constant 0.000000e+00 : f32
    %7 = vector.broadcast %cst_5 : f32 to vector<64x256xf32>
    %8 = arith.maximumf %6, %7 : vector<64x256xf32>
    %9 = arith.truncf %8 : vector<64x256xf32> to vector<64x256xbf16>
    %c0_6 = arith.constant 0 : index
    %c0_7 = arith.constant 0 : index
    %10 = vector.load %arg3[%c0_6, %c0_7] : memref<256x256xbf16, #tpu.memory_space<vmem>>, vector<256x256xbf16>
    %cst_8 = arith.constant dense<0.000000e+00> : vector<64x256xf32>
    %11 = tpu.matmul %9, %10, %cst_8 {dimension_numbers = #tpu.dot_dimension_numbers<[1], [0], [0], [1], [0, 0, 1, 1], [], []>} : vector<64x256xbf16>, vector<256x256xbf16>, vector<64x256xf32> -> vector<64x256xf32>
    %c0_9 = arith.constant 0 : index
    %c0_10 = arith.constant 0 : index
    %12 = vector.load %arg9[%c0_9, %c0_10] : memref<1x256xf32, #tpu.memory_space<vmem>>, vector<1x256xf32>
    %13 = vector.broadcast %12 : vector<1x256xf32> to vector<64x256xf32>
    %14 = arith.addf %11, %13 : vector<64x256xf32>
    %15 = arith.addf %0, %14 : vector<64x256xf32>
    %cst_11 = arith.constant 0.000000e+00 : f32
    %16 = vector.broadcast %cst_11 : f32 to vector<64x256xf32>
    %17 = arith.maximumf %15, %16 : vector<64x256xf32>
    %18 = arith.truncf %17 : vector<64x256xf32> to vector<64x256xbf16>
    %c0_12 = arith.constant 0 : index
    %c0_13 = arith.constant 0 : index
    %19 = vector.load %arg4[%c0_12, %c0_13] : memref<256x256xbf16, #tpu.memory_space<vmem>>, vector<256x256xbf16>
    %cst_14 = arith.constant dense<0.000000e+00> : vector<64x256xf32>
    %20 = tpu.matmul %18, %19, %cst_14 {dimension_numbers = #tpu.dot_dimension_numbers<[1], [0], [0], [1], [0, 0, 1, 1], [], []>} : vector<64x256xbf16>, vector<256x256xbf16>, vector<64x256xf32> -> vector<64x256xf32>
    %c0_15 = arith.constant 0 : index
    %c0_16 = arith.constant 0 : index
    %21 = vector.load %arg10[%c0_15, %c0_16] : memref<1x256xf32, #tpu.memory_space<vmem>>, vector<1x256xf32>
    %22 = vector.broadcast %21 : vector<1x256xf32> to vector<64x256xf32>
    %23 = arith.addf %20, %22 : vector<64x256xf32>
    %cst_17 = arith.constant 0.000000e+00 : f32
    %24 = vector.broadcast %cst_17 : f32 to vector<64x256xf32>
    %25 = arith.maximumf %23, %24 : vector<64x256xf32>
    %26 = arith.truncf %25 : vector<64x256xf32> to vector<64x256xbf16>
    %c0_18 = arith.constant 0 : index
    %c0_19 = arith.constant 0 : index
    %27 = vector.load %arg5[%c0_18, %c0_19] : memref<256x256xbf16, #tpu.memory_space<vmem>>, vector<256x256xbf16>
    %cst_20 = arith.constant dense<0.000000e+00> : vector<64x256xf32>
    %28 = tpu.matmul %26, %27, %cst_20 {dimension_numbers = #tpu.dot_dimension_numbers<[1], [0], [0], [1], [0, 0, 1, 1], [], []>} : vector<64x256xbf16>, vector<256x256xbf16>, vector<64x256xf32> -> vector<64x256xf32>
    %c0_21 = arith.constant 0 : index
    %c0_22 = arith.constant 0 : index
    %29 = vector.load %arg11[%c0_21, %c0_22] : memref<1x256xf32, #tpu.memory_space<vmem>>, vector<1x256xf32>
    %30 = vector.broadcast %29 : vector<1x256xf32> to vector<64x256xf32>
    %31 = arith.addf %28, %30 : vector<64x256xf32>
    %32 = arith.addf %17, %31 : vector<64x256xf32>
    %cst_23 = arith.constant 0.000000e+00 : f32
    %33 = vector.broadcast %cst_23 : f32 to vector<64x256xf32>
    %34 = arith.maximumf %32, %33 : vector<64x256xf32>
    %35 = arith.truncf %34 : vector<64x256xf32> to vector<64x256xbf16>
    %c0_24 = arith.constant 0 : index
    %c0_25 = arith.constant 0 : index
    %36 = vector.load %arg6[%c0_24, %c0_25] : memref<256x512xbf16, #tpu.memory_space<vmem>>, vector<256x512xbf16>
    %cst_26 = arith.constant dense<0.000000e+00> : vector<64x512xf32>
    %37 = tpu.matmul %35, %36, %cst_26 {dimension_numbers = #tpu.dot_dimension_numbers<[1], [0], [0], [1], [0, 0, 1, 1], [], []>} : vector<64x256xbf16>, vector<256x512xbf16>, vector<64x512xf32> -> vector<64x512xf32>
    %c0_27 = arith.constant 0 : index
    %c0_28 = arith.constant 0 : index
    %38 = vector.load %arg12[%c0_27, %c0_28] : memref<1x512xf32, #tpu.memory_space<vmem>>, vector<1x512xf32>
    %39 = vector.broadcast %38 : vector<1x512xf32> to vector<64x512xf32>
    %40 = arith.addf %37, %39 : vector<64x512xf32>
    %cst_29 = arith.constant 0.000000e+00 : f32
    %41 = vector.broadcast %cst_29 : f32 to vector<64x512xf32>
    %42 = arith.maximumf %40, %41 : vector<64x512xf32>
    %43 = arith.truncf %42 : vector<64x512xf32> to vector<64x512xbf16>
    %c0_30 = arith.constant 0 : index
    %c0_31 = arith.constant 0 : index
    %44 = vector.load %arg7[%c0_30, %c0_31] : memref<512x768xbf16, #tpu.memory_space<vmem>>, vector<512x768xbf16>
    %cst_32 = arith.constant dense<0.000000e+00> : vector<64x768xf32>
    %45 = tpu.matmul %43, %44, %cst_32 {dimension_numbers = #tpu.dot_dimension_numbers<[1], [0], [0], [1], [0, 0, 1, 1], [], []>} : vector<64x512xbf16>, vector<512x768xbf16>, vector<64x768xf32> -> vector<64x768xf32>
    %c0_33 = arith.constant 0 : index
    %c0_34 = arith.constant 0 : index
    %46 = vector.load %arg13[%c0_33, %c0_34] : memref<1x768xf32, #tpu.memory_space<vmem>>, vector<1x768xf32>
    %47 = vector.broadcast %46 : vector<1x768xf32> to vector<64x768xf32>
    %48 = arith.addf %45, %47 : vector<64x768xf32>
    %c0_35 = arith.constant 0 : index
    %c0_36 = arith.constant 0 : index
    %49 = vector.load %arg14[%c0_35, %c0_36] : memref<64x768xf32, #tpu.memory_space<vmem>>, vector<64x768xf32>
    tpu.vector_store %arg14[%c0_35, %c0_36], %48 {strides = array<i32>} : memref<64x768xf32, #tpu.memory_space<vmem>>, vector<64x768xf32>,
    return
  }
  func.func @transform_0(%arg0: i32) -> (i32, i32) {
    %c0_i32 = arith.constant 0 : i32
    %c0_i32_0 = arith.constant 0 : i32
    return %arg0, %c0_i32 : i32, i32
  }
  func.func @transform_1(%arg0: i32) -> (i32, i32) {
    %c0_i32 = arith.constant 0 : i32
    %c0_i32_0 = arith.constant 0 : i32
    %c0_i32_1 = arith.constant 0 : i32
    return %c0_i32, %c0_i32_0 : i32, i32
  }
  func.func @transform_2(%arg0: i32) -> (i32, i32) {
    %c0_i32 = arith.constant 0 : i32
    %c0_i32_0 = arith.constant 0 : i32
    %c0_i32_1 = arith.constant 0 : i32
    return %c0_i32, %c0_i32_0 : i32, i32
  }
  func.func @transform_3(%arg0: i32) -> (i32, i32) {
    %c0_i32 = arith.constant 0 : i32
    %c0_i32_0 = arith.constant 0 : i32
    %c0_i32_1 = arith.constant 0 : i32
    return %c0_i32, %c0_i32_0 : i32, i32
  }
  func.func @transform_4(%arg0: i32) -> (i32, i32) {
    %c0_i32 = arith.constant 0 : i32
    %c0_i32_0 = arith.constant 0 : i32
    %c0_i32_1 = arith.constant 0 : i32
    return %c0_i32, %c0_i32_0 : i32, i32
  }
  func.func @transform_5(%arg0: i32) -> (i32, i32) {
    %c0_i32 = arith.constant 0 : i32
    %c0_i32_0 = arith.constant 0 : i32
    %c0_i32_1 = arith.constant 0 : i32
    return %c0_i32, %c0_i32_0 : i32, i32
  }
  func.func @transform_6(%arg0: i32) -> (i32, i32) {
    %c0_i32 = arith.constant 0 : i32
    %c0_i32_0 = arith.constant 0 : i32
    %c0_i32_1 = arith.constant 0 : i32
    return %c0_i32, %c0_i32_0 : i32, i32
  }
  func.func @transform_7(%arg0: i32) -> (i32, i32) {
    %c0_i32 = arith.constant 0 : i32
    %c0_i32_0 = arith.constant 0 : i32
    %c0_i32_1 = arith.constant 0 : i32
    return %c0_i32, %c0_i32_0 : i32, i32
  }
  func.func @transform_8(%arg0: i32) -> (i32, i32) {
    %c0_i32 = arith.constant 0 : i32
    %c0_i32_0 = arith.constant 0 : i32
    %c0_i32_1 = arith.constant 0 : i32
    return %c0_i32, %c0_i32_0 : i32, i32
  }
  func.func @transform_9(%arg0: i32) -> (i32, i32) {
    %c0_i32 = arith.constant 0 : i32
    %c0_i32_0 = arith.constant 0 : i32
    %c0_i32_1 = arith.constant 0 : i32
    return %c0_i32, %c0_i32_0 : i32, i32
  }
  func.func @transform_10(%arg0: i32) -> (i32, i32) {
    %c0_i32 = arith.constant 0 : i32
    %c0_i32_0 = arith.constant 0 : i32
    %c0_i32_1 = arith.constant 0 : i32
    return %c0_i32, %c0_i32_0 : i32, i32
  }
  func.func @transform_11(%arg0: i32) -> (i32, i32) {
    %c0_i32 = arith.constant 0 : i32
    %c0_i32_0 = arith.constant 0 : i32
    %c0_i32_1 = arith.constant 0 : i32
    return %c0_i32, %c0_i32_0 : i32, i32
  }
  func.func @transform_12(%arg0: i32) -> (i32, i32) {
    %c0_i32 = arith.constant 0 : i32
    %c0_i32_0 = arith.constant 0 : i32
    %c0_i32_1 = arith.constant 0 : i32
    return %c0_i32, %c0_i32_0 : i32, i32
  }
  func.func @transform_13(%arg0: i32) -> (i32, i32) {
    %c0_i32 = arith.constant 0 : i32
    %c0_i32_0 = arith.constant 0 : i32
    return %arg0, %c0_i32 : i32, i32
  }
}

</mosaic_0001>

<llo_original>
// kernel: decoder_forward.1
$region0: #{decoder_forward.1}
  #allocation0 [shape = 'u32[]', space=smem, size = 0x4, offset = 0x4, fixed_abs, tag = 'smem constant byte address 0x4 - core index']
  #allocation1 [shape = 'u32[144,128]{1,0:T(1,128)}', space=vmem, size = 0x12000, scoped, tag = 'internal scratch']
  %s0 = inlined_call_operand.vmem [shape: f32[128,256], index: 0, kind: input, shape index: {}]
  %s1 = inlined_call_operand.vmem [shape: bf16[256,256], index: 1, kind: input, shape index: {}]
  %s2 = inlined_call_operand.vmem [shape: bf16[256,256], index: 2, kind: input, shape index: {}]
  %s3 = inlined_call_operand.vmem [shape: bf16[256,256], index: 3, kind: input, shape index: {}]
  %s4 = inlined_call_operand.vmem [shape: bf16[256,256], index: 4, kind: input, shape index: {}]
  %s5 = inlined_call_operand.vmem [shape: bf16[256,512], index: 5, kind: input, shape index: {}]
  %s6 = inlined_call_operand.vmem [shape: bf16[512,768], index: 6, kind: input, shape index: {}]
  %s7 = inlined_call_operand.vmem [shape: f32[1,256], index: 7, kind: input, shape index: {}]
  %s8 = inlined_call_operand.vmem [shape: f32[1,256], index: 8, kind: input, shape index: {}]
  %s9 = inlined_call_operand.vmem [shape: f32[1,256], index: 9, kind: input, shape index: {}]
  %s10 = inlined_call_operand.vmem [shape: f32[1,256], index: 10, kind: input, shape index: {}]
  %s11 = inlined_call_operand.vmem [shape: f32[1,512], index: 11, kind: input, shape index: {}]
  %s12 = inlined_call_operand.vmem [shape: f32[1,768], index: 12, kind: input, shape index: {}]
  %s13 = inlined_call_operand.vmem [shape: f32[128,768], index: 13, kind: output, shape index: {}]
  %s14 = sld [smem:[#allocation0]]
  $region85: #{decoder_forward.1} parent=0
    _
  %s16 = ssub.s32 1, %s14
  %s17 = scalar_select 0, %s16, %s14
  loop: start=0, step=1, limit=4
  $region2: #{decoder_forward.1} parent=0 // loop_pre_header
    _
  $region3: #{decoder_forward.1} parent=0 // loop_header
    %s19 = sphi 0, %s23
    %p20 = scmp.ge.s32.totalorder %s19, 4
    %s29 = sphi 0, %s31
    %s32 = sphi 0, %s29
    %s33 = sphi 0, %s32
    %s49 = sphi 0, %s33
    %s53 = sphi 0, %s53
    %s55 = sphi 0, %s53
    %s56 = sphi 0, %s55
    %s70 = sphi 0, %s56
    %s74 = sphi 0, %s74
    %s76 = sphi 0, %s74
    %s77 = sphi 0, %s76
    %s91 = sphi 0, %s77
    %s95 = sphi 0, %s95
    %s97 = sphi 0, %s95
    %s98 = sphi 0, %s97
    %s112 = sphi 0, %s98
    %s116 = sphi 0, %s116
    %s118 = sphi 0, %s116
    %s119 = sphi 0, %s118
    %s133 = sphi 0, %s119
    %s137 = sphi 0, %s137
    %s139 = sphi 0, %s137
    %s140 = sphi 0, %s139
    %s154 = sphi 0, %s140
    %s158 = sphi 0, %s158
    %s160 = sphi 0, %s158
    %s161 = sphi 0, %s160
    %s175 = sphi 0, %s161
    %s179 = sphi 0, %s179
    %s181 = sphi 0, %s179
    %s182 = sphi 0, %s181
    %s196 = sphi 0, %s182
    %s200 = sphi 0, %s200
    %s202 = sphi 0, %s200
    %s203 = sphi 0, %s202
    %s217 = sphi 0, %s203
    %s221 = sphi 0, %s221
    %s223 = sphi 0, %s221
    %s224 = sphi 0, %s223
    %s238 = sphi 0, %s224
    %s242 = sphi 0, %s242
    %s244 = sphi 0, %s242
    %s245 = sphi 0, %s244
    %s259 = sphi 0, %s245
    %s263 = sphi 0, %s263
    %s265 = sphi 0, %s263
    %s266 = sphi 0, %s265
    %s280 = sphi 0, %s266
    %s284 = sphi 0, %s284
    %s286 = sphi 0, %s284
    %s287 = sphi 0, %s286
    %s301 = sphi 0, %s287
    %s307 = sphi 0, %s309
    %s310 = sphi 0, %s307
    %s311 = sphi 0, %s310
    %s327 = sphi 0, %s311
  $region4: #{decoder_forward.1} parent=0 // loop_header_branch
    %22 = sbr.rel (%p20) target = $region8
  $region5: #{decoder_forward.1} parent=0 // loop_body
    %s24 = ssub.s32 %s19, 1
    %s25 = ssub.s32 %s19, 2
    %s26 = sadd.s32 %s19, 1
    %s27 = ssub.s32 %s19, %s26
    %p28 = scmp.eq.s32.totalorder %s27, 0
    %s30 = sadd.s32 %s29, 1
    %s31 = scalar_select %p28, %s29, %s30
    %p34 = pneg %p28
    %p35 = scmp.eq.s32.totalorder %s19, 1
    %p36 = por %p34, %p35
    %p37 = scmp.ne.s32.totalorder %s29, %s32
    %p38 = scmp.eq.s32.totalorder %s19, 0
    %p39 = por %p37, %p38
    %p40 = scmp.ne.s32.totalorder %s29, %s32
    %p41 = scmp.eq.s32.totalorder %s24, 1
    %p42 = por %p40, %p41
    %p43 = scmp.ne.s32.totalorder %s32, %s33
    %p44 = scmp.eq.s32.totalorder %s24, 0
    %p45 = por %p43, %p44
    %p46 = scmp.ne.s32.totalorder %s32, %s33
    %p47 = scmp.eq.s32.totalorder %s25, 1
    %p48 = por %p46, %p47
    %p50 = scmp.ne.s32.totalorder %s33, %s49
    %p51 = scmp.eq.s32.totalorder %s25, 0
    %p52 = por %p50, %p51
    %s54 = sadd.s32 %s53, 1
    %p57 = scmp.eq.s32.totalorder %s19, 1
    %p58 = scmp.ne.s32.totalorder %s53, %s55
    %p59 = scmp.eq.s32.totalorder %s19, 0
    %p60 = por %p58, %p59
    %p61 = scmp.ne.s32.totalorder %s53, %s55
    %p62 = scmp.eq.s32.totalorder %s24, 1
    %p63 = por %p61, %p62
    %p64 = scmp.ne.s32.totalorder %s55, %s56
    %p65 = scmp.eq.s32.totalorder %s24, 0
    %p66 = por %p64, %p65
    %p67 = scmp.ne.s32.totalorder %s55, %s56
    %p68 = scmp.eq.s32.totalorder %s25, 1
    %p69 = por %p67, %p68
    %p71 = scmp.ne.s32.totalorder %s56, %s70
    %p72 = scmp.eq.s32.totalorder %s25, 0
    %p73 = por %p71, %p72
    %s75 = sadd.s32 %s74, 1
    %p78 = scmp.eq.s32.totalorder %s19, 1
    %p79 = scmp.ne.s32.totalorder %s74, %s76
    %p80 = scmp.eq.s32.totalorder %s19, 0
    %p81 = por %p79, %p80
    %p82 = scmp.ne.s32.totalorder %s74, %s76
    %p83 = scmp.eq.s32.totalorder %s24, 1
    %p84 = por %p82, %p83
    %p85 = scmp.ne.s32.totalorder %s76, %s77
    %p86 = scmp.eq.s32.totalorder %s24, 0
    %p87 = por %p85, %p86
    %p88 = scmp.ne.s32.totalorder %s76, %s77
    %p89 = scmp.eq.s32.totalorder %s25, 1
    %p90 = por %p88, %p89
    %p92 = scmp.ne.s32.totalorder %s77, %s91
    %p93 = scmp.eq.s32.totalorder %s25, 0
    %p94 = por %p92, %p93
    %s96 = sadd.s32 %s95, 1
    %p99 = scmp.eq.s32.totalorder %s19, 1
    %p100 = scmp.ne.s32.totalorder %s95, %s97
    %p101 = scmp.eq.s32.totalorder %s19, 0
    %p102 = por %p100, %p101
    %p103 = scmp.ne.s32.totalorder %s95, %s97
    %p104 = scmp.eq.s32.totalorder %s24, 1
    %p105 = por %p103, %p104
    %p106 = scmp.ne.s32.totalorder %s97, %s98
    %p107 = scmp.eq.s32.totalorder %s24, 0
    %p108 = por %p106, %p107
    %p109 = scmp.ne.s32.totalorder %s97, %s98
    %p110 = scmp.eq.s32.totalorder %s25, 1
    %p111 = por %p109, %p110
    %p113 = scmp.ne.s32.totalorder %s98, %s112
    %p114 = scmp.eq.s32.totalorder %s25, 0
    %p115 = por %p113, %p114
    %s117 = sadd.s32 %s116, 1
    %p120 = scmp.eq.s32.totalorder %s19, 1
    %p121 = scmp.ne.s32.totalorder %s116, %s118
    %p122 = scmp.eq.s32.totalorder %s19, 0
    %p123 = por %p121, %p122
    %p124 = scmp.ne.s32.totalorder %s116, %s118
    %p125 = scmp.eq.s32.totalorder %s24, 1
    %p126 = por %p124, %p125
    %p127 = scmp.ne.s32.totalorder %s118, %s119
    %p128 = scmp.eq.s32.totalorder %s24, 0
    %p129 = por %p127, %p128
    %p130 = scmp.ne.s32.totalorder %s118, %s119
    %p131 = scmp.eq.s32.totalorder %s25, 1
    %p132 = por %p130, %p131
    %p134 = scmp.ne.s32.totalorder %s119, %s133
    %p135 = scmp.eq.s32.totalorder %s25, 0
    %p136 = por %p134, %p135
    %s138 = sadd.s32 %s137, 1
    %p141 = scmp.eq.s32.totalorder %s19, 1
    %p142 = scmp.ne.s32.totalorder %s137, %s139
    %p143 = scmp.eq.s32.totalorder %s19, 0
    %p144 = por %p142, %p143
    %p145 = scmp.ne.s32.totalorder %s137, %s139
    %p146 = scmp.eq.s32.totalorder %s24, 1
    %p147 = por %p145, %p146
    %p148 = scmp.ne.s32.totalorder %s139, %s140
    %p149 = scmp.eq.s32.totalorder %s24, 0
    %p150 = por %p148, %p149
    %p151 = scmp.ne.s32.totalorder %s139, %s140
    %p152 = scmp.eq.s32.totalorder %s25, 1
    %p153 = por %p151, %p152
    %p155 = scmp.ne.s32.totalorder %s140, %s154
    %p156 = scmp.eq.s32.totalorder %s25, 0
    %p157 = por %p155, %p156
    %s159 = sadd.s32 %s158, 1
    %p162 = scmp.eq.s32.totalorder %s19, 1
    %p163 = scmp.ne.s32.totalorder %s158, %s160
    %p164 = scmp.eq.s32.totalorder %s19, 0
    %p165 = por %p163, %p164
    %p166 = scmp.ne.s32.totalorder %s158, %s160
    %p167 = scmp.eq.s32.totalorder %s24, 1
    %p168 = por %p166, %p167
    %p169 = scmp.ne.s32.totalorder %s160, %s161
    %p170 = scmp.eq.s32.totalorder %s24, 0
    %p171 = por %p169, %p170
    %p172 = scmp.ne.s32.totalorder %s160, %s161
    %p173 = scmp.eq.s32.totalorder %s25, 1
    %p174 = por %p172, %p173
    %p176 = scmp.ne.s32.totalorder %s161, %s175
    %p177 = scmp.eq.s32.totalorder %s25, 0
    %p178 = por %p176, %p177
    %s180 = sadd.s32 %s179, 1
    %p183 = scmp.eq.s32.totalorder %s19, 1
    %p184 = scmp.ne.s32.totalorder %s179, %s181
    %p185 = scmp.eq.s32.totalorder %s19, 0
    %p186 = por %p184, %p185
    %p187 = scmp.ne.s32.totalorder %s179, %s181
    %p188 = scmp.eq.s32.totalorder %s24, 1
    %p189 = por %p187, %p188
    %p190 = scmp.ne.s32.totalorder %s181, %s182
    %p191 = scmp.eq.s32.totalorder %s24, 0
    %p192 = por %p190, %p191
    %p193 = scmp.ne.s32.totalorder %s181, %s182
    %p194 = scmp.eq.s32.totalorder %s25, 1
    %p195 = por %p193, %p194
    %p197 = scmp.ne.s32.totalorder %s182, %s196
    %p198 = scmp.eq.s32.totalorder %s25, 0
    %p199 = por %p197, %p198
    %s201 = sadd.s32 %s200, 1
    %p204 = scmp.eq.s32.totalorder %s19, 1
    %p205 = scmp.ne.s32.totalorder %s200, %s202
    %p206 = scmp.eq.s32.totalorder %s19, 0
    %p207 = por %p205, %p206
    %p208 = scmp.ne.s32.totalorder %s200, %s202
    %p209 = scmp.eq.s32.totalorder %s24, 1
    %p210 = por %p208, %p209
    %p211 = scmp.ne.s32.totalorder %s202, %s203
    %p212 = scmp.eq.s32.totalorder %s24, 0
    %p213 = por %p211, %p212
    %p214 = scmp.ne.s32.totalorder %s202, %s203
    %p215 = scmp.eq.s32.totalorder %s25, 1
    %p216 = por %p214, %p215
    %p218 = scmp.ne.s32.totalorder %s203, %s217
    %p219 = scmp.eq.s32.totalorder %s25, 0
    %p220 = por %p218, %p219
    %s222 = sadd.s32 %s221, 1
    %p225 = scmp.eq.s32.totalorder %s19, 1
    %p226 = scmp.ne.s32.totalorder %s221, %s223
    %p227 = scmp.eq.s32.totalorder %s19, 0
    %p228 = por %p226, %p227
    %p229 = scmp.ne.s32.totalorder %s221, %s223
    %p230 = scmp.eq.s32.totalorder %s24, 1
    %p231 = por %p229, %p230
    %p232 = scmp.ne.s32.totalorder %s223, %s224
    %p233 = scmp.eq.s32.totalorder %s24, 0
    %p234 = por %p232, %p233
    %p235 = scmp.ne.s32.totalorder %s223, %s224
    %p236 = scmp.eq.s32.totalorder %s25, 1
    %p237 = por %p235, %p236
    %p239 = scmp.ne.s32.totalorder %s224, %s238
    %p240 = scmp.eq.s32.totalorder %s25, 0
    %p241 = por %p239, %p240
    %s243 = sadd.s32 %s242, 1
    %p246 = scmp.eq.s32.totalorder %s19, 1
    %p247 = scmp.ne.s32.totalorder %s242, %s244
    %p248 = scmp.eq.s32.totalorder %s19, 0
    %p249 = por %p247, %p248
    %p250 = scmp.ne.s32.totalorder %s242, %s244
    %p251 = scmp.eq.s32.totalorder %s24, 1
    %p252 = por %p250, %p251
    %p253 = scmp.ne.s32.totalorder %s244, %s245
    %p254 = scmp.eq.s32.totalorder %s24, 0
    %p255 = por %p253, %p254
    %p256 = scmp.ne.s32.totalorder %s244, %s245
    %p257 = scmp.eq.s32.totalorder %s25, 1
    %p258 = por %p256, %p257
    %p260 = scmp.ne.s32.totalorder %s245, %s259
    %p261 = scmp.eq.s32.totalorder %s25, 0
    %p262 = por %p260, %p261
    %s264 = sadd.s32 %s263, 1
    %p267 = scmp.eq.s32.totalorder %s19, 1
    %p268 = scmp.ne.s32.totalorder %s263, %s265
    %p269 = scmp.eq.s32.totalorder %s19, 0
    %p270 = por %p268, %p269
    %p271 = scmp.ne.s32.totalorder %s263, %s265
    %p272 = scmp.eq.s32.totalorder %s24, 1
    %p273 = por %p271, %p272
    %p274 = scmp.ne.s32.totalorder %s265, %s266
    %p275 = scmp.eq.s32.totalorder %s24, 0
    %p276 = por %p274, %p275
    %p277 = scmp.ne.s32.totalorder %s265, %s266
    %p278 = scmp.eq.s32.totalorder %s25, 1
    %p279 = por %p277, %p278
    %p281 = scmp.ne.s32.totalorder %s266, %s280
    %p282 = scmp.eq.s32.totalorder %s25, 0
    %p283 = por %p281, %p282
    %s285 = sadd.s32 %s284, 1
    %p288 = scmp.eq.s32.totalorder %s19, 1
    %p289 = scmp.ne.s32.totalorder %s284, %s286
    %p290 = scmp.eq.s32.totalorder %s19, 0
    %p291 = por %p289, %p290
    %p292 = scmp.ne.s32.totalorder %s284, %s286
    %p293 = scmp.eq.s32.totalorder %s24, 1
    %p294 = por %p292, %p293
    %p295 = scmp.ne.s32.totalorder %s286, %s287
    %p296 = scmp.eq.s32.totalorder %s24, 0
    %p297 = por %p295, %p296
    %p298 = scmp.ne.s32.totalorder %s286, %s287
    %p299 = scmp.eq.s32.totalorder %s25, 1
    %p300 = por %p298, %p299
    %p302 = scmp.ne.s32.totalorder %s287, %s301
    %p303 = scmp.eq.s32.totalorder %s25, 0
    %p304 = por %p302, %p303
    %s305 = ssub.s32 %s19, %s26
    %p306 = scmp.eq.s32.totalorder %s305, 0
    %s308 = sadd.s32 %s307, 1
    %s309 = scalar_select %p306, %s307, %s308
    %p312 = pneg %p306
    %p313 = scmp.eq.s32.totalorder %s19, 1
    %p314 = por %p312, %p313
    %p315 = scmp.ne.s32.totalorder %s307, %s310
    %p316 = scmp.eq.s32.totalorder %s19, 0
    %p317 = por %p315, %p316
    %p318 = scmp.ne.s32.totalorder %s307, %s310
    %p319 = scmp.eq.s32.totalorder %s24, 1
    %p320 = por %p318, %p319
    %p321 = scmp.ne.s32.totalorder %s310, %s311
    %p322 = scmp.eq.s32.totalorder %s24, 0
    %p323 = por %p321, %p322
    %p324 = scmp.ne.s32.totalorder %s310, %s311
    %p325 = scmp.eq.s32.totalorder %s25, 1
    %p326 = por %p324, %p325
    %p328 = scmp.ne.s32.totalorder %s311, %s327
    %p329 = scmp.eq.s32.totalorder %s25, 0
    %p330 = por %p328, %p329
    %p331 = scmp.le.s32.totalorder 1, %s19
    %p332 = scmp.lt.s32.totalorder %s19, 3
    %p333 = pnand %p331, %p332
    %p334 = pneg %p333
    // Predicated region
    $region9: #{decoder_forward.1} parent=5 // pred_check
      _
    $region10: #{decoder_forward.1} parent=5 // pred_check_branch
      %336 = sbr.rel (%p333) target = $region12
    $region11: #{decoder_forward.1} parent=5 // pred_region
      %s337 = ssub.s32 %s19, 1
      // Predicated region
      $region13: #{decoder_forward.1} parent=11 // pred_check
        %p338 = pneg %p66
      $region14: #{decoder_forward.1} parent=11 // pred_check_branch
        %340 = sbr.rel (%p338) target = $region16
      $region15: #{decoder_forward.1} parent=11 // pred_region
        _
      $region16: #{decoder_forward.1} parent=11 // pred_fallthru
        _
      // Predicated region
      $region17: #{decoder_forward.1} parent=11 // pred_check
        %p341 = pneg %p87
      $region18: #{decoder_forward.1} parent=11 // pred_check_branch
        %343 = sbr.rel (%p341) target = $region20
      $region19: #{decoder_forward.1} parent=11 // pred_region
        _
      $region20: #{decoder_forward.1} parent=11 // pred_fallthru
        _
      // Predicated region
      $region21: #{decoder_forward.1} parent=11 // pred_check
        %p344 = pneg %p108
      $region22: #{decoder_forward.1} parent=11 // pred_check_branch
        %346 = sbr.rel (%p344) target = $region24
      $region23: #{decoder_forward.1} parent=11 // pred_region
        _
      $region24: #{decoder_forward.1} parent=11 // pred_fallthru
        _
      // Predicated region
      $region25: #{decoder_forward.1} parent=11 // pred_check
        %p347 = pneg %p129
      $region26: #{decoder_forward.1} parent=11 // pred_check_branch
        %349 = sbr.rel (%p347) target = $region28
      $region27: #{decoder_forward.1} parent=11 // pred_region
        _
      $region28: #{decoder_forward.1} parent=11 // pred_fallthru
        _
      // Predicated region
      $region29: #{decoder_forward.1} parent=11 // pred_check
        %p350 = pneg %p150
      $region30: #{decoder_forward.1} parent=11 // pred_check_branch
        %352 = sbr.rel (%p350) target = $region32
      $region31: #{decoder_forward.1} parent=11 // pred_region
        _
      $region32: #{decoder_forward.1} parent=11 // pred_fallthru
        _
      // Predicated region
      $region33: #{decoder_forward.1} parent=11 // pred_check
        %p353 = pneg %p171
      $region34: #{decoder_forward.1} parent=11 // pred_check_branch
        %355 = sbr.rel (%p353) target = $region36
      $region35: #{decoder_forward.1} parent=11 // pred_region
        _
      $region36: #{decoder_forward.1} parent=11 // pred_fallthru
        _
      // Predicated region
      $region37: #{decoder_forward.1} parent=11 // pred_check
        %p356 = pneg %p192
      $region38: #{decoder_forward.1} parent=11 // pred_check_branch
        %358 = sbr.rel (%p356) target = $region40
      $region39: #{decoder_forward.1} parent=11 // pred_region
        _
      $region40: #{decoder_forward.1} parent=11 // pred_fallthru
        _
      // Predicated region
      $region41: #{decoder_forward.1} parent=11 // pred_check
        %p359 = pneg %p213
      $region42: #{decoder_forward.1} parent=11 // pred_check_branch
        %361 = sbr.rel (%p359) target = $region44
      $region43: #{decoder_forward.1} parent=11 // pred_region
        _
      $region44: #{decoder_forward.1} parent=11 // pred_fallthru
        _
      // Predicated region
      $region45: #{decoder_forward.1} parent=11 // pred_check
        %p362 = pneg %p234
      $region46: #{decoder_forward.1} parent=11 // pred_check_branch
        %364 = sbr.rel (%p362) target = $region48
      $region47: #{decoder_forward.1} parent=11 // pred_region
        _
      $region48: #{decoder_forward.1} parent=11 // pred_fallthru
        _
      // Predicated region
      $region49: #{decoder_forward.1} parent=11 // pred_check
        %p365 = pneg %p255
      $region50: #{decoder_forward.1} parent=11 // pred_check_branch
        %367 = sbr.rel (%p365) target = $region52
      $region51: #{decoder_forward.1} parent=11 // pred_region
        _
      $region52: #{decoder_forward.1} parent=11 // pred_fallthru
        _
      // Predicated region
      $region53: #{decoder_forward.1} parent=11 // pred_check
        %p368 = pneg %p276
      $region54: #{decoder_forward.1} parent=11 // pred_check_branch
        %370 = sbr.rel (%p368) target = $region56
      $region55: #{decoder_forward.1} parent=11 // pred_region
        _
      $region56: #{decoder_forward.1} parent=11 // pred_fallthru
        _
      // Predicated region
      $region57: #{decoder_forward.1} parent=11 // pred_check
        %p371 = pneg %p297
      $region58: #{decoder_forward.1} parent=11 // pred_check_branch
        %373 = sbr.rel (%p371) target = $region60
      $region59: #{decoder_forward.1} parent=11 // pred_region
        _
      $region60: #{decoder_forward.1} parent=11 // pred_fallthru
        _
    $region12: #{decoder_forward.1} parent=5 // pred_fallthru
      _
    %p374 = scmp.lt.s32.totalorder %s19, 2
    // Predicated region
    $region61: #{decoder_forward.1} parent=5 // pred_check
      %p375 = pneg %p374
    $region62: #{decoder_forward.1} parent=5 // pred_check_branch
      %377 = sbr.rel (%p375) target = $region64
    $region63: #{decoder_forward.1} parent=5 // pred_region
      // Predicated region
      $region65: #{decoder_forward.1} parent=63 // pred_check
        %p378 = pneg %p39
      $region66: #{decoder_forward.1} parent=63 // pred_check_branch
        %380 = sbr.rel (%p378) target = $region68
      $region67: #{decoder_forward.1} parent=63 // pred_region
        %s381 = smul.u32 8, %s19
        %p382 = scmp.lt.s32.totalorder %s381, 15
        %s383 = scalar_select %p382, %s381, 15
        %s384 = smul.addr %s383, 2
        %s385 = smul.addr %s384, 8
        %s386 = scalar_lea.vmem %s0, %s385
        %s387 = smul.u32 8, %s19
      $region68: #{decoder_forward.1} parent=63 // pred_fallthru
        _
    $region64: #{decoder_forward.1} parent=5 // pred_fallthru
      _
    %p388 = scmp.le.s32.totalorder 1, %s19
    %p389 = scmp.lt.s32.totalorder %s19, 3
    %p390 = pnand %p388, %p389
    %p391 = pneg %p390
    // Predicated region
    $region69: #{decoder_forward.1} parent=5 // pred_check
      _
    $region70: #{decoder_forward.1} parent=5 // pred_check_branch
      %393 = sbr.rel (%p390) target = $region72
    $region71: #{decoder_forward.1} parent=5 // pred_region
      %s394 = ssub.s32 %s19, 1
      %s395 = smul.u32 8, %s24
      %p396 = scmp.lt.s32.totalorder %s395, 15
      %s397 = scalar_select %p396, %s395, 15
      %s398 = smul.addr %s397, 2
      %s399 = smul.addr %s398, 8
      %s400 = scalar_lea.vmem %s0, %s399
      %p401 = pneg %p45
      %p402 = pneg %p42
      %p403 = pneg %p66
      %p404 = pneg %p63
      %p405 = pneg %p87
      %p406 = pneg %p84
      %p407 = pneg %p108
      %p408 = pneg %p105
      %p409 = pneg %p129
      %p410 = pneg %p126
      %p411 = pneg %p150
      %p412 = pneg %p147
      %p413 = pneg %p171
      %p414 = pneg %p168
      %p415 = pneg %p192
      %p416 = pneg %p189
      %p417 = pneg %p213
      %p418 = pneg %p210
      %p419 = pneg %p234
      %p420 = pneg %p231
      %p421 = pneg %p255
      %p422 = pneg %p252
      %p423 = pneg %p276
      %p424 = pneg %p273
      %p425 = pneg %p297
      %p426 = pneg %p294
      %p427 = pneg %p323
      %p428 = pneg %p320
      %s429 = smul.u32 8, %s24
      %p430 = scmp.lt.s32.totalorder %s429, 15
      %s431 = scalar_select %p430, %s429, 15
      %s432 = smul.addr %s431, 6
      %s433 = smul.addr %s432, 8
      %s434 = scalar_lea.vmem %s13, %s433
      %s435 = smul.u32 8, %s24
      %p436 = scmp.lt.s32.totalorder %s435, 15
      %s437 = scalar_select %p436, %s435, 15
      %s438 = smul.addr %s437, 2
      %s439 = smul.addr %s438, 8
      %s440 = scalar_lea.vmem %s0, %s439
      %s441 = smul.u32 8, %s24
      %s442 = smul.u32 8, %s24
      %p443 = scmp.lt.s32.totalorder %s442, 15
      %s444 = scalar_select %p443, %s442, 15
      %s445 = smul.addr %s444, 6
      %s446 = smul.addr %s445, 8
      %s447 = scalar_lea.vmem %s13, %s446
      %s448 = smul.u32 8, %s24
      %v449 = vld [vmem:[%s440] sm:$0xff]
      %v450 = vld [vmem:[%s440 + $0x8] sm:$0xff]
      %v451 = vld [vmem:[%s440 + $0x10] sm:$0xff]
      %v452 = vld [vmem:[%s440 + $0x18] sm:$0xff]
      %v453 = vld [vmem:[%s440 + $0x20] sm:$0xff]
      %v454 = vld [vmem:[%s440 + $0x28] sm:$0xff]
      %v455 = vld [vmem:[%s440 + $0x30] sm:$0xff]
      %v456 = vld [vmem:[%s440 + $0x38] sm:$0xff]
      %v457 = vld [vmem:[%s440 + $0x40] sm:$0xff]
      %v458 = vld [vmem:[%s440 + $0x48] sm:$0xff]
      %v459 = vld [vmem:[%s440 + $0x50] sm:$0xff]
      %v460 = vld [vmem:[%s440 + $0x58] sm:$0xff]
      %v461 = vld [vmem:[%s440 + $0x60] sm:$0xff]
      %v462 = vld [vmem:[%s440 + $0x68] sm:$0xff]
      %v463 = vld [vmem:[%s440 + $0x70] sm:$0xff]
      %v464 = vld [vmem:[%s440 + $0x78] sm:$0xff]
      %v465 = vpack.c.bf16 %v451, %v449
      %v466 = vpack.c.bf16 %v452, %v450
      %v467 = vpack.c.bf16 %v455, %v453
      %v468 = vpack.c.bf16 %v456, %v454
      %v469 = vpack.c.bf16 %v459, %v457
      %v470 = vpack.c.bf16 %v460, %v458
      %v471 = vpack.c.bf16 %v463, %v461
      %v472 = vpack.c.bf16 %v464, %v462
      %v473 = vld [vmem:[%s1] sm:$0xff]
      %v474 = vld [vmem:[%s1 + $0x8] sm:$0xff]
      %v475 = vld [vmem:[%s1 + $0x10] sm:$0xff]
      %v476 = vld [vmem:[%s1 + $0x18] sm:$0xff]
      %v477 = vld [vmem:[%s1 + $0x20] sm:$0xff]
      %v478 = vld [vmem:[%s1 + $0x28] sm:$0xff]
      %v479 = vld [vmem:[%s1 + $0x30] sm:$0xff]
      %v480 = vld [vmem:[%s1 + $0x38] sm:$0xff]
      %v481 = vld [vmem:[%s1 + $0x40] sm:$0xff]
      %v482 = vld [vmem:[%s1 + $0x48] sm:$0xff]
      %v483 = vld [vmem:[%s1 + $0x50] sm:$0xff]
      %v484 = vld [vmem:[%s1 + $0x58] sm:$0xff]
      %v485 = vld [vmem:[%s1 + $0x60] sm:$0xff]
      %v486 = vld [vmem:[%s1 + $0x68] sm:$0xff]
      %v487 = vld [vmem:[%s1 + $0x70] sm:$0xff]
      %v488 = vld [vmem:[%s1 + $0x78] sm:$0xff]
      %v489 = vld [vmem:[%s1 + $0x80] sm:$0xff]
      %v490 = vld [vmem:[%s1 + $0x88] sm:$0xff]
      %v491 = vld [vmem:[%s1 + $0x90] sm:$0xff]
      %v492 = vld [vmem:[%s1 + $0x98] sm:$0xff]
      %v493 = vld [vmem:[%s1 + $0xa0] sm:$0xff]
      %v494 = vld [vmem:[%s1 + $0xa8] sm:$0xff]
      %v495 = vld [vmem:[%s1 + $0xb0] sm:$0xff]
      %v496 = vld [vmem:[%s1 + $0xb8] sm:$0xff]
      %v497 = vld [vmem:[%s1 + $0xc0] sm:$0xff]
      %v498 = vld [vmem:[%s1 + $0xc8] sm:$0xff]
      %v499 = vld [vmem:[%s1 + $0xd0] sm:$0xff]
      %v500 = vld [vmem:[%s1 + $0xd8] sm:$0xff]
      %v501 = vld [vmem:[%s1 + $0xe0] sm:$0xff]
      %v502 = vld [vmem:[%s1 + $0xe8] sm:$0xff]
      %v503 = vld [vmem:[%s1 + $0xf0] sm:$0xff]
      %v504 = vld [vmem:[%s1 + $0xf8] sm:$0xff]
      %v505 = vld [vmem:[%s7] sm:$0x3]
      %v507 = vlaneseq
      %v508 = vshrl.u32 %v507, 7
      %v509 = vsub.s32 0, %v508
      %v510 = vrot.slane %v505, %v509
      %v511 = vlaneseq
      %v512 = vshrl.u32 %v511, 7
      %v513 = vsub.s32 1, %v512
      %v514 = vrot.slane %v505, %v513
      %v549 = vunpack.c.l.b16 %v473
      %v550 = vunpack.c.h.b16 %v473
      %v551 = vunpack.c.l.b16 %v474
      %v552 = vunpack.c.h.b16 %v474
      %v553 = vunpack.c.l.b16 %v475
      %v554 = vunpack.c.h.b16 %v475
      %v555 = vunpack.c.l.b16 %v476
      %v556 = vunpack.c.h.b16 %v476
      %v557 = vunpack.c.l.b16 %v477
      %v558 = vunpack.c.h.b16 %v477
      %v559 = vunpack.c.l.b16 %v478
      %v560 = vunpack.c.h.b16 %v478
      %v561 = vunpack.c.l.b16 %v479
      %v562 = vunpack.c.h.b16 %v479
      %v563 = vunpack.c.l.b16 %v480
      %v564 = vunpack.c.h.b16 %v480
      %v565 = vunpack.c.l.b16 %v481
      %v566 = vunpack.c.h.b16 %v481
      %v567 = vunpack.c.l.b16 %v482
      %v568 = vunpack.c.h.b16 %v482
      %v569 = vunpack.c.l.b16 %v483
      %v570 = vunpack.c.h.b16 %v483
      %v571 = vunpack.c.l.b16 %v484
      %v572 = vunpack.c.h.b16 %v484
      %v573 = vunpack.c.l.b16 %v485
      %v574 = vunpack.c.h.b16 %v485
      %v575 = vunpack.c.l.b16 %v486
      %v576 = vunpack.c.h.b16 %v486
      %v577 = vunpack.c.l.b16 %v487
      %v578 = vunpack.c.h.b16 %v487
      %v579 = vunpack.c.l.b16 %v488
      %v580 = vunpack.c.h.b16 %v488
      %v581 = vunpack.c.l.b16 %v489
      %v582 = vunpack.c.h.b16 %v489
      %v583 = vunpack.c.l.b16 %v490
      %v584 = vunpack.c.h.b16 %v490
      %v585 = vunpack.c.l.b16 %v491
      %v586 = vunpack.c.h.b16 %v491
      %v587 = vunpack.c.l.b16 %v492
      %v588 = vunpack.c.h.b16 %v492
      %v589 = vunpack.c.l.b16 %v493
      %v590 = vunpack.c.h.b16 %v493
      %v591 = vunpack.c.l.b16 %v494
      %v592 = vunpack.c.h.b16 %v494
      %v593 = vunpack.c.l.b16 %v495
      %v594 = vunpack.c.h.b16 %v495
      %v595 = vunpack.c.l.b16 %v496
      %v596 = vunpack.c.h.b16 %v496
      %v597 = vunpack.c.l.b16 %v497
      %v598 = vunpack.c.h.b16 %v497
      %v599 = vunpack.c.l.b16 %v498
      %v600 = vunpack.c.h.b16 %v498
      %v601 = vunpack.c.l.b16 %v499
      %v602 = vunpack.c.h.b16 %v499
      %v603 = vunpack.c.l.b16 %v500
      %v604 = vunpack.c.h.b16 %v500
      %v605 = vunpack.c.l.b16 %v501
      %v606 = vunpack.c.h.b16 %v501
      %v607 = vunpack.c.l.b16 %v502
      %v608 = vunpack.c.h.b16 %v502
      %v609 = vunpack.c.l.b16 %v503
      %v610 = vunpack.c.h.b16 %v503
      %v611 = vunpack.c.l.b16 %v504
      %v612 = vunpack.c.h.b16 %v504
      %v613 = vpack.c.b16 %v551, %v549
      %v614 = vpack.c.b16 %v552, %v550
      %v615 = vpack.c.b16 %v555, %v553
      %v616 = vpack.c.b16 %v556, %v554
      %v617 = vpack.c.b16 %v559, %v557
      %v618 = vpack.c.b16 %v560, %v558
      %v619 = vpack.c.b16 %v563, %v561
      %v620 = vpack.c.b16 %v564, %v562
      %v621 = vpack.c.b16 %v567, %v565
      %v622 = vpack.c.b16 %v568, %v566
      %v623 = vpack.c.b16 %v571, %v569
      %v624 = vpack.c.b16 %v572, %v570
      %v625 = vpack.c.b16 %v575, %v573
      %v626 = vpack.c.b16 %v576, %v574
      %v627 = vpack.c.b16 %v579, %v577
      %v628 = vpack.c.b16 %v580, %v578
      %v629 = vpack.c.b16 %v583, %v581
      %v630 = vpack.c.b16 %v584, %v582
      %v631 = vpack.c.b16 %v587, %v585
      %v632 = vpack.c.b16 %v588, %v586
      %v633 = vpack.c.b16 %v591, %v589
      %v634 = vpack.c.b16 %v592, %v590
      %v635 = vpack.c.b16 %v595, %v593
      %v636 = vpack.c.b16 %v596, %v594
      %v637 = vpack.c.b16 %v599, %v597
      %v638 = vpack.c.b16 %v600, %v598
      %v639 = vpack.c.b16 %v603, %v601
      %v640 = vpack.c.b16 %v604, %v602
      %v641 = vpack.c.b16 %v607, %v605
      %v642 = vpack.c.b16 %v608, %v606
      %v643 = vpack.c.b16 %v611, %v609
      %v644 = vpack.c.b16 %v612, %v610
      %677 = vmatprep.subr.bf16.mxu0 %v614
      %678 = vmatpush1.bf16.msra.mxu0 %v613
      %679 = vmatprep.subr.bf16.mxu0 %v616
      %680 = vmatpush1.bf16.msra.mxu0 %v615
      %681 = vmatprep.subr.bf16.mxu0 %v618
      %682 = vmatpush1.bf16.msra.mxu0 %v617
      %683 = vmatprep.subr.bf16.mxu0 %v620
      %684 = vmatpush1.bf16.msra.mxu0 %v619
      %685 = vmatprep.subr.bf16.mxu0 %v622
      %686 = vmatpush1.bf16.msra.mxu0 %v621
      %687 = vmatprep.subr.bf16.mxu0 %v624
      %688 = vmatpush1.bf16.msra.mxu0 %v623
      %689 = vmatprep.subr.bf16.mxu0 %v626
      %690 = vmatpush1.bf16.msra.mxu0 %v625
      %691 = vmatprep.subr.bf16.mxu0 %v628
      %692 = vmatpush1.bf16.msra.mxu0 %v627
      %693 = vmatprep.subr.bf16.mxu0 %v630
      %694 = vmatpush1.bf16.msra.mxu0 %v629
      %695 = vmatprep.subr.bf16.mxu0 %v632
      %696 = vmatpush1.bf16.msra.mxu0 %v631
      %697 = vmatprep.subr.bf16.mxu0 %v634
      %698 = vmatpush1.bf16.msra.mxu0 %v633
      %699 = vmatprep.subr.bf16.mxu0 %v636
      %700 = vmatpush1.bf16.msra.mxu0 %v635
      %701 = vmatprep.subr.bf16.mxu0 %v638
      %702 = vmatpush1.bf16.msra.mxu0 %v637
      %703 = vmatprep.subr.bf16.mxu0 %v640
      %704 = vmatpush1.bf16.msra.mxu0 %v639
      %705 = vmatprep.subr.bf16.mxu0 %v642
      %706 = vmatpush1.bf16.msra.mxu0 %v641
      %707 = vmatprep.subr.bf16.mxu0 %v644
      %708 = vmatpush1.bf16.msra.mxu0 %v643
      %709 = vmatprep.mubr.bf16.mxu0 %v466
      %710 = vmatmul.mubr.bf16.gmra.mrb[0].mxu0 %v465
      %v711 = vpop.f32.mrb[0].mxu0
      %v712 = vadd.f32 %v510, %v711
      %v713 = vpop.f32.mrb[0].mxu0
      %v714 = vadd.f32 %v514, %v713
      %v715 = vpop.f32.mrb[0].mxu0
      %v716 = vadd.f32 %v510, %v715
      %v717 = vpop.f32.mrb[0].mxu0
      %v718 = vadd.f32 %v514, %v717
      %719 = vmatprep.mubr.bf16.mxu0 %v468
      %720 = vmatmul.mubr.bf16.gmra.mrb[0].mxu0 %v467
      %v721 = vpop.f32.mrb[0].mxu0
      %v722 = vadd.f32 %v510, %v721
      %v723 = vpop.f32.mrb[0].mxu0
      %v724 = vadd.f32 %v514, %v723
      %v725 = vpop.f32.mrb[0].mxu0
      %v726 = vadd.f32 %v510, %v725
      %v727 = vpop.f32.mrb[0].mxu0
      %v728 = vadd.f32 %v514, %v727
      %729 = vmatprep.mubr.bf16.mxu0 %v470
      %730 = vmatmul.mubr.bf16.gmra.mrb[0].mxu0 %v469
      %v731 = vpop.f32.mrb[0].mxu0
      %v732 = vadd.f32 %v510, %v731
      %v733 = vpop.f32.mrb[0].mxu0
      %v734 = vadd.f32 %v514, %v733
      %v735 = vpop.f32.mrb[0].mxu0
      %v736 = vadd.f32 %v510, %v735
      %v737 = vpop.f32.mrb[0].mxu0
      %v738 = vadd.f32 %v514, %v737
      %739 = vmatprep.mubr.bf16.mxu0 %v472
      %740 = vmatmul.mubr.bf16.gmra.mrb[0].mxu0 %v471
      %v741 = vpop.f32.mrb[0].mxu0
      %v742 = vadd.f32 %v510, %v741
      %v743 = vpop.f32.mrb[0].mxu0
      %v744 = vadd.f32 %v514, %v743
      %v745 = vpop.f32.mrb[0].mxu0
      %v746 = vadd.f32 %v510, %v745
      %v747 = vpop.f32.mrb[0].mxu0
      %v748 = vadd.f32 %v514, %v747
      %749 = vdwg.mxu0
      %v750 = vmax.f32 %v712, 0.0
      %v751 = vmax.f32 %v714, 0.0
      %v752 = vmax.f32 %v716, 0.0
      %v753 = vmax.f32 %v718, 0.0
      %v754 = vmax.f32 %v722, 0.0
      %v755 = vmax.f32 %v724, 0.0
      %v756 = vmax.f32 %v726, 0.0
      %v757 = vmax.f32 %v728, 0.0
      %v758 = vmax.f32 %v732, 0.0
      %v759 = vmax.f32 %v734, 0.0
      %v760 = vmax.f32 %v736, 0.0
      %v761 = vmax.f32 %v738, 0.0
      %v762 = vmax.f32 %v742, 0.0
      %v763 = vmax.f32 %v744, 0.0
      %v764 = vmax.f32 %v746, 0.0
      %v765 = vmax.f32 %v748, 0.0
      %v766 = vpack.c.bf16 %v752, %v750
      %v767 = vpack.c.bf16 %v753, %v751
      %v768 = vpack.c.bf16 %v756, %v754
      %v769 = vpack.c.bf16 %v757, %v755
      %v770 = vpack.c.bf16 %v760, %v758
      %v771 = vpack.c.bf16 %v761, %v759
      %v772 = vpack.c.bf16 %v764, %v762
      %v773 = vpack.c.bf16 %v765, %v763
      %v774 = vld [vmem:[%s2] sm:$0xff]
      %v775 = vld [vmem:[%s2 + $0x8] sm:$0xff]
      %v776 = vld [vmem:[%s2 + $0x10] sm:$0xff]
      %v777 = vld [vmem:[%s2 + $0x18] sm:$0xff]
      %v778 = vld [vmem:[%s2 + $0x20] sm:$0xff]
      %v779 = vld [vmem:[%s2 + $0x28] sm:$0xff]
      %v780 = vld [vmem:[%s2 + $0x30] sm:$0xff]
      %v781 = vld [vmem:[%s2 + $0x38] sm:$0xff]
      %v782 = vld [vmem:[%s2 + $0x40] sm:$0xff]
      %v783 = vld [vmem:[%s2 + $0x48] sm:$0xff]
      %v784 = vld [vmem:[%s2 + $0x50] sm:$0xff]
      %v785 = vld [vmem:[%s2 + $0x58] sm:$0xff]
      %v786 = vld [vmem:[%s2 + $0x60] sm:$0xff]
      %v787 = vld [vmem:[%s2 + $0x68] sm:$0xff]
      %v788 = vld [vmem:[%s2 + $0x70] sm:$0xff]
      %v789 = vld [vmem:[%s2 + $0x78] sm:$0xff]
      %v790 = vld [vmem:[%s2 + $0x80] sm:$0xff]
      %v791 = vld [vmem:[%s2 + $0x88] sm:$0xff]
      %v792 = vld [vmem:[%s2 + $0x90] sm:$0xff]
      %v793 = vld [vmem:[%s2 + $0x98] sm:$0xff]
      %v794 = vld [vmem:[%s2 + $0xa0] sm:$0xff]
      %v795 = vld [vmem:[%s2 + $0xa8] sm:$0xff]
      %v796 = vld [vmem:[%s2 + $0xb0] sm:$0xff]
      %v797 = vld [vmem:[%s2 + $0xb8] sm:$0xff]
      %v798 = vld [vmem:[%s2 + $0xc0] sm:$0xff]
      %v799 = vld [vmem:[%s2 + $0xc8] sm:$0xff]
      %v800 = vld [vmem:[%s2 + $0xd0] sm:$0xff]
      %v801 = vld [vmem:[%s2 + $0xd8] sm:$0xff]
      %v802 = vld [vmem:[%s2 + $0xe0] sm:$0xff]
      %v803 = vld [vmem:[%s2 + $0xe8] sm:$0xff]
      %v804 = vld [vmem:[%s2 + $0xf0] sm:$0xff]
      %v805 = vld [vmem:[%s2 + $0xf8] sm:$0xff]
      %v806 = vld [vmem:[%s8] sm:$0x3]
      %v808 = vlaneseq
      %v809 = vshrl.u32 %v808, 7
      %v810 = vsub.s32 0, %v809
      %v811 = vrot.slane %v806, %v810
      %v812 = vlaneseq
      %v813 = vshrl.u32 %v812, 7
      %v814 = vsub.s32 1, %v813
      %v815 = vrot.slane %v806, %v814
      %v850 = vunpack.c.l.b16 %v774
      %v851 = vunpack.c.h.b16 %v774
      %v852 = vunpack.c.l.b16 %v775
      %v853 = vunpack.c.h.b16 %v775
      %v854 = vunpack.c.l.b16 %v776
      %v855 = vunpack.c.h.b16 %v776
      %v856 = vunpack.c.l.b16 %v777
      %v857 = vunpack.c.h.b16 %v777
      %v858 = vunpack.c.l.b16 %v778
      %v859 = vunpack.c.h.b16 %v778
      %v860 = vunpack.c.l.b16 %v779
      %v861 = vunpack.c.h.b16 %v779
      %v862 = vunpack.c.l.b16 %v780
      %v863 = vunpack.c.h.b16 %v780
      %v864 = vunpack.c.l.b16 %v781
      %v865 = vunpack.c.h.b16 %v781
      %v866 = vunpack.c.l.b16 %v782
      %v867 = vunpack.c.h.b16 %v782
      %v868 = vunpack.c.l.b16 %v783
      %v869 = vunpack.c.h.b16 %v783
      %v870 = vunpack.c.l.b16 %v784
      %v871 = vunpack.c.h.b16 %v784
      %v872 = vunpack.c.l.b16 %v785
      %v873 = vunpack.c.h.b16 %v785
      %v874 = vunpack.c.l.b16 %v786
      %v875 = vunpack.c.h.b16 %v786
      %v876 = vunpack.c.l.b16 %v787
      %v877 = vunpack.c.h.b16 %v787
      %v878 = vunpack.c.l.b16 %v788
      %v879 = vunpack.c.h.b16 %v788
      %v880 = vunpack.c.l.b16 %v789
      %v881 = vunpack.c.h.b16 %v789
      %v882 = vunpack.c.l.b16 %v790
      %v883 = vunpack.c.h.b16 %v790
      %v884 = vunpack.c.l.b16 %v791
      %v885 = vunpack.c.h.b16 %v791
      %v886 = vunpack.c.l.b16 %v792
      %v887 = vunpack.c.h.b16 %v792
      %v888 = vunpack.c.l.b16 %v793
      %v889 = vunpack.c.h.b16 %v793
      %v890 = vunpack.c.l.b16 %v794
      %v891 = vunpack.c.h.b16 %v794
      %v892 = vunpack.c.l.b16 %v795
      %v893 = vunpack.c.h.b16 %v795
      %v894 = vunpack.c.l.b16 %v796
      %v895 = vunpack.c.h.b16 %v796
      %v896 = vunpack.c.l.b16 %v797
      %v897 = vunpack.c.h.b16 %v797
      %v898 = vunpack.c.l.b16 %v798
      %v899 = vunpack.c.h.b16 %v798
      %v900 = vunpack.c.l.b16 %v799
      %v901 = vunpack.c.h.b16 %v799
      %v902 = vunpack.c.l.b16 %v800
      %v903 = vunpack.c.h.b16 %v800
      %v904 = vunpack.c.l.b16 %v801
      %v905 = vunpack.c.h.b16 %v801
      %v906 = vunpack.c.l.b16 %v802
      %v907 = vunpack.c.h.b16 %v802
      %v908 = vunpack.c.l.b16 %v803
      %v909 = vunpack.c.h.b16 %v803
      %v910 = vunpack.c.l.b16 %v804
      %v911 = vunpack.c.h.b16 %v804
      %v912 = vunpack.c.l.b16 %v805
      %v913 = vunpack.c.h.b16 %v805
      %v914 = vpack.c.b16 %v852, %v850
      %v915 = vpack.c.b16 %v853, %v851
      %v916 = vpack.c.b16 %v856, %v854
      %v917 = vpack.c.b16 %v857, %v855
      %v918 = vpack.c.b16 %v860, %v858
      %v919 = vpack.c.b16 %v861, %v859
      %v920 = vpack.c.b16 %v864, %v862
      %v921 = vpack.c.b16 %v865, %v863
      %v922 = vpack.c.b16 %v868, %v866
      %v923 = vpack.c.b16 %v869, %v867
      %v924 = vpack.c.b16 %v872, %v870
      %v925 = vpack.c.b16 %v873, %v871
      %v926 = vpack.c.b16 %v876, %v874
      %v927 = vpack.c.b16 %v877, %v875
      %v928 = vpack.c.b16 %v880, %v878
      %v929 = vpack.c.b16 %v881, %v879
      %v930 = vpack.c.b16 %v884, %v882
      %v931 = vpack.c.b16 %v885, %v883
      %v932 = vpack.c.b16 %v888, %v886
      %v933 = vpack.c.b16 %v889, %v887
      %v934 = vpack.c.b16 %v892, %v890
      %v935 = vpack.c.b16 %v893, %v891
      %v936 = vpack.c.b16 %v896, %v894
      %v937 = vpack.c.b16 %v897, %v895
      %v938 = vpack.c.b16 %v900, %v898
      %v939 = vpack.c.b16 %v901, %v899
      %v940 = vpack.c.b16 %v904, %v902
      %v941 = vpack.c.b16 %v905, %v903
      %v942 = vpack.c.b16 %v908, %v906
      %v943 = vpack.c.b16 %v909, %v907
      %v944 = vpack.c.b16 %v912, %v910
      %v945 = vpack.c.b16 %v913, %v911
      %978 = vmatprep.subr.bf16.mxu0 %v915
      %979 = vmatpush1.bf16.msra.mxu0 %v914
      %980 = vmatprep.subr.bf16.mxu0 %v917
      %981 = vmatpush1.bf16.msra.mxu0 %v916
      %982 = vmatprep.subr.bf16.mxu0 %v919
      %983 = vmatpush1.bf16.msra.mxu0 %v918
      %984 = vmatprep.subr.bf16.mxu0 %v921
      %985 = vmatpush1.bf16.msra.mxu0 %v920
      %986 = vmatprep.subr.bf16.mxu0 %v923
      %987 = vmatpush1.bf16.msra.mxu0 %v922
      %988 = vmatprep.subr.bf16.mxu0 %v925
      %989 = vmatpush1.bf16.msra.mxu0 %v924
      %990 = vmatprep.subr.bf16.mxu0 %v927
      %991 = vmatpush1.bf16.msra.mxu0 %v926
      %992 = vmatprep.subr.bf16.mxu0 %v929
      %993 = vmatpush1.bf16.msra.mxu0 %v928
      %994 = vmatprep.subr.bf16.mxu0 %v931
      %995 = vmatpush1.bf16.msra.mxu0 %v930
      %996 = vmatprep.subr.bf16.mxu0 %v933
      %997 = vmatpush1.bf16.msra.mxu0 %v932
      %998 = vmatprep.subr.bf16.mxu0 %v935
      %999 = vmatpush1.bf16.msra.mxu0 %v934
      %1000 = vmatprep.subr.bf16.mxu0 %v937
      %1001 = vmatpush1.bf16.msra.mxu0 %v936
      %1002 = vmatprep.subr.bf16.mxu0 %v939
      %1003 = vmatpush1.bf16.msra.mxu0 %v938
      %1004 = vmatprep.subr.bf16.mxu0 %v941
      %1005 = vmatpush1.bf16.msra.mxu0 %v940
      %1006 = vmatprep.subr.bf16.mxu0 %v943
      %1007 = vmatpush1.bf16.msra.mxu0 %v942
      %1008 = vmatprep.subr.bf16.mxu0 %v945
      %1009 = vmatpush1.bf16.msra.mxu0 %v944
      %1010 = vmatprep.mubr.bf16.mxu0 %v767
      %1011 = vmatmul.mubr.bf16.gmra.mrb[0].mxu0 %v766
      %v1012 = vpop.f32.mrb[0].mxu0
      %v1013 = vadd.f32 %v811, %v1012
      %v1014 = vpop.f32.mrb[0].mxu0
      %v1015 = vadd.f32 %v815, %v1014
      %v1016 = vpop.f32.mrb[0].mxu0
      %v1017 = vadd.f32 %v811, %v1016
      %v1018 = vpop.f32.mrb[0].mxu0
      %v1019 = vadd.f32 %v815, %v1018
      %1020 = vmatprep.mubr.bf16.mxu0 %v769
      %1021 = vmatmul.mubr.bf16.gmra.mrb[0].mxu0 %v768
      %v1022 = vpop.f32.mrb[0].mxu0
      %v1023 = vadd.f32 %v811, %v1022
      %v1024 = vpop.f32.mrb[0].mxu0
      %v1025 = vadd.f32 %v815, %v1024
      %v1026 = vpop.f32.mrb[0].mxu0
      %v1027 = vadd.f32 %v811, %v1026
      %v1028 = vpop.f32.mrb[0].mxu0
      %v1029 = vadd.f32 %v815, %v1028
      %1030 = vmatprep.mubr.bf16.mxu0 %v771
      %1031 = vmatmul.mubr.bf16.gmra.mrb[0].mxu0 %v770
      %v1032 = vpop.f32.mrb[0].mxu0
      %v1033 = vadd.f32 %v811, %v1032
      %v1034 = vpop.f32.mrb[0].mxu0
      %v1035 = vadd.f32 %v815, %v1034
      %v1036 = vpop.f32.mrb[0].mxu0
      %v1037 = vadd.f32 %v811, %v1036
      %v1038 = vpop.f32.mrb[0].mxu0
      %v1039 = vadd.f32 %v815, %v1038
      %1040 = vmatprep.mubr.bf16.mxu0 %v773
      %1041 = vmatmul.mubr.bf16.gmra.mrb[0].mxu0 %v772
      %v1042 = vpop.f32.mrb[0].mxu0
      %v1043 = vadd.f32 %v811, %v1042
      %v1044 = vpop.f32.mrb[0].mxu0
      %v1045 = vadd.f32 %v815, %v1044
      %v1046 = vpop.f32.mrb[0].mxu0
      %v1047 = vadd.f32 %v811, %v1046
      %v1048 = vpop.f32.mrb[0].mxu0
      %v1049 = vadd.f32 %v815, %v1048
      %1050 = vdwg.mxu0
      %v1051 = vadd.f32 %v449, %v1013
      %v1052 = vadd.f32 %v450, %v1015
      %v1053 = vadd.f32 %v451, %v1017
      %v1054 = vadd.f32 %v452, %v1019
      %v1055 = vadd.f32 %v453, %v1023
      %v1056 = vadd.f32 %v454, %v1025
      %v1057 = vadd.f32 %v455, %v1027
      %v1058 = vadd.f32 %v456, %v1029
      %v1059 = vadd.f32 %v457, %v1033
      %v1060 = vadd.f32 %v458, %v1035
      %v1061 = vadd.f32 %v459, %v1037
      %v1062 = vadd.f32 %v460, %v1039
      %v1063 = vadd.f32 %v461, %v1043
      %v1064 = vadd.f32 %v462, %v1045
      %v1065 = vadd.f32 %v463, %v1047
      %v1066 = vadd.f32 %v464, %v1049
      %v1067 = vmax.f32 %v1051, 0.0
      %v1068 = vmax.f32 %v1052, 0.0
      %v1069 = vmax.f32 %v1053, 0.0
      %v1070 = vmax.f32 %v1054, 0.0
      %v1071 = vmax.f32 %v1055, 0.0
      %v1072 = vmax.f32 %v1056, 0.0
      %v1073 = vmax.f32 %v1057, 0.0
      %v1074 = vmax.f32 %v1058, 0.0
      %v1075 = vmax.f32 %v1059, 0.0
      %v1076 = vmax.f32 %v1060, 0.0
      %v1077 = vmax.f32 %v1061, 0.0
      %v1078 = vmax.f32 %v1062, 0.0
      %v1079 = vmax.f32 %v1063, 0.0
      %v1080 = vmax.f32 %v1064, 0.0
      %v1081 = vmax.f32 %v1065, 0.0
      %v1082 = vmax.f32 %v1066, 0.0
      %v1083 = vpack.c.bf16 %v1069, %v1067
      %v1084 = vpack.c.bf16 %v1070, %v1068
      %v1085 = vpack.c.bf16 %v1073, %v1071
      %v1086 = vpack.c.bf16 %v1074, %v1072
      %v1087 = vpack.c.bf16 %v1077, %v1075
      %v1088 = vpack.c.bf16 %v1078, %v1076
      %v1089 = vpack.c.bf16 %v1081, %v1079
      %v1090 = vpack.c.bf16 %v1082, %v1080
      %v1091 = vld [vmem:[%s3] sm:$0xff]
      %v1092 = vld [vmem:[%s3 + $0x8] sm:$0xff]
      %v1093 = vld [vmem:[%s3 + $0x10] sm:$0xff]
      %v1094 = vld [vmem:[%s3 + $0x18] sm:$0xff]
      %v1095 = vld [vmem:[%s3 + $0x20] sm:$0xff]
      %v1096 = vld [vmem:[%s3 + $0x28] sm:$0xff]
      %v1097 = vld [vmem:[%s3 + $0x30] sm:$0xff]
      %v1098 = vld [vmem:[%s3 + $0x38] sm:$0xff]
      %v1099 = vld [vmem:[%s3 + $0x40] sm:$0xff]
      %v1100 = vld [vmem:[%s3 + $0x48] sm:$0xff]
      %v1101 = vld [vmem:[%s3 + $0x50] sm:$0xff]
      %v1102 = vld [vmem:[%s3 + $0x58] sm:$0xff]
      %v1103 = vld [vmem:[%s3 + $0x60] sm:$0xff]
      %v1104 = vld [vmem:[%s3 + $0x68] sm:$0xff]
      %v1105 = vld [vmem:[%s3 + $0x70] sm:$0xff]
      %v1106 = vld [vmem:[%s3 + $0x78] sm:$0xff]
      %v1107 = vld [vmem:[%s3 + $0x80] sm:$0xff]
      %v1108 = vld [vmem:[%s3 + $0x88] sm:$0xff]
      %v1109 = vld [vmem:[%s3 + $0x90] sm:$0xff]
      %v1110 = vld [vmem:[%s3 + $0x98] sm:$0xff]
      %v1111 = vld [vmem:[%s3 + $0xa0] sm:$0xff]
      %v1112 = vld [vmem:[%s3 + $0xa8] sm:$0xff]
      %v1113 = vld [vmem:[%s3 + $0xb0] sm:$0xff]
      %v1114 = vld [vmem:[%s3 + $0xb8] sm:$0xff]
      %v1115 = vld [vmem:[%s3 + $0xc0] sm:$0xff]
      %v1116 = vld [vmem:[%s3 + $0xc8] sm:$0xff]
      %v1117 = vld [vmem:[%s3 + $0xd0] sm:$0xff]
      %v1118 = vld [vmem:[%s3 + $0xd8] sm:$0xff]
      %v1119 = vld [vmem:[%s3 + $0xe0] sm:$0xff]
      %v1120 = vld [vmem:[%s3 + $0xe8] sm:$0xff]
      %v1121 = vld [vmem:[%s3 + $0xf0] sm:$0xff]
      %v1122 = vld [vmem:[%s3 + $0xf8] sm:$0xff]
      %v1123 = vld [vmem:[%s9] sm:$0x3]
      %v1125 = vlaneseq
      %v1126 = vshrl.u32 %v1125, 7
      %v1127 = vsub.s32 0, %v1126
      %v1128 = vrot.slane %v1123, %v1127
      %v1129 = vlaneseq
      %v1130 = vshrl.u32 %v1129, 7
      %v1131 = vsub.s32 1, %v1130
      %v1132 = vrot.slane %v1123, %v1131
      %v1167 = vunpack.c.l.b16 %v1091
      %v1168 = vunpack.c.h.b16 %v1091
      %v1169 = vunpack.c.l.b16 %v1092
      %v1170 = vunpack.c.h.b16 %v1092
      %v1171 = vunpack.c.l.b16 %v1093
      %v1172 = vunpack.c.h.b16 %v1093
      %v1173 = vunpack.c.l.b16 %v1094
      %v1174 = vunpack.c.h.b16 %v1094
      %v1175 = vunpack.c.l.b16 %v1095
      %v1176 = vunpack.c.h.b16 %v1095
      %v1177 = vunpack.c.l.b16 %v1096
      %v1178 = vunpack.c.h.b16 %v1096
      %v1179 = vunpack.c.l.b16 %v1097
      %v1180 = vunpack.c.h.b16 %v1097
      %v1181 = vunpack.c.l.b16 %v1098
      %v1182 = vunpack.c.h.b16 %v1098
      %v1183 = vunpack.c.l.b16 %v1099
      %v1184 = vunpack.c.h.b16 %v1099
      %v1185 = vunpack.c.l.b16 %v1100
      %v1186 = vunpack.c.h.b16 %v1100
      %v1187 = vunpack.c.l.b16 %v1101
      %v1188 = vunpack.c.h.b16 %v1101
      %v1189 = vunpack.c.l.b16 %v1102
      %v1190 = vunpack.c.h.b16 %v1102
      %v1191 = vunpack.c.l.b16 %v1103
      %v1192 = vunpack.c.h.b16 %v1103
      %v1193 = vunpack.c.l.b16 %v1104
      %v1194 = vunpack.c.h.b16 %v1104
      %v1195 = vunpack.c.l.b16 %v1105
      %v1196 = vunpack.c.h.b16 %v1105
      %v1197 = vunpack.c.l.b16 %v1106
      %v1198 = vunpack.c.h.b16 %v1106
      %v1199 = vunpack.c.l.b16 %v1107
      %v1200 = vunpack.c.h.b16 %v1107
      %v1201 = vunpack.c.l.b16 %v1108
      %v1202 = vunpack.c.h.b16 %v1108
      %v1203 = vunpack.c.l.b16 %v1109
      %v1204 = vunpack.c.h.b16 %v1109
      %v1205 = vunpack.c.l.b16 %v1110
      %v1206 = vunpack.c.h.b16 %v1110
      %v1207 = vunpack.c.l.b16 %v1111
      %v1208 = vunpack.c.h.b16 %v1111
      %v1209 = vunpack.c.l.b16 %v1112
      %v1210 = vunpack.c.h.b16 %v1112
      %v1211 = vunpack.c.l.b16 %v1113
      %v1212 = vunpack.c.h.b16 %v1113
      %v1213 = vunpack.c.l.b16 %v1114
      %v1214 = vunpack.c.h.b16 %v1114
      %v1215 = vunpack.c.l.b16 %v1115
      %v1216 = vunpack.c.h.b16 %v1115
      %v1217 = vunpack.c.l.b16 %v1116
      %v1218 = vunpack.c.h.b16 %v1116
      %v1219 = vunpack.c.l.b16 %v1117
      %v1220 = vunpack.c.h.b16 %v1117
      %v1221 = vunpack.c.l.b16 %v1118
      %v1222 = vunpack.c.h.b16 %v1118
      %v1223 = vunpack.c.l.b16 %v1119
      %v1224 = vunpack.c.h.b16 %v1119
      %v1225 = vunpack.c.l.b16 %v1120
      %v1226 = vunpack.c.h.b16 %v1120
      %v1227 = vunpack.c.l.b16 %v1121
      %v1228 = vunpack.c.h.b16 %v1121
      %v1229 = vunpack.c.l.b16 %v1122
      %v1230 = vunpack.c.h.b16 %v1122
      %v1231 = vpack.c.b16 %v1169, %v1167
      %v1232 = vpack.c.b16 %v1170, %v1168
      %v1233 = vpack.c.b16 %v1173, %v1171
      %v1234 = vpack.c.b16 %v1174, %v1172
      %v1235 = vpack.c.b16 %v1177, %v1175
      %v1236 = vpack.c.b16 %v1178, %v1176
      %v1237 = vpack.c.b16 %v1181, %v1179
      %v1238 = vpack.c.b16 %v1182, %v1180
      %v1239 = vpack.c.b16 %v1185, %v1183
      %v1240 = vpack.c.b16 %v1186, %v1184
      %v1241 = vpack.c.b16 %v1189, %v1187
      %v1242 = vpack.c.b16 %v1190, %v1188
      %v1243 = vpack.c.b16 %v1193, %v1191
      %v1244 = vpack.c.b16 %v1194, %v1192
      %v1245 = vpack.c.b16 %v1197, %v1195
      %v1246 = vpack.c.b16 %v1198, %v1196
      %v1247 = vpack.c.b16 %v1201, %v1199
      %v1248 = vpack.c.b16 %v1202, %v1200
      %v1249 = vpack.c.b16 %v1205, %v1203
      %v1250 = vpack.c.b16 %v1206, %v1204
      %v1251 = vpack.c.b16 %v1209, %v1207
      %v1252 = vpack.c.b16 %v1210, %v1208
      %v1253 = vpack.c.b16 %v1213, %v1211
      %v1254 = vpack.c.b16 %v1214, %v1212
      %v1255 = vpack.c.b16 %v1217, %v1215
      %v1256 = vpack.c.b16 %v1218, %v1216
      %v1257 = vpack.c.b16 %v1221, %v1219
      %v1258 = vpack.c.b16 %v1222, %v1220
      %v1259 = vpack.c.b16 %v1225, %v1223
      %v1260 = vpack.c.b16 %v1226, %v1224
      %v1261 = vpack.c.b16 %v1229, %v1227
      %v1262 = vpack.c.b16 %v1230, %v1228
      %1295 = vmatprep.subr.bf16.mxu0 %v1232
      %1296 = vmatpush1.bf16.msra.mxu0 %v1231
      %1297 = vmatprep.subr.bf16.mxu0 %v1234
      %1298 = vmatpush1.bf16.msra.mxu0 %v1233
      %1299 = vmatprep.subr.bf16.mxu0 %v1236
      %1300 = vmatpush1.bf16.msra.mxu0 %v1235
      %1301 = vmatprep.subr.bf16.mxu0 %v1238
      %1302 = vmatpush1.bf16.msra.mxu0 %v1237
      %1303 = vmatprep.subr.bf16.mxu0 %v1240
      %1304 = vmatpush1.bf16.msra.mxu0 %v1239
      %1305 = vmatprep.subr.bf16.mxu0 %v1242
      %1306 = vmatpush1.bf16.msra.mxu0 %v1241
      %1307 = vmatprep.subr.bf16.mxu0 %v1244
      %1308 = vmatpush1.bf16.msra.mxu0 %v1243
      %1309 = vmatprep.subr.bf16.mxu0 %v1246
      %1310 = vmatpush1.bf16.msra.mxu0 %v1245
      %1311 = vmatprep.subr.bf16.mxu0 %v1248
      %1312 = vmatpush1.bf16.msra.mxu0 %v1247
      %1313 = vmatprep.subr.bf16.mxu0 %v1250
      %1314 = vmatpush1.bf16.msra.mxu0 %v1249
      %1315 = vmatprep.subr.bf16.mxu0 %v1252
      %1316 = vmatpush1.bf16.msra.mxu0 %v1251
      %1317 = vmatprep.subr.bf16.mxu0 %v1254
      %1318 = vmatpush1.bf16.msra.mxu0 %v1253
      %1319 = vmatprep.subr.bf16.mxu0 %v1256
      %1320 = vmatpush1.bf16.msra.mxu0 %v1255
      %1321 = vmatprep.subr.bf16.mxu0 %v1258
      %1322 = vmatpush1.bf16.msra.mxu0 %v1257
      %1323 = vmatprep.subr.bf16.mxu0 %v1260
      %1324 = vmatpush1.bf16.msra.mxu0 %v1259
      %1325 = vmatprep.subr.bf16.mxu0 %v1262
      %1326 = vmatpush1.bf16.msra.mxu0 %v1261
      %1327 = vmatprep.mubr.bf16.mxu0 %v1084
      %1328 = vmatmul.mubr.bf16.gmra.mrb[0].mxu0 %v1083
      %v1329 = vpop.f32.mrb[0].mxu0
      %v1330 = vadd.f32 %v1128, %v1329
      %v1331 = vpop.f32.mrb[0].mxu0
      %v1332 = vadd.f32 %v1132, %v1331
      %v1333 = vpop.f32.mrb[0].mxu0
      %v1334 = vadd.f32 %v1128, %v1333
      %v1335 = vpop.f32.mrb[0].mxu0
      %v1336 = vadd.f32 %v1132, %v1335
      %1337 = vmatprep.mubr.bf16.mxu0 %v1086
      %1338 = vmatmul.mubr.bf16.gmra.mrb[0].mxu0 %v1085
      %v1339 = vpop.f32.mrb[0].mxu0
      %v1340 = vadd.f32 %v1128, %v1339
      %v1341 = vpop.f32.mrb[0].mxu0
      %v1342 = vadd.f32 %v1132, %v1341
      %v1343 = vpop.f32.mrb[0].mxu0
      %v1344 = vadd.f32 %v1128, %v1343
      %v1345 = vpop.f32.mrb[0].mxu0
      %v1346 = vadd.f32 %v1132, %v1345
      %1347 = vmatprep.mubr.bf16.mxu0 %v1088
      %1348 = vmatmul.mubr.bf16.gmra.mrb[0].mxu0 %v1087
      %v1349 = vpop.f32.mrb[0].mxu0
      %v1350 = vadd.f32 %v1128, %v1349
      %v1351 = vpop.f32.mrb[0].mxu0
      %v1352 = vadd.f32 %v1132, %v1351
      %v1353 = vpop.f32.mrb[0].mxu0
      %v1354 = vadd.f32 %v1128, %v1353
      %v1355 = vpop.f32.mrb[0].mxu0
      %v1356 = vadd.f32 %v1132, %v1355
      %1357 = vmatprep.mubr.bf16.mxu0 %v1090
      %1358 = vmatmul.mubr.bf16.gmra.mrb[0].mxu0 %v1089
      %v1359 = vpop.f32.mrb[0].mxu0
      %v1360 = vadd.f32 %v1128, %v1359
      %v1361 = vpop.f32.mrb[0].mxu0
      %v1362 = vadd.f32 %v1132, %v1361
      %v1363 = vpop.f32.mrb[0].mxu0
      %v1364 = vadd.f32 %v1128, %v1363
      %v1365 = vpop.f32.mrb[0].mxu0
      %v1366 = vadd.f32 %v1132, %v1365
      %1367 = vdwg.mxu0
      %v1368 = vmax.f32 %v1330, 0.0
      %v1369 = vmax.f32 %v1332, 0.0
      %v1370 = vmax.f32 %v1334, 0.0
      %v1371 = vmax.f32 %v1336, 0.0
      %v1372 = vmax.f32 %v1340, 0.0
      %v1373 = vmax.f32 %v1342, 0.0
      %v1374 = vmax.f32 %v1344, 0.0
      %v1375 = vmax.f32 %v1346, 0.0
      %v1376 = vmax.f32 %v1350, 0.0
      %v1377 = vmax.f32 %v1352, 0.0
      %v1378 = vmax.f32 %v1354, 0.0
      %v1379 = vmax.f32 %v1356, 0.0
      %v1380 = vmax.f32 %v1360, 0.0
      %v1381 = vmax.f32 %v1362, 0.0
      %v1382 = vmax.f32 %v1364, 0.0
      %v1383 = vmax.f32 %v1366, 0.0
      %v1384 = vpack.c.bf16 %v1370, %v1368
      %v1385 = vpack.c.bf16 %v1371, %v1369
      %v1386 = vpack.c.bf16 %v1374, %v1372
      %v1387 = vpack.c.bf16 %v1375, %v1373
      %v1388 = vpack.c.bf16 %v1378, %v1376
      %v1389 = vpack.c.bf16 %v1379, %v1377
      %v1390 = vpack.c.bf16 %v1382, %v1380
      %v1391 = vpack.c.bf16 %v1383, %v1381
      %v1392 = vld [vmem:[%s4] sm:$0xff]
      %v1393 = vld [vmem:[%s4 + $0x8] sm:$0xff]
      %v1394 = vld [vmem:[%s4 + $0x10] sm:$0xff]
      %v1395 = vld [vmem:[%s4 + $0x18] sm:$0xff]
      %v1396 = vld [vmem:[%s4 + $0x20] sm:$0xff]
      %v1397 = vld [vmem:[%s4 + $0x28] sm:$0xff]
      %v1398 = vld [vmem:[%s4 + $0x30] sm:$0xff]
      %v1399 = vld [vmem:[%s4 + $0x38] sm:$0xff]
      %v1400 = vld [vmem:[%s4 + $0x40] sm:$0xff]
      %v1401 = vld [vmem:[%s4 + $0x48] sm:$0xff]
      %v1402 = vld [vmem:[%s4 + $0x50] sm:$0xff]
      %v1403 = vld [vmem:[%s4 + $0x58] sm:$0xff]
      %v1404 = vld [vmem:[%s4 + $0x60] sm:$0xff]
      %v1405 = vld [vmem:[%s4 + $0x68] sm:$0xff]
      %v1406 = vld [vmem:[%s4 + $0x70] sm:$0xff]
      %v1407 = vld [vmem:[%s4 + $0x78] sm:$0xff]
      %v1408 = vld [vmem:[%s4 + $0x80] sm:$0xff]
      %v1409 = vld [vmem:[%s4 + $0x88] sm:$0xff]
      %v1410 = vld [vmem:[%s4 + $0x90] sm:$0xff]
      %v1411 = vld [vmem:[%s4 + $0x98] sm:$0xff]
      %v1412 = vld [vmem:[%s4 + $0xa0] sm:$0xff]
      %v1413 = vld [vmem:[%s4 + $0xa8] sm:$0xff]
      %v1414 = vld [vmem:[%s4 + $0xb0] sm:$0xff]
      %v1415 = vld [vmem:[%s4 + $0xb8] sm:$0xff]
      %v1416 = vld [vmem:[%s4 + $0xc0] sm:$0xff]
      %v1417 = vld [vmem:[%s4 + $0xc8] sm:$0xff]
      %v1418 = vld [vmem:[%s4 + $0xd0] sm:$0xff]
      %v1419 = vld [vmem:[%s4 + $0xd8] sm:$0xff]
      %v1420 = vld [vmem:[%s4 + $0xe0] sm:$0xff]
      %v1421 = vld [vmem:[%s4 + $0xe8] sm:$0xff]
      %v1422 = vld [vmem:[%s4 + $0xf0] sm:$0xff]
      %v1423 = vld [vmem:[%s4 + $0xf8] sm:$0xff]
      %v1424 = vld [vmem:[%s10] sm:$0x3]
      %v1426 = vlaneseq
      %v1427 = vshrl.u32 %v1426, 7
      %v1428 = vsub.s32 0, %v1427
      %v1429 = vrot.slane %v1424, %v1428
      %v1430 = vlaneseq
      %v1431 = vshrl.u32 %v1430, 7
      %v1432 = vsub.s32 1, %v1431
      %v1433 = vrot.slane %v1424, %v1432
      %v1468 = vunpack.c.l.b16 %v1392
      %v1469 = vunpack.c.h.b16 %v1392
      %v1470 = vunpack.c.l.b16 %v1393
      %v1471 = vunpack.c.h.b16 %v1393
      %v1472 = vunpack.c.l.b16 %v1394
      %v1473 = vunpack.c.h.b16 %v1394
      %v1474 = vunpack.c.l.b16 %v1395
      %v1475 = vunpack.c.h.b16 %v1395
      %v1476 = vunpack.c.l.b16 %v1396
      %v1477 = vunpack.c.h.b16 %v1396
      %v1478 = vunpack.c.l.b16 %v1397
      %v1479 = vunpack.c.h.b16 %v1397
      %v1480 = vunpack.c.l.b16 %v1398
      %v1481 = vunpack.c.h.b16 %v1398
      %v1482 = vunpack.c.l.b16 %v1399
      %v1483 = vunpack.c.h.b16 %v1399
      %v1484 = vunpack.c.l.b16 %v1400
      %v1485 = vunpack.c.h.b16 %v1400
      %v1486 = vunpack.c.l.b16 %v1401
      %v1487 = vunpack.c.h.b16 %v1401
      %v1488 = vunpack.c.l.b16 %v1402
      %v1489 = vunpack.c.h.b16 %v1402
      %v1490 = vunpack.c.l.b16 %v1403
      %v1491 = vunpack.c.h.b16 %v1403
      %v1492 = vunpack.c.l.b16 %v1404
      %v1493 = vunpack.c.h.b16 %v1404
      %v1494 = vunpack.c.l.b16 %v1405
      %v1495 = vunpack.c.h.b16 %v1405
      %v1496 = vunpack.c.l.b16 %v1406
      %v1497 = vunpack.c.h.b16 %v1406
      %v1498 = vunpack.c.l.b16 %v1407
      %v1499 = vunpack.c.h.b16 %v1407
      %v1500 = vunpack.c.l.b16 %v1408
      %v1501 = vunpack.c.h.b16 %v1408
      %v1502 = vunpack.c.l.b16 %v1409
      %v1503 = vunpack.c.h.b16 %v1409
      %v1504 = vunpack.c.l.b16 %v1410
      %v1505 = vunpack.c.h.b16 %v1410
      %v1506 = vunpack.c.l.b16 %v1411
      %v1507 = vunpack.c.h.b16 %v1411
      %v1508 = vunpack.c.l.b16 %v1412
      %v1509 = vunpack.c.h.b16 %v1412
      %v1510 = vunpack.c.l.b16 %v1413
      %v1511 = vunpack.c.h.b16 %v1413
      %v1512 = vunpack.c.l.b16 %v1414
      %v1513 = vunpack.c.h.b16 %v1414
      %v1514 = vunpack.c.l.b16 %v1415
      %v1515 = vunpack.c.h.b16 %v1415
      %v1516 = vunpack.c.l.b16 %v1416
      %v1517 = vunpack.c.h.b16 %v1416
      %v1518 = vunpack.c.l.b16 %v1417
      %v1519 = vunpack.c.h.b16 %v1417
      %v1520 = vunpack.c.l.b16 %v1418
      %v1521 = vunpack.c.h.b16 %v1418
      %v1522 = vunpack.c.l.b16 %v1419
      %v1523 = vunpack.c.h.b16 %v1419
      %v1524 = vunpack.c.l.b16 %v1420
      %v1525 = vunpack.c.h.b16 %v1420
      %v1526 = vunpack.c.l.b16 %v1421
      %v1527 = vunpack.c.h.b16 %v1421
      %v1528 = vunpack.c.l.b16 %v1422
      %v1529 = vunpack.c.h.b16 %v1422
      %v1530 = vunpack.c.l.b16 %v1423
      %v1531 = vunpack.c.h.b16 %v1423
      %v1532 = vpack.c.b16 %v1470, %v1468
      %v1533 = vpack.c.b16 %v1471, %v1469
      %v1534 = vpack.c.b16 %v1474, %v1472
      %v1535 = vpack.c.b16 %v1475, %v1473
      %v1536 = vpack.c.b16 %v1478, %v1476
      %v1537 = vpack.c.b16 %v1479, %v1477
      %v1538 = vpack.c.b16 %v1482, %v1480
      %v1539 = vpack.c.b16 %v1483, %v1481
      %v1540 = vpack.c.b16 %v1486, %v1484
      %v1541 = vpack.c.b16 %v1487, %v1485
      %v1542 = vpack.c.b16 %v1490, %v1488
      %v1543 = vpack.c.b16 %v1491, %v1489
      %v1544 = vpack.c.b16 %v1494, %v1492
      %v1545 = vpack.c.b16 %v1495, %v1493
      %v1546 = vpack.c.b16 %v1498, %v1496
      %v1547 = vpack.c.b16 %v1499, %v1497
      %v1548 = vpack.c.b16 %v1502, %v1500
      %v1549 = vpack.c.b16 %v1503, %v1501
      %v1550 = vpack.c.b16 %v1506, %v1504
      %v1551 = vpack.c.b16 %v1507, %v1505
      %v1552 = vpack.c.b16 %v1510, %v1508
      %v1553 = vpack.c.b16 %v1511, %v1509
      %v1554 = vpack.c.b16 %v1514, %v1512
      %v1555 = vpack.c.b16 %v1515, %v1513
      %v1556 = vpack.c.b16 %v1518, %v1516
      %v1557 = vpack.c.b16 %v1519, %v1517
      %v1558 = vpack.c.b16 %v1522, %v1520
      %v1559 = vpack.c.b16 %v1523, %v1521
      %v1560 = vpack.c.b16 %v1526, %v1524
      %v1561 = vpack.c.b16 %v1527, %v1525
      %v1562 = vpack.c.b16 %v1530, %v1528
      %v1563 = vpack.c.b16 %v1531, %v1529
      %1596 = vmatprep.subr.bf16.mxu0 %v1533
      %1597 = vmatpush1.bf16.msra.mxu0 %v1532
      %1598 = vmatprep.subr.bf16.mxu0 %v1535
      %1599 = vmatpush1.bf16.msra.mxu0 %v1534
      %1600 = vmatprep.subr.bf16.mxu0 %v1537
      %1601 = vmatpush1.bf16.msra.mxu0 %v1536
      %1602 = vmatprep.subr.bf16.mxu0 %v1539
      %1603 = vmatpush1.bf16.msra.mxu0 %v1538
      %1604 = vmatprep.subr.bf16.mxu0 %v1541
      %1605 = vmatpush1.bf16.msra.mxu0 %v1540
      %1606 = vmatprep.subr.bf16.mxu0 %v1543
      %1607 = vmatpush1.bf16.msra.mxu0 %v1542
      %1608 = vmatprep.subr.bf16.mxu0 %v1545
      %1609 = vmatpush1.bf16.msra.mxu0 %v1544
      %1610 = vmatprep.subr.bf16.mxu0 %v1547
      %1611 = vmatpush1.bf16.msra.mxu0 %v1546
      %1612 = vmatprep.subr.bf16.mxu0 %v1549
      %1613 = vmatpush1.bf16.msra.mxu0 %v1548
      %1614 = vmatprep.subr.bf16.mxu0 %v1551
      %1615 = vmatpush1.bf16.msra.mxu0 %v1550
      %1616 = vmatprep.subr.bf16.mxu0 %v1553
      %1617 = vmatpush1.bf16.msra.mxu0 %v1552
      %1618 = vmatprep.subr.bf16.mxu0 %v1555
      %1619 = vmatpush1.bf16.msra.mxu0 %v1554
      %1620 = vmatprep.subr.bf16.mxu0 %v1557
      %1621 = vmatpush1.bf16.msra.mxu0 %v1556
      %1622 = vmatprep.subr.bf16.mxu0 %v1559
      %1623 = vmatpush1.bf16.msra.mxu0 %v1558
      %1624 = vmatprep.subr.bf16.mxu0 %v1561
      %1625 = vmatpush1.bf16.msra.mxu0 %v1560
      %1626 = vmatprep.subr.bf16.mxu0 %v1563
      %1627 = vmatpush1.bf16.msra.mxu0 %v1562
      %1628 = vmatprep.mubr.bf16.mxu0 %v1385
      %1629 = vmatmul.mubr.bf16.gmra.mrb[0].mxu0 %v1384
      %v1630 = vpop.f32.mrb[0].mxu0
      %v1631 = vadd.f32 %v1429, %v1630
      %v1632 = vpop.f32.mrb[0].mxu0
      %v1633 = vadd.f32 %v1433, %v1632
      %v1634 = vpop.f32.mrb[0].mxu0
      %v1635 = vadd.f32 %v1429, %v1634
      %v1636 = vpop.f32.mrb[0].mxu0
      %v1637 = vadd.f32 %v1433, %v1636
      %1638 = vmatprep.mubr.bf16.mxu0 %v1387
      %1639 = vmatmul.mubr.bf16.gmra.mrb[0].mxu0 %v1386
      %v1640 = vpop.f32.mrb[0].mxu0
      %v1641 = vadd.f32 %v1429, %v1640
      %v1642 = vpop.f32.mrb[0].mxu0
      %v1643 = vadd.f32 %v1433, %v1642
      %v1644 = vpop.f32.mrb[0].mxu0
      %v1645 = vadd.f32 %v1429, %v1644
      %v1646 = vpop.f32.mrb[0].mxu0
      %v1647 = vadd.f32 %v1433, %v1646
      %1648 = vmatprep.mubr.bf16.mxu0 %v1389
      %1649 = vmatmul.mubr.bf16.gmra.mrb[0].mxu0 %v1388
      %v1650 = vpop.f32.mrb[0].mxu0
      %v1651 = vadd.f32 %v1429, %v1650
      %v1652 = vpop.f32.mrb[0].mxu0
      %v1653 = vadd.f32 %v1433, %v1652
      %v1654 = vpop.f32.mrb[0].mxu0
      %v1655 = vadd.f32 %v1429, %v1654
      %v1656 = vpop.f32.mrb[0].mxu0
      %v1657 = vadd.f32 %v1433, %v1656
      %1658 = vmatprep.mubr.bf16.mxu0 %v1391
      %1659 = vmatmul.mubr.bf16.gmra.mrb[0].mxu0 %v1390
      %v1660 = vpop.f32.mrb[0].mxu0
      %v1661 = vadd.f32 %v1429, %v1660
      %v1662 = vpop.f32.mrb[0].mxu0
      %v1663 = vadd.f32 %v1433, %v1662
      %v1664 = vpop.f32.mrb[0].mxu0
      %v1665 = vadd.f32 %v1429, %v1664
      %v1666 = vpop.f32.mrb[0].mxu0
      %v1667 = vadd.f32 %v1433, %v1666
      %1668 = vdwg.mxu0
      %v1669 = vadd.f32 %v1067, %v1631
      %v1670 = vadd.f32 %v1068, %v1633
      %v1671 = vadd.f32 %v1069, %v1635
      %v1672 = vadd.f32 %v1070, %v1637
      %v1673 = vadd.f32 %v1071, %v1641
      %v1674 = vadd.f32 %v1072, %v1643
      %v1675 = vadd.f32 %v1073, %v1645
      %v1676 = vadd.f32 %v1074, %v1647
      %v1677 = vadd.f32 %v1075, %v1651
      %v1678 = vadd.f32 %v1076, %v1653
      %v1679 = vadd.f32 %v1077, %v1655
      %v1680 = vadd.f32 %v1078, %v1657
      %v1681 = vadd.f32 %v1079, %v1661
      %v1682 = vadd.f32 %v1080, %v1663
      %v1683 = vadd.f32 %v1081, %v1665
      %v1684 = vadd.f32 %v1082, %v1667
      %v1685 = vmax.f32 %v1669, 0.0
      %v1686 = vmax.f32 %v1670, 0.0
      %v1687 = vmax.f32 %v1671, 0.0
      %v1688 = vmax.f32 %v1672, 0.0
      %v1689 = vmax.f32 %v1673, 0.0
      %v1690 = vmax.f32 %v1674, 0.0
      %v1691 = vmax.f32 %v1675, 0.0
      %v1692 = vmax.f32 %v1676, 0.0
      %v1693 = vmax.f32 %v1677, 0.0
      %v1694 = vmax.f32 %v1678, 0.0
      %v1695 = vmax.f32 %v1679, 0.0
      %v1696 = vmax.f32 %v1680, 0.0
      %v1697 = vmax.f32 %v1681, 0.0
      %v1698 = vmax.f32 %v1682, 0.0
      %v1699 = vmax.f32 %v1683, 0.0
      %v1700 = vmax.f32 %v1684, 0.0
      %v1701 = vpack.c.bf16 %v1687, %v1685
      %v1702 = vpack.c.bf16 %v1688, %v1686
      %v1703 = vpack.c.bf16 %v1691, %v1689
      %v1704 = vpack.c.bf16 %v1692, %v1690
      %v1705 = vpack.c.bf16 %v1695, %v1693
      %v1706 = vpack.c.bf16 %v1696, %v1694
      %v1707 = vpack.c.bf16 %v1699, %v1697
      %v1708 = vpack.c.bf16 %v1700, %v1698
      %v1709 = vld [vmem:[%s5] sm:$0xff]
      %v1710 = vld [vmem:[%s5 + $0x8] sm:$0xff]
      %v1711 = vld [vmem:[%s5 + $0x10] sm:$0xff]
      %v1712 = vld [vmem:[%s5 + $0x18] sm:$0xff]
      %v1713 = vld [vmem:[%s5 + $0x20] sm:$0xff]
      %v1714 = vld [vmem:[%s5 + $0x28] sm:$0xff]
      %v1715 = vld [vmem:[%s5 + $0x30] sm:$0xff]
      %v1716 = vld [vmem:[%s5 + $0x38] sm:$0xff]
      %v1717 = vld [vmem:[%s5 + $0x40] sm:$0xff]
      %v1718 = vld [vmem:[%s5 + $0x48] sm:$0xff]
      %v1719 = vld [vmem:[%s5 + $0x50] sm:$0xff]
      %v1720 = vld [vmem:[%s5 + $0x58] sm:$0xff]
      %v1721 = vld [vmem:[%s5 + $0x60] sm:$0xff]
      %v1722 = vld [vmem:[%s5 + $0x68] sm:$0xff]
      %v1723 = vld [vmem:[%s5 + $0x70] sm:$0xff]
      %v1724 = vld [vmem:[%s5 + $0x78] sm:$0xff]
      %v1725 = vld [vmem:[%s5 + $0x80] sm:$0xff]
      %v1726 = vld [vmem:[%s5 + $0x88] sm:$0xff]
      %v1727 = vld [vmem:[%s5 + $0x90] sm:$0xff]
      %v1728 = vld [vmem:[%s5 + $0x98] sm:$0xff]
      %v1729 = vld [vmem:[%s5 + $0xa0] sm:$0xff]
      %v1730 = vld [vmem:[%s5 + $0xa8] sm:$0xff]
      %v1731 = vld [vmem:[%s5 + $0xb0] sm:$0xff]
      %v1732 = vld [vmem:[%s5 + $0xb8] sm:$0xff]
      %v1733 = vld [vmem:[%s5 + $0xc0] sm:$0xff]
      %v1734 = vld [vmem:[%s5 + $0xc8] sm:$0xff]
      %v1735 = vld [vmem:[%s5 + $0xd0] sm:$0xff]
      %v1736 = vld [vmem:[%s5 + $0xd8] sm:$0xff]
      %v1737 = vld [vmem:[%s5 + $0xe0] sm:$0xff]
      %v1738 = vld [vmem:[%s5 + $0xe8] sm:$0xff]
      %v1739 = vld [vmem:[%s5 + $0xf0] sm:$0xff]
      %v1740 = vld [vmem:[%s5 + $0xf8] sm:$0xff]
      %v1741 = vld [vmem:[%s5 + $0x100] sm:$0xff]
      %v1742 = vld [vmem:[%s5 + $0x108] sm:$0xff]
      %v1743 = vld [vmem:[%s5 + $0x110] sm:$0xff]
      %v1744 = vld [vmem:[%s5 + $0x118] sm:$0xff]
      %v1745 = vld [vmem:[%s5 + $0x120] sm:$0xff]
      %v1746 = vld [vmem:[%s5 + $0x128] sm:$0xff]
      %v1747 = vld [vmem:[%s5 + $0x130] sm:$0xff]
      %v1748 = vld [vmem:[%s5 + $0x138] sm:$0xff]
      %v1749 = vld [vmem:[%s5 + $0x140] sm:$0xff]
      %v1750 = vld [vmem:[%s5 + $0x148] sm:$0xff]
      %v1751 = vld [vmem:[%s5 + $0x150] sm:$0xff]
      %v1752 = vld [vmem:[%s5 + $0x158] sm:$0xff]
      %v1753 = vld [vmem:[%s5 + $0x160] sm:$0xff]
      %v1754 = vld [vmem:[%s5 + $0x168] sm:$0xff]
      %v1755 = vld [vmem:[%s5 + $0x170] sm:$0xff]
      %v1756 = vld [vmem:[%s5 + $0x178] sm:$0xff]
      %v1757 = vld [vmem:[%s5 + $0x180] sm:$0xff]
      %v1758 = vld [vmem:[%s5 + $0x188] sm:$0xff]
      %v1759 = vld [vmem:[%s5 + $0x190] sm:$0xff]
      %v1760 = vld [vmem:[%s5 + $0x198] sm:$0xff]
      %v1761 = vld [vmem:[%s5 + $0x1a0] sm:$0xff]
      %v1762 = vld [vmem:[%s5 + $0x1a8] sm:$0xff]
      %v1763 = vld [vmem:[%s5 + $0x1b0] sm:$0xff]
      %v1764 = vld [vmem:[%s5 + $0x1b8] sm:$0xff]
      %v1765 = vld [vmem:[%s5 + $0x1c0] sm:$0xff]
      %v1766 = vld [vmem:[%s5 + $0x1c8] sm:$0xff]
      %v1767 = vld [vmem:[%s5 + $0x1d0] sm:$0xff]
      %v1768 = vld [vmem:[%s5 + $0x1d8] sm:$0xff]
      %v1769 = vld [vmem:[%s5 + $0x1e0] sm:$0xff]
      %v1770 = vld [vmem:[%s5 + $0x1e8] sm:$0xff]
      %v1771 = vld [vmem:[%s5 + $0x1f0] sm:$0xff]
      %v1772 = vld [vmem:[%s5 + $0x1f8] sm:$0xff]
      %v1773 = vld [vmem:[%s11] sm:$0xf]
      %v1775 = vlaneseq
      %v1776 = vshrl.u32 %v1775, 7
      %v1777 = vsub.s32 0, %v1776
      %v1778 = vrot.slane %v1773, %v1777
      %v1779 = vlaneseq
      %v1780 = vshrl.u32 %v1779, 7
      %v1781 = vsub.s32 1, %v1780
      %v1782 = vrot.slane %v1773, %v1781
      %v1783 = vlaneseq
      %v1784 = vshrl.u32 %v1783, 7
      %v1785 = vsub.s32 2, %v1784
      %v1786 = vrot.slane %v1773, %v1785
      %v1787 = vlaneseq
      %v1788 = vshrl.u32 %v1787, 7
      %v1789 = vsub.s32 3, %v1788
      %v1790 = vrot.slane %v1773, %v1789
      %v1859 = vunpack.c.l.b16 %v1709
      %v1860 = vunpack.c.h.b16 %v1709
      %v1861 = vunpack.c.l.b16 %v1710
      %v1862 = vunpack.c.h.b16 %v1710
      %v1863 = vunpack.c.l.b16 %v1711
      %v1864 = vunpack.c.h.b16 %v1711
      %v1865 = vunpack.c.l.b16 %v1712
      %v1866 = vunpack.c.h.b16 %v1712
      %v1867 = vunpack.c.l.b16 %v1713
      %v1868 = vunpack.c.h.b16 %v1713
      %v1869 = vunpack.c.l.b16 %v1714
      %v1870 = vunpack.c.h.b16 %v1714
      %v1871 = vunpack.c.l.b16 %v1715
      %v1872 = vunpack.c.h.b16 %v1715
      %v1873 = vunpack.c.l.b16 %v1716
      %v1874 = vunpack.c.h.b16 %v1716
      %v1875 = vunpack.c.l.b16 %v1717
      %v1876 = vunpack.c.h.b16 %v1717
      %v1877 = vunpack.c.l.b16 %v1718
      %v1878 = vunpack.c.h.b16 %v1718
      %v1879 = vunpack.c.l.b16 %v1719
      %v1880 = vunpack.c.h.b16 %v1719
      %v1881 = vunpack.c.l.b16 %v1720
      %v1882 = vunpack.c.h.b16 %v1720
      %v1883 = vunpack.c.l.b16 %v1721
      %v1884 = vunpack.c.h.b16 %v1721
      %v1885 = vunpack.c.l.b16 %v1722
      %v1886 = vunpack.c.h.b16 %v1722
      %v1887 = vunpack.c.l.b16 %v1723
      %v1888 = vunpack.c.h.b16 %v1723
      %v1889 = vunpack.c.l.b16 %v1724
      %v1890 = vunpack.c.h.b16 %v1724
      %v1891 = vunpack.c.l.b16 %v1725
      %v1892 = vunpack.c.h.b16 %v1725
      %v1893 = vunpack.c.l.b16 %v1726
      %v1894 = vunpack.c.h.b16 %v1726
      %v1895 = vunpack.c.l.b16 %v1727
      %v1896 = vunpack.c.h.b16 %v1727
      %v1897 = vunpack.c.l.b16 %v1728
      %v1898 = vunpack.c.h.b16 %v1728
      %v1899 = vunpack.c.l.b16 %v1729
      %v1900 = vunpack.c.h.b16 %v1729
      %v1901 = vunpack.c.l.b16 %v1730
      %v1902 = vunpack.c.h.b16 %v1730
      %v1903 = vunpack.c.l.b16 %v1731
      %v1904 = vunpack.c.h.b16 %v1731
      %v1905 = vunpack.c.l.b16 %v1732
      %v1906 = vunpack.c.h.b16 %v1732
      %v1907 = vunpack.c.l.b16 %v1733
      %v1908 = vunpack.c.h.b16 %v1733
      %v1909 = vunpack.c.l.b16 %v1734
      %v1910 = vunpack.c.h.b16 %v1734
      %v1911 = vunpack.c.l.b16 %v1735
      %v1912 = vunpack.c.h.b16 %v1735
      %v1913 = vunpack.c.l.b16 %v1736
      %v1914 = vunpack.c.h.b16 %v1736
      %v1915 = vunpack.c.l.b16 %v1737
      %v1916 = vunpack.c.h.b16 %v1737
      %v1917 = vunpack.c.l.b16 %v1738
      %v1918 = vunpack.c.h.b16 %v1738
      %v1919 = vunpack.c.l.b16 %v1739
      %v1920 = vunpack.c.h.b16 %v1739
      %v1921 = vunpack.c.l.b16 %v1740
      %v1922 = vunpack.c.h.b16 %v1740
      %v1923 = vunpack.c.l.b16 %v1741
      %v1924 = vunpack.c.h.b16 %v1741
      %v1925 = vunpack.c.l.b16 %v1742
      %v1926 = vunpack.c.h.b16 %v1742
      %v1927 = vunpack.c.l.b16 %v1743
      %v1928 = vunpack.c.h.b16 %v1743
      %v1929 = vunpack.c.l.b16 %v1744
      %v1930 = vunpack.c.h.b16 %v1744
      %v1931 = vunpack.c.l.b16 %v1745
      %v1932 = vunpack.c.h.b16 %v1745
      %v1933 = vunpack.c.l.b16 %v1746
      %v1934 = vunpack.c.h.b16 %v1746
      %v1935 = vunpack.c.l.b16 %v1747
      %v1936 = vunpack.c.h.b16 %v1747
      %v1937 = vunpack.c.l.b16 %v1748
      %v1938 = vunpack.c.h.b16 %v1748
      %v1939 = vunpack.c.l.b16 %v1749
      %v1940 = vunpack.c.h.b16 %v1749
      %v1941 = vunpack.c.l.b16 %v1750
      %v1942 = vunpack.c.h.b16 %v1750
      %v1943 = vunpack.c.l.b16 %v1751
      %v1944 = vunpack.c.h.b16 %v1751
      %v1945 = vunpack.c.l.b16 %v1752
      %v1946 = vunpack.c.h.b16 %v1752
      %v1947 = vunpack.c.l.b16 %v1753
      %v1948 = vunpack.c.h.b16 %v1753
      %v1949 = vunpack.c.l.b16 %v1754
      %v1950 = vunpack.c.h.b16 %v1754
      %v1951 = vunpack.c.l.b16 %v1755
      %v1952 = vunpack.c.h.b16 %v1755
      %v1953 = vunpack.c.l.b16 %v1756
      %v1954 = vunpack.c.h.b16 %v1756
      %v1955 = vunpack.c.l.b16 %v1757
      %v1956 = vunpack.c.h.b16 %v1757
      %v1957 = vunpack.c.l.b16 %v1758
      %v1958 = vunpack.c.h.b16 %v1758
      %v1959 = vunpack.c.l.b16 %v1759
      %v1960 = vunpack.c.h.b16 %v1759
      %v1961 = vunpack.c.l.b16 %v1760
      %v1962 = vunpack.c.h.b16 %v1760
      %v1963 = vunpack.c.l.b16 %v1761
      %v1964 = vunpack.c.h.b16 %v1761
      %v1965 = vunpack.c.l.b16 %v1762
      %v1966 = vunpack.c.h.b16 %v1762
      %v1967 = vunpack.c.l.b16 %v1763
      %v1968 = vunpack.c.h.b16 %v1763
      %v1969 = vunpack.c.l.b16 %v1764
      %v1970 = vunpack.c.h.b16 %v1764
      %v1971 = vunpack.c.l.b16 %v1765
      %v1972 = vunpack.c.h.b16 %v1765
      %v1973 = vunpack.c.l.b16 %v1766
      %v1974 = vunpack.c.h.b16 %v1766
      %v1975 = vunpack.c.l.b16 %v1767
      %v1976 = vunpack.c.h.b16 %v1767
      %v1977 = vunpack.c.l.b16 %v1768
      %v1978 = vunpack.c.h.b16 %v1768
      %v1979 = vunpack.c.l.b16 %v1769
      %v1980 = vunpack.c.h.b16 %v1769
      %v1981 = vunpack.c.l.b16 %v1770
      %v1982 = vunpack.c.h.b16 %v1770
      %v1983 = vunpack.c.l.b16 %v1771
      %v1984 = vunpack.c.h.b16 %v1771
      %v1985 = vunpack.c.l.b16 %v1772
      %v1986 = vunpack.c.h.b16 %v1772
      %v1987 = vpack.c.b16 %v1863, %v1859
      %v1988 = vpack.c.b16 %v1864, %v1860
      %v1989 = vpack.c.b16 %v1865, %v1861
      %v1990 = vpack.c.b16 %v1866, %v1862
      %v1991 = vpack.c.b16 %v1871, %v1867
      %v1992 = vpack.c.b16 %v1872, %v1868
      %v1993 = vpack.c.b16 %v1873, %v1869
      %v1994 = vpack.c.b16 %v1874, %v1870
      %v1995 = vpack.c.b16 %v1879, %v1875
      %v1996 = vpack.c.b16 %v1880, %v1876
      %v1997 = vpack.c.b16 %v1881, %v1877
      %v1998 = vpack.c.b16 %v1882, %v1878
      %v1999 = vpack.c.b16 %v1887, %v1883
      %v2000 = vpack.c.b16 %v1888, %v1884
      %v2001 = vpack.c.b16 %v1889, %v1885
      %v2002 = vpack.c.b16 %v1890, %v1886
      %v2003 = vpack.c.b16 %v1895, %v1891
      %v2004 = vpack.c.b16 %v1896, %v1892
      %v2005 = vpack.c.b16 %v1897, %v1893
      %v2006 = vpack.c.b16 %v1898, %v1894
      %v2007 = vpack.c.b16 %v1903, %v1899
      %v2008 = vpack.c.b16 %v1904, %v1900
      %v2009 = vpack.c.b16 %v1905, %v1901
      %v2010 = vpack.c.b16 %v1906, %v1902
      %v2011 = vpack.c.b16 %v1911, %v1907
      %v2012 = vpack.c.b16 %v1912, %v1908
      %v2013 = vpack.c.b16 %v1913, %v1909
      %v2014 = vpack.c.b16 %v1914, %v1910
      %v2015 = vpack.c.b16 %v1919, %v1915
      %v2016 = vpack.c.b16 %v1920, %v1916
      %v2017 = vpack.c.b16 %v1921, %v1917
      %v2018 = vpack.c.b16 %v1922, %v1918
      %v2019 = vpack.c.b16 %v1927, %v1923
      %v2020 = vpack.c.b16 %v1928, %v1924
      %v2021 = vpack.c.b16 %v1929, %v1925
      %v2022 = vpack.c.b16 %v1930, %v1926
      %v2023 = vpack.c.b16 %v1935, %v1931
      %v2024 = vpack.c.b16 %v1936, %v1932
      %v2025 = vpack.c.b16 %v1937, %v1933
      %v2026 = vpack.c.b16 %v1938, %v1934
      %v2027 = vpack.c.b16 %v1943, %v1939
      %v2028 = vpack.c.b16 %v1944, %v1940
      %v2029 = vpack.c.b16 %v1945, %v1941
      %v2030 = vpack.c.b16 %v1946, %v1942
      %v2031 = vpack.c.b16 %v1951, %v1947
      %v2032 = vpack.c.b16 %v1952, %v1948
      %v2033 = vpack.c.b16 %v1953, %v1949
      %v2034 = vpack.c.b16 %v1954, %v1950
      %v2035 = vpack.c.b16 %v1959, %v1955
      %v2036 = vpack.c.b16 %v1960, %v1956
      %v2037 = vpack.c.b16 %v1961, %v1957
      %v2038 = vpack.c.b16 %v1962, %v1958
      %v2039 = vpack.c.b16 %v1967, %v1963
      %v2040 = vpack.c.b16 %v1968, %v1964
      %v2041 = vpack.c.b16 %v1969, %v1965
      %v2042 = vpack.c.b16 %v1970, %v1966
      %v2043 = vpack.c.b16 %v1975, %v1971
      %v2044 = vpack.c.b16 %v1976, %v1972
      %v2045 = vpack.c.b16 %v1977, %v1973
      %v2046 = vpack.c.b16 %v1978, %v1974
      %v2047 = vpack.c.b16 %v1983, %v1979
      %v2048 = vpack.c.b16 %v1984, %v1980
      %v2049 = vpack.c.b16 %v1985, %v1981
      %v2050 = vpack.c.b16 %v1986, %v1982
      %2115 = vmatprep.subr.bf16.mxu0 %v1988
      %2116 = vmatpush1.bf16.msra.mxu0 %v1987
      %2117 = vmatprep.subr.bf16.mxu0 %v1992
      %2118 = vmatpush1.bf16.msra.mxu0 %v1991
      %2119 = vmatprep.subr.bf16.mxu0 %v1996
      %2120 = vmatpush1.bf16.msra.mxu0 %v1995
      %2121 = vmatprep.subr.bf16.mxu0 %v2000
      %2122 = vmatpush1.bf16.msra.mxu0 %v1999
      %2123 = vmatprep.subr.bf16.mxu0 %v2004
      %2124 = vmatpush1.bf16.msra.mxu0 %v2003
      %2125 = vmatprep.subr.bf16.mxu0 %v2008
      %2126 = vmatpush1.bf16.msra.mxu0 %v2007
      %2127 = vmatprep.subr.bf16.mxu0 %v2012
      %2128 = vmatpush1.bf16.msra.mxu0 %v2011
      %2129 = vmatprep.subr.bf16.mxu0 %v2016
      %2130 = vmatpush1.bf16.msra.mxu0 %v2015
      %2131 = vmatprep.subr.bf16.mxu0 %v2020
      %2132 = vmatpush1.bf16.msra.mxu0 %v2019
      %2133 = vmatprep.subr.bf16.mxu0 %v2024
      %2134 = vmatpush1.bf16.msra.mxu0 %v2023
      %2135 = vmatprep.subr.bf16.mxu0 %v2028
      %2136 = vmatpush1.bf16.msra.mxu0 %v2027
      %2137 = vmatprep.subr.bf16.mxu0 %v2032
      %2138 = vmatpush1.bf16.msra.mxu0 %v2031
      %2139 = vmatprep.subr.bf16.mxu0 %v2036
      %2140 = vmatpush1.bf16.msra.mxu0 %v2035
      %2141 = vmatprep.subr.bf16.mxu0 %v2040
      %2142 = vmatpush1.bf16.msra.mxu0 %v2039
      %2143 = vmatprep.subr.bf16.mxu0 %v2044
      %2144 = vmatpush1.bf16.msra.mxu0 %v2043
      %2145 = vmatprep.subr.bf16.mxu0 %v2048
      %2146 = vmatpush1.bf16.msra.mxu0 %v2047
      %2147 = vmatprep.mubr.bf16.mxu0 %v1702
      %2148 = vmatmul.mubr.bf16.gmra.mrb[0].mxu0 %v1701
      %v2149 = vpop.f32.mrb[0].mxu0
      %v2150 = vadd.f32 %v1778, %v2149
      %v2151 = vpop.f32.mrb[0].mxu0
      %v2152 = vadd.f32 %v1782, %v2151
      %v2153 = vpop.f32.mrb[0].mxu0
      %v2154 = vadd.f32 %v1778, %v2153
      %v2155 = vpop.f32.mrb[0].mxu0
      %v2156 = vadd.f32 %v1782, %v2155
      %2157 = vmatprep.mubr.bf16.mxu0 %v1704
      %2158 = vmatmul.mubr.bf16.gmra.mrb[0].mxu0 %v1703
      %v2159 = vpop.f32.mrb[0].mxu0
      %v2160 = vadd.f32 %v1778, %v2159
      %v2161 = vpop.f32.mrb[0].mxu0
      %v2162 = vadd.f32 %v1782, %v2161
      %v2163 = vpop.f32.mrb[0].mxu0
      %v2164 = vadd.f32 %v1778, %v2163
      %v2165 = vpop.f32.mrb[0].mxu0
      %v2166 = vadd.f32 %v1782, %v2165
      %2167 = vmatprep.mubr.bf16.mxu0 %v1706
      %2168 = vmatmul.mubr.bf16.gmra.mrb[0].mxu0 %v1705
      %v2169 = vpop.f32.mrb[0].mxu0
      %v2170 = vadd.f32 %v1778, %v2169
      %v2171 = vpop.f32.mrb[0].mxu0
      %v2172 = vadd.f32 %v1782, %v2171
      %v2173 = vpop.f32.mrb[0].mxu0
      %v2174 = vadd.f32 %v1778, %v2173
      %v2175 = vpop.f32.mrb[0].mxu0
      %v2176 = vadd.f32 %v1782, %v2175
      %2177 = vmatprep.mubr.bf16.mxu0 %v1708
      %2178 = vmatmul.mubr.bf16.gmra.mrb[0].mxu0 %v1707
      %v2179 = vpop.f32.mrb[0].mxu0
      %v2180 = vadd.f32 %v1778, %v2179
      %v2181 = vpop.f32.mrb[0].mxu0
      %v2182 = vadd.f32 %v1782, %v2181
      %v2183 = vpop.f32.mrb[0].mxu0
      %v2184 = vadd.f32 %v1778, %v2183
      %v2185 = vpop.f32.mrb[0].mxu0
      %v2186 = vadd.f32 %v1782, %v2185
      %2187 = vdwg.mxu0
      %2188 = vmatprep.subr.bf16.mxu0 %v1990
      %2189 = vmatpush1.bf16.msra.mxu0 %v1989
      %2190 = vmatprep.subr.bf16.mxu0 %v1994
      %2191 = vmatpush1.bf16.msra.mxu0 %v1993
      %2192 = vmatprep.subr.bf16.mxu0 %v1998
      %2193 = vmatpush1.bf16.msra.mxu0 %v1997
      %2194 = vmatprep.subr.bf16.mxu0 %v2002
      %2195 = vmatpush1.bf16.msra.mxu0 %v2001
      %2196 = vmatprep.subr.bf16.mxu0 %v2006
      %2197 = vmatpush1.bf16.msra.mxu0 %v2005
      %2198 = vmatprep.subr.bf16.mxu0 %v2010
      %2199 = vmatpush1.bf16.msra.mxu0 %v2009
      %2200 = vmatprep.subr.bf16.mxu0 %v2014
      %2201 = vmatpush1.bf16.msra.mxu0 %v2013
      %2202 = vmatprep.subr.bf16.mxu0 %v2018
      %2203 = vmatpush1.bf16.msra.mxu0 %v2017
      %2204 = vmatprep.subr.bf16.mxu0 %v2022
      %2205 = vmatpush1.bf16.msra.mxu0 %v2021
      %2206 = vmatprep.subr.bf16.mxu0 %v2026
      %2207 = vmatpush1.bf16.msra.mxu0 %v2025
      %2208 = vmatprep.subr.bf16.mxu0 %v2030
      %2209 = vmatpush1.bf16.msra.mxu0 %v2029
      %2210 = vmatprep.subr.bf16.mxu0 %v2034
      %2211 = vmatpush1.bf16.msra.mxu0 %v2033
      %2212 = vmatprep.subr.bf16.mxu0 %v2038
      %2213 = vmatpush1.bf16.msra.mxu0 %v2037
      %2214 = vmatprep.subr.bf16.mxu0 %v2042
      %2215 = vmatpush1.bf16.msra.mxu0 %v2041
      %2216 = vmatprep.subr.bf16.mxu0 %v2046
      %2217 = vmatpush1.bf16.msra.mxu0 %v2045
      %2218 = vmatprep.subr.bf16.mxu0 %v2050
      %2219 = vmatpush1.bf16.msra.mxu0 %v2049
      %2220 = vmatprep.mubr.bf16.mxu0 %v1702
      %2221 = vmatmul.mubr.bf16.gmra.mrb[0].mxu0 %v1701
      %v2222 = vpop.f32.mrb[0].mxu0
      %v2223 = vadd.f32 %v1786, %v2222
      %v2224 = vpop.f32.mrb[0].mxu0
      %v2225 = vadd.f32 %v1790, %v2224
      %v2226 = vpop.f32.mrb[0].mxu0
      %v2227 = vadd.f32 %v1786, %v2226
      %v2228 = vpop.f32.mrb[0].mxu0
      %v2229 = vadd.f32 %v1790, %v2228
      %2230 = vmatprep.mubr.bf16.mxu0 %v1704
      %2231 = vmatmul.mubr.bf16.gmra.mrb[0].mxu0 %v1703
      %v2232 = vpop.f32.mrb[0].mxu0
      %v2233 = vadd.f32 %v1786, %v2232
      %v2234 = vpop.f32.mrb[0].mxu0
      %v2235 = vadd.f32 %v1790, %v2234
      %v2236 = vpop.f32.mrb[0].mxu0
      %v2237 = vadd.f32 %v1786, %v2236
      %v2238 = vpop.f32.mrb[0].mxu0
      %v2239 = vadd.f32 %v1790, %v2238
      %2240 = vmatprep.mubr.bf16.mxu0 %v1706
      %2241 = vmatmul.mubr.bf16.gmra.mrb[0].mxu0 %v1705
      %v2242 = vpop.f32.mrb[0].mxu0
      %v2243 = vadd.f32 %v1786, %v2242
      %v2244 = vpop.f32.mrb[0].mxu0
      %v2245 = vadd.f32 %v1790, %v2244
      %v2246 = vpop.f32.mrb[0].mxu0
      %v2247 = vadd.f32 %v1786, %v2246
      %v2248 = vpop.f32.mrb[0].mxu0
      %v2249 = vadd.f32 %v1790, %v2248
      %2250 = vmatprep.mubr.bf16.mxu0 %v1708
      %2251 = vmatmul.mubr.bf16.gmra.mrb[0].mxu0 %v1707
      %v2252 = vpop.f32.mrb[0].mxu0
      %v2253 = vadd.f32 %v1786, %v2252
      %v2254 = vpop.f32.mrb[0].mxu0
      %v2255 = vadd.f32 %v1790, %v2254
      %v2256 = vpop.f32.mrb[0].mxu0
      %v2257 = vadd.f32 %v1786, %v2256
      %v2258 = vpop.f32.mrb[0].mxu0
      %v2259 = vadd.f32 %v1790, %v2258
      %2260 = vdwg.mxu0
      %v2261 = vmax.f32 %v2150, 0.0
      %v2262 = vmax.f32 %v2152, 0.0
      %v2263 = vmax.f32 %v2223, 0.0
      %v2264 = vmax.f32 %v2225, 0.0
      %v2265 = vmax.f32 %v2154, 0.0
      %v2266 = vmax.f32 %v2156, 0.0
      %v2267 = vmax.f32 %v2227, 0.0
      %v2268 = vmax.f32 %v2229, 0.0
      %v2269 = vmax.f32 %v2160, 0.0
      %v2270 = vmax.f32 %v2162, 0.0
      %v2271 = vmax.f32 %v2233, 0.0
      %v2272 = vmax.f32 %v2235, 0.0
      %v2273 = vmax.f32 %v2164, 0.0
      %v2274 = vmax.f32 %v2166, 0.0
      %v2275 = vmax.f32 %v2237, 0.0
      %v2276 = vmax.f32 %v2239, 0.0
      %v2277 = vmax.f32 %v2170, 0.0
      %v2278 = vmax.f32 %v2172, 0.0
      %v2279 = vmax.f32 %v2243, 0.0
      %v2280 = vmax.f32 %v2245, 0.0
      %v2281 = vmax.f32 %v2174, 0.0
      %v2282 = vmax.f32 %v2176, 0.0
      %v2283 = vmax.f32 %v2247, 0.0
      %v2284 = vmax.f32 %v2249, 0.0
      %v2285 = vmax.f32 %v2180, 0.0
      %v2286 = vmax.f32 %v2182, 0.0
      %v2287 = vmax.f32 %v2253, 0.0
      %v2288 = vmax.f32 %v2255, 0.0
      %v2289 = vmax.f32 %v2184, 0.0
      %v2290 = vmax.f32 %v2186, 0.0
      %v2291 = vmax.f32 %v2257, 0.0
      %v2292 = vmax.f32 %v2259, 0.0
      %v2293 = vpack.c.bf16 %v2265, %v2261
      %v2294 = vpack.c.bf16 %v2266, %v2262
      %v2295 = vpack.c.bf16 %v2267, %v2263
      %v2296 = vpack.c.bf16 %v2268, %v2264
      %v2297 = vpack.c.bf16 %v2273, %v2269
      %v2298 = vpack.c.bf16 %v2274, %v2270
      %v2299 = vpack.c.bf16 %v2275, %v2271
      %v2300 = vpack.c.bf16 %v2276, %v2272
      %v2301 = vpack.c.bf16 %v2281, %v2277
      %v2302 = vpack.c.bf16 %v2282, %v2278
      %v2303 = vpack.c.bf16 %v2283, %v2279
      %v2304 = vpack.c.bf16 %v2284, %v2280
      %v2305 = vpack.c.bf16 %v2289, %v2285
      %v2306 = vpack.c.bf16 %v2290, %v2286
      %v2307 = vpack.c.bf16 %v2291, %v2287
      %v2308 = vpack.c.bf16 %v2292, %v2288
      %v2309 = vld [vmem:[%s6] sm:$0xff]
      %v2310 = vld [vmem:[%s6 + $0x8] sm:$0xff]
      %v2311 = vld [vmem:[%s6 + $0x10] sm:$0xff]
      %v2312 = vld [vmem:[%s6 + $0x18] sm:$0xff]
      %v2313 = vld [vmem:[%s6 + $0x20] sm:$0xff]
      %v2314 = vld [vmem:[%s6 + $0x28] sm:$0xff]
      %v2315 = vld [vmem:[%s6 + $0x30] sm:$0xff]
      %v2316 = vld [vmem:[%s6 + $0x38] sm:$0xff]
      %v2317 = vld [vmem:[%s6 + $0x40] sm:$0xff]
      %v2318 = vld [vmem:[%s6 + $0x48] sm:$0xff]
      %v2319 = vld [vmem:[%s6 + $0x50] sm:$0xff]
      %v2320 = vld [vmem:[%s6 + $0x58] sm:$0xff]
      %v2321 = vld [vmem:[%s6 + $0x60] sm:$0xff]
      %v2322 = vld [vmem:[%s6 + $0x68] sm:$0xff]
      %v2323 = vld [vmem:[%s6 + $0x70] sm:$0xff]
      %v2324 = vld [vmem:[%s6 + $0x78] sm:$0xff]
      %v2325 = vld [vmem:[%s6 + $0x80] sm:$0xff]
      %v2326 = vld [vmem:[%s6 + $0x88] sm:$0xff]
      %v2327 = vld [vmem:[%s6 + $0x90] sm:$0xff]
      %v2328 = vld [vmem:[%s6 + $0x98] sm:$0xff]
      %v2329 = vld [vmem:[%s6 + $0xa0] sm:$0xff]
      %v2330 = vld [vmem:[%s6 + $0xa8] sm:$0xff]
      %v2331 = vld [vmem:[%s6 + $0xb0] sm:$0xff]
      %v2332 = vld [vmem:[%s6 + $0xb8] sm:$0xff]
      %v2333 = vld [vmem:[%s6 + $0xc0] sm:$0xff]
      %v2334 = vld [vmem:[%s6 + $0xc8] sm:$0xff]
      %v2335 = vld [vmem:[%s6 + $0xd0] sm:$0xff]
      %v2336 = vld [vmem:[%s6 + $0xd8] sm:$0xff]
      %v2337 = vld [vmem:[%s6 + $0xe0] sm:$0xff]
      %v2338 = vld [vmem:[%s6 + $0xe8] sm:$0xff]
      %v2339 = vld [vmem:[%s6 + $0xf0] sm:$0xff]
      %v2340 = vld [vmem:[%s6 + $0xf8] sm:$0xff]
      %v2341 = vld [vmem:[%s6 + $0x100] sm:$0xff]
      %v2342 = vld [vmem:[%s6 + $0x108] sm:$0xff]
      %v2343 = vld [vmem:[%s6 + $0x110] sm:$0xff]
      %v2344 = vld [vmem:[%s6 + $0x118] sm:$0xff]
      %v2345 = vld [vmem:[%s6 + $0x120] sm:$0xff]
      %v2346 = vld [vmem:[%s6 + $0x128] sm:$0xff]
      %v2347 = vld [vmem:[%s6 + $0x130] sm:$0xff]
      %v2348 = vld [vmem:[%s6 + $0x138] sm:$0xff]
      %v2349 = vld [vmem:[%s6 + $0x140] sm:$0xff]
      %v2350 = vld [vmem:[%s6 + $0x148] sm:$0xff]
      %v2351 = vld [vmem:[%s6 + $0x150] sm:$0xff]
      %v2352 = vld [vmem:[%s6 + $0x158] sm:$0xff]
      %v2353 = vld [vmem:[%s6 + $0x160] sm:$0xff]
      %v2354 = vld [vmem:[%s6 + $0x168] sm:$0xff]
      %v2355 = vld [vmem:[%s6 + $0x170] sm:$0xff]
      %v2356 = vld [vmem:[%s6 + $0x178] sm:$0xff]
      %v2357 = vld [vmem:[%s6 + $0x180] sm:$0xff]
      %v2358 = vld [vmem:[%s6 + $0x188] sm:$0xff]
      %v2359 = vld [vmem:[%s6 + $0x190] sm:$0xff]
      %v2360 = vld [vmem:[%s6 + $0x198] sm:$0xff]
      %v2361 = vld [vmem:[%s6 + $0x1a0] sm:$0xff]
      %v2362 = vld [vmem:[%s6 + $0x1a8] sm:$0xff]
      %v2363 = vld [vmem:[%s6 + $0x1b0] sm:$0xff]
      %v2364 = vld [vmem:[%s6 + $0x1b8] sm:$0xff]
      %v2365 = vld [vmem:[%s6 + $0x1c0] sm:$0xff]
      %v2366 = vld [vmem:[%s6 + $0x1c8] sm:$0xff]
      %v2367 = vld [vmem:[%s6 + $0x1d0] sm:$0xff]
      %v2368 = vld [vmem:[%s6 + $0x1d8] sm:$0xff]
      %v2369 = vld [vmem:[%s6 + $0x1e0] sm:$0xff]
      %v2370 = vld [vmem:[%s6 + $0x1e8] sm:$0xff]
      %v2371 = vld [vmem:[%s6 + $0x1f0] sm:$0xff]
      %v2372 = vld [vmem:[%s6 + $0x1f8] sm:$0xff]
      %v2373 = vld [vmem:[%s6 + $0x200] sm:$0xff]
      %v2374 = vld [vmem:[%s6 + $0x208] sm:$0xff]
      %v2375 = vld [vmem:[%s6 + $0x210] sm:$0xff]
      %v2376 = vld [vmem:[%s6 + $0x218] sm:$0xff]
      %v2377 = vld [vmem:[%s6 + $0x220] sm:$0xff]
      %v2378 = vld [vmem:[%s6 + $0x228] sm:$0xff]
      %v2379 = vld [vmem:[%s6 + $0x230] sm:$0xff]
      %v2380 = vld [vmem:[%s6 + $0x238] sm:$0xff]
      %v2381 = vld [vmem:[%s6 + $0x240] sm:$0xff]
      %v2382 = vld [vmem:[%s6 + $0x248] sm:$0xff]
      %v2383 = vld [vmem:[%s6 + $0x250] sm:$0xff]
      %v2384 = vld [vmem:[%s6 + $0x258] sm:$0xff]
      %v2385 = vld [vmem:[%s6 + $0x260] sm:$0xff]
      %v2386 = vld [vmem:[%s6 + $0x268] sm:$0xff]
      %v2387 = vld [vmem:[%s6 + $0x270] sm:$0xff]
      %v2388 = vld [vmem:[%s6 + $0x278] sm:$0xff]
      %v2389 = vld [vmem:[%s6 + $0x280] sm:$0xff]
      %v2390 = vld [vmem:[%s6 + $0x288] sm:$0xff]
      %v2391 = vld [vmem:[%s6 + $0x290] sm:$0xff]
      %v2392 = vld [vmem:[%s6 + $0x298] sm:$0xff]
      %v2393 = vld [vmem:[%s6 + $0x2a0] sm:$0xff]
      %v2394 = vld [vmem:[%s6 + $0x2a8] sm:$0xff]
      %v2395 = vld [vmem:[%s6 + $0x2b0] sm:$0xff]
      %v2396 = vld [vmem:[%s6 + $0x2b8] sm:$0xff]
      %v2397 = vld [vmem:[%s6 + $0x2c0] sm:$0xff]
      %v2398 = vld [vmem:[%s6 + $0x2c8] sm:$0xff]
      %v2399 = vld [vmem:[%s6 + $0x2d0] sm:$0xff]
      %v2400 = vld [vmem:[%s6 + $0x2d8] sm:$0xff]
      %v2401 = vld [vmem:[%s6 + $0x2e0] sm:$0xff]
      %v2402 = vld [vmem:[%s6 + $0x2e8] sm:$0xff]
      %v2403 = vld [vmem:[%s6 + $0x2f0] sm:$0xff]
      %v2404 = vld [vmem:[%s6 + $0x2f8] sm:$0xff]
      %v2405 = vld [vmem:[%s6 + $0x300] sm:$0xff]
      %v2406 = vld [vmem:[%s6 + $0x308] sm:$0xff]
      %v2407 = vld [vmem:[%s6 + $0x310] sm:$0xff]
      %v2408 = vld [vmem:[%s6 + $0x318] sm:$0xff]
      %v2409 = vld [vmem:[%s6 + $0x320] sm:$0xff]
      %v2410 = vld [vmem:[%s6 + $0x328] sm:$0xff]
      %v2411 = vld [vmem:[%s6 + $0x330] sm:$0xff]
      %v2412 = vld [vmem:[%s6 + $0x338] sm:$0xff]
      %v2413 = vld [vmem:[%s6 + $0x340] sm:$0xff]
      %v2414 = vld [vmem:[%s6 + $0x348] sm:$0xff]
      %v2415 = vld [vmem:[%s6 + $0x350] sm:$0xff]
      %v2416 = vld [vmem:[%s6 + $0x358] sm:$0xff]
      %v2417 = vld [vmem:[%s6 + $0x360] sm:$0xff]
      %v2418 = vld [vmem:[%s6 + $0x368] sm:$0xff]
      %v2419 = vld [vmem:[%s6 + $0x370] sm:$0xff]
      %v2420 = vld [vmem:[%s6 + $0x378] sm:$0xff]
      %v2421 = vld [vmem:[%s6 + $0x380] sm:$0xff]
      %v2422 = vld [vmem:[%s6 + $0x388] sm:$0xff]
      %v2423 = vld [vmem:[%s6 + $0x390] sm:$0xff]
      %v2424 = vld [vmem:[%s6 + $0x398] sm:$0xff]
      %v2425 = vld [vmem:[%s6 + $0x3a0] sm:$0xff]
      %v2426 = vld [vmem:[%s6 + $0x3a8] sm:$0xff]
      %v2427 = vld [vmem:[%s6 + $0x3b0] sm:$0xff]
      %v2428 = vld [vmem:[%s6 + $0x3b8] sm:$0xff]
      %v2429 = vld [vmem:[%s6 + $0x3c0] sm:$0xff]
      %v2430 = vld [vmem:[%s6 + $0x3c8] sm:$0xff]
      %v2431 = vld [vmem:[%s6 + $0x3d0] sm:$0xff]
      %v2432 = vld [vmem:[%s6 + $0x3d8] sm:$0xff]
      %v2433 = vld [vmem:[%s6 + $0x3e0] sm:$0xff]
      %v2434 = vld [vmem:[%s6 + $0x3e8] sm:$0xff]
      %v2435 = vld [vmem:[%s6 + $0x3f0] sm:$0xff]
      %v2436 = vld [vmem:[%s6 + $0x3f8] sm:$0xff]
      %v2437 = vld [vmem:[%s6 + $0x400] sm:$0xff]
      %v2438 = vld [vmem:[%s6 + $0x408] sm:$0xff]
      %v2439 = vld [vmem:[%s6 + $0x410] sm:$0xff]
      %v2440 = vld [vmem:[%s6 + $0x418] sm:$0xff]
      %v2441 = vld [vmem:[%s6 + $0x420] sm:$0xff]
      %v2442 = vld [vmem:[%s6 + $0x428] sm:$0xff]
      %v2443 = vld [vmem:[%s6 + $0x430] sm:$0xff]
      %v2444 = vld [vmem:[%s6 + $0x438] sm:$0xff]
      %v2445 = vld [vmem:[%s6 + $0x440] sm:$0xff]
      %v2446 = vld [vmem:[%s6 + $0x448] sm:$0xff]
      %v2447 = vld [vmem:[%s6 + $0x450] sm:$0xff]
      %v2448 = vld [vmem:[%s6 + $0x458] sm:$0xff]
      %v2449 = vld [vmem:[%s6 + $0x460] sm:$0xff]
      %v2450 = vld [vmem:[%s6 + $0x468] sm:$0xff]
      %v2451 = vld [vmem:[%s6 + $0x470] sm:$0xff]
      %v2452 = vld [vmem:[%s6 + $0x478] sm:$0xff]
      %v2453 = vld [vmem:[%s6 + $0x480] sm:$0xff]
      %v2454 = vld [vmem:[%s6 + $0x488] sm:$0xff]
      %v2455 = vld [vmem:[%s6 + $0x490] sm:$0xff]
      %v2456 = vld [vmem:[%s6 + $0x498] sm:$0xff]
      %v2457 = vld [vmem:[%s6 + $0x4a0] sm:$0xff]
      %v2458 = vld [vmem:[%s6 + $0x4a8] sm:$0xff]
      %v2459 = vld [vmem:[%s6 + $0x4b0] sm:$0xff]
      %v2460 = vld [vmem:[%s6 + $0x4b8] sm:$0xff]
      %v2461 = vld [vmem:[%s6 + $0x4c0] sm:$0xff]
      %v2462 = vld [vmem:[%s6 + $0x4c8] sm:$0xff]
      %v2463 = vld [vmem:[%s6 + $0x4d0] sm:$0xff]
      %v2464 = vld [vmem:[%s6 + $0x4d8] sm:$0xff]
      %v2465 = vld [vmem:[%s6 + $0x4e0] sm:$0xff]
      %v2466 = vld [vmem:[%s6 + $0x4e8] sm:$0xff]
      %v2467 = vld [vmem:[%s6 + $0x4f0] sm:$0xff]
      %v2468 = vld [vmem:[%s6 + $0x4f8] sm:$0xff]
      %v2469 = vld [vmem:[%s6 + $0x500] sm:$0xff]
      %v2470 = vld [vmem:[%s6 + $0x508] sm:$0xff]
      %v2471 = vld [vmem:[%s6 + $0x510] sm:$0xff]
      %v2472 = vld [vmem:[%s6 + $0x518] sm:$0xff]
      %v2473 = vld [vmem:[%s6 + $0x520] sm:$0xff]
      %v2474 = vld [vmem:[%s6 + $0x528] sm:$0xff]
      %v2475 = vld [vmem:[%s6 + $0x530] sm:$0xff]
      %v2476 = vld [vmem:[%s6 + $0x538] sm:$0xff]
      %v2477 = vld [vmem:[%s6 + $0x540] sm:$0xff]
      %v2478 = vld [vmem:[%s6 + $0x548] sm:$0xff]
      %v2479 = vld [vmem:[%s6 + $0x550] sm:$0xff]
      %v2480 = vld [vmem:[%s6 + $0x558] sm:$0xff]
      %v2481 = vld [vmem:[%s6 + $0x560] sm:$0xff]
      %v2482 = vld [vmem:[%s6 + $0x568] sm:$0xff]
      %v2483 = vld [vmem:[%s6 + $0x570] sm:$0xff]
      %v2484 = vld [vmem:[%s6 + $0x578] sm:$0xff]
      %v2485 = vld [vmem:[%s6 + $0x580] sm:$0xff]
      %v2486 = vld [vmem:[%s6 + $0x588] sm:$0xff]
      %v2487 = vld [vmem:[%s6 + $0x590] sm:$0xff]
      %v2488 = vld [vmem:[%s6 + $0x598] sm:$0xff]
      %v2489 = vld [vmem:[%s6 + $0x5a0] sm:$0xff]
      %v2490 = vld [vmem:[%s6 + $0x5a8] sm:$0xff]
      %v2491 = vld [vmem:[%s6 + $0x5b0] sm:$0xff]
      %v2492 = vld [vmem:[%s6 + $0x5b8] sm:$0xff]
      %v2493 = vld [vmem:[%s6 + $0x5c0] sm:$0xff]
      %v2494 = vld [vmem:[%s6 + $0x5c8] sm:$0xff]
      %v2495 = vld [vmem:[%s6 + $0x5d0] sm:$0xff]
      %v2496 = vld [vmem:[%s6 + $0x5d8] sm:$0xff]
      %v2497 = vld [vmem:[%s6 + $0x5e0] sm:$0xff]
      %v2498 = vld [vmem:[%s6 + $0x5e8] sm:$0xff]
      %v2499 = vld [vmem:[%s6 + $0x5f0] sm:$0xff]
      %v2500 = vld [vmem:[%s6 + $0x5f8] sm:$0xff]
      %v2501 = vld [vmem:[%s12] sm:$0x3f]
      %v2503 = vlaneseq
      %v2504 = vshrl.u32 %v2503, 7
      %v2505 = vsub.s32 0, %v2504
      %v2506 = vrot.slane %v2501, %v2505
      %v2507 = vlaneseq
      %v2508 = vshrl.u32 %v2507, 7
      %v2509 = vsub.s32 1, %v2508
      %v2510 = vrot.slane %v2501, %v2509
      %v2511 = vlaneseq
      %v2512 = vshrl.u32 %v2511, 7
      %v2513 = vsub.s32 2, %v2512
      %v2514 = vrot.slane %v2501, %v2513
      %v2515 = vlaneseq
      %v2516 = vshrl.u32 %v2515, 7
      %v2517 = vsub.s32 3, %v2516
      %v2518 = vrot.slane %v2501, %v2517
      %v2519 = vlaneseq
      %v2520 = vshrl.u32 %v2519, 7
      %v2521 = vsub.s32 4, %v2520
      %v2522 = vrot.slane %v2501, %v2521
      %v2523 = vlaneseq
      %v2524 = vshrl.u32 %v2523, 7
      %v2525 = vsub.s32 5, %v2524
      %v2526 = vrot.slane %v2501, %v2525
      %v2725 = vunpack.c.l.b16 %v2309
      %v2726 = vunpack.c.h.b16 %v2309
      %v2727 = vunpack.c.l.b16 %v2310
      %v2728 = vunpack.c.h.b16 %v2310
      %v2729 = vunpack.c.l.b16 %v2311
      %v2730 = vunpack.c.h.b16 %v2311
      %v2731 = vunpack.c.l.b16 %v2312
      %v2732 = vunpack.c.h.b16 %v2312
      %v2733 = vunpack.c.l.b16 %v2313
      %v2734 = vunpack.c.h.b16 %v2313
      %v2735 = vunpack.c.l.b16 %v2314
      %v2736 = vunpack.c.h.b16 %v2314
      %v2737 = vunpack.c.l.b16 %v2315
      %v2738 = vunpack.c.h.b16 %v2315
      %v2739 = vunpack.c.l.b16 %v2316
      %v2740 = vunpack.c.h.b16 %v2316
      %v2741 = vunpack.c.l.b16 %v2317
      %v2742 = vunpack.c.h.b16 %v2317
      %v2743 = vunpack.c.l.b16 %v2318
      %v2744 = vunpack.c.h.b16 %v2318
      %v2745 = vunpack.c.l.b16 %v2319
      %v2746 = vunpack.c.h.b16 %v2319
      %v2747 = vunpack.c.l.b16 %v2320
      %v2748 = vunpack.c.h.b16 %v2320
      %v2749 = vunpack.c.l.b16 %v2321
      %v2750 = vunpack.c.h.b16 %v2321
      %v2751 = vunpack.c.l.b16 %v2322
      %v2752 = vunpack.c.h.b16 %v2322
      %v2753 = vunpack.c.l.b16 %v2323
      %v2754 = vunpack.c.h.b16 %v2323
      %v2755 = vunpack.c.l.b16 %v2324
      %v2756 = vunpack.c.h.b16 %v2324
      %v2757 = vunpack.c.l.b16 %v2325
      %v2758 = vunpack.c.h.b16 %v2325
      %v2759 = vunpack.c.l.b16 %v2326
      %v2760 = vunpack.c.h.b16 %v2326
      %v2761 = vunpack.c.l.b16 %v2327
      %v2762 = vunpack.c.h.b16 %v2327
      %v2763 = vunpack.c.l.b16 %v2328
      %v2764 = vunpack.c.h.b16 %v2328
      %v2765 = vunpack.c.l.b16 %v2329
      %v2766 = vunpack.c.h.b16 %v2329
      %v2767 = vunpack.c.l.b16 %v2330
      %v2768 = vunpack.c.h.b16 %v2330
      %v2769 = vunpack.c.l.b16 %v2331
      %v2770 = vunpack.c.h.b16 %v2331
      %v2771 = vunpack.c.l.b16 %v2332
      %v2772 = vunpack.c.h.b16 %v2332
      %v2773 = vunpack.c.l.b16 %v2333
      %v2774 = vunpack.c.h.b16 %v2333
      %v2775 = vunpack.c.l.b16 %v2334
      %v2776 = vunpack.c.h.b16 %v2334
      %v2777 = vunpack.c.l.b16 %v2335
      %v2778 = vunpack.c.h.b16 %v2335
      %v2779 = vunpack.c.l.b16 %v2336
      %v2780 = vunpack.c.h.b16 %v2336
      %v2781 = vunpack.c.l.b16 %v2337
      %v2782 = vunpack.c.h.b16 %v2337
      %v2783 = vunpack.c.l.b16 %v2338
      %v2784 = vunpack.c.h.b16 %v2338
      %v2785 = vunpack.c.l.b16 %v2339
      %v2786 = vunpack.c.h.b16 %v2339
      %v2787 = vunpack.c.l.b16 %v2340
      %v2788 = vunpack.c.h.b16 %v2340
      %v2789 = vunpack.c.l.b16 %v2341
      %v2790 = vunpack.c.h.b16 %v2341
      %v2791 = vunpack.c.l.b16 %v2342
      %v2792 = vunpack.c.h.b16 %v2342
      %v2793 = vunpack.c.l.b16 %v2343
      %v2794 = vunpack.c.h.b16 %v2343
      %v2795 = vunpack.c.l.b16 %v2344
      %v2796 = vunpack.c.h.b16 %v2344
      %v2797 = vunpack.c.l.b16 %v2345
      %v2798 = vunpack.c.h.b16 %v2345
      %v2799 = vunpack.c.l.b16 %v2346
      %v2800 = vunpack.c.h.b16 %v2346
      %v2801 = vunpack.c.l.b16 %v2347
      %v2802 = vunpack.c.h.b16 %v2347
      %v2803 = vunpack.c.l.b16 %v2348
      %v2804 = vunpack.c.h.b16 %v2348
      %v2805 = vunpack.c.l.b16 %v2349
      %v2806 = vunpack.c.h.b16 %v2349
      %v2807 = vunpack.c.l.b16 %v2350
      %v2808 = vunpack.c.h.b16 %v2350
      %v2809 = vunpack.c.l.b16 %v2351
      %v2810 = vunpack.c.h.b16 %v2351
      %v2811 = vunpack.c.l.b16 %v2352
      %v2812 = vunpack.c.h.b16 %v2352
      %v2813 = vunpack.c.l.b16 %v2353
      %v2814 = vunpack.c.h.b16 %v2353
      %v2815 = vunpack.c.l.b16 %v2354
      %v2816 = vunpack.c.h.b16 %v2354
      %v2817 = vunpack.c.l.b16 %v2355
      %v2818 = vunpack.c.h.b16 %v2355
      %v2819 = vunpack.c.l.b16 %v2356
      %v2820 = vunpack.c.h.b16 %v2356
      %v2821 = vunpack.c.l.b16 %v2357
      %v2822 = vunpack.c.h.b16 %v2357
      %v2823 = vunpack.c.l.b16 %v2358
      %v2824 = vunpack.c.h.b16 %v2358
      %v2825 = vunpack.c.l.b16 %v2359
      %v2826 = vunpack.c.h.b16 %v2359
      %v2827 = vunpack.c.l.b16 %v2360
      %v2828 = vunpack.c.h.b16 %v2360
      %v2829 = vunpack.c.l.b16 %v2361
      %v2830 = vunpack.c.h.b16 %v2361
      %v2831 = vunpack.c.l.b16 %v2362
      %v2832 = vunpack.c.h.b16 %v2362
      %v2833 = vunpack.c.l.b16 %v2363
      %v2834 = vunpack.c.h.b16 %v2363
      %v2835 = vunpack.c.l.b16 %v2364
      %v2836 = vunpack.c.h.b16 %v2364
      %v2837 = vunpack.c.l.b16 %v2365
      %v2838 = vunpack.c.h.b16 %v2365
      %v2839 = vunpack.c.l.b16 %v2366
      %v2840 = vunpack.c.h.b16 %v2366
      %v2841 = vunpack.c.l.b16 %v2367
      %v2842 = vunpack.c.h.b16 %v2367
      %v2843 = vunpack.c.l.b16 %v2368
      %v2844 = vunpack.c.h.b16 %v2368
      %v2845 = vunpack.c.l.b16 %v2369
      %v2846 = vunpack.c.h.b16 %v2369
      %v2847 = vunpack.c.l.b16 %v2370
      %v2848 = vunpack.c.h.b16 %v2370
      %v2849 = vunpack.c.l.b16 %v2371
      %v2850 = vunpack.c.h.b16 %v2371
      %v2851 = vunpack.c.l.b16 %v2372
      %v2852 = vunpack.c.h.b16 %v2372
      %v2853 = vunpack.c.l.b16 %v2373
      %v2854 = vunpack.c.h.b16 %v2373
      %v2855 = vunpack.c.l.b16 %v2374
      %v2856 = vunpack.c.h.b16 %v2374
      %v2857 = vunpack.c.l.b16 %v2375
      %v2858 = vunpack.c.h.b16 %v2375
      %v2859 = vunpack.c.l.b16 %v2376
      %v2860 = vunpack.c.h.b16 %v2376
      %v2861 = vunpack.c.l.b16 %v2377
      %v2862 = vunpack.c.h.b16 %v2377
      %v2863 = vunpack.c.l.b16 %v2378
      %v2864 = vunpack.c.h.b16 %v2378
      %v2865 = vunpack.c.l.b16 %v2379
      %v2866 = vunpack.c.h.b16 %v2379
      %v2867 = vunpack.c.l.b16 %v2380
      %v2868 = vunpack.c.h.b16 %v2380
      %v2869 = vunpack.c.l.b16 %v2381
      %v2870 = vunpack.c.h.b16 %v2381
      %v2871 = vunpack.c.l.b16 %v2382
      %v2872 = vunpack.c.h.b16 %v2382
      %v2873 = vunpack.c.l.b16 %v2383
      %v2874 = vunpack.c.h.b16 %v2383
      %v2875 = vunpack.c.l.b16 %v2384
      %v2876 = vunpack.c.h.b16 %v2384
      %v2877 = vunpack.c.l.b16 %v2385
      %v2878 = vunpack.c.h.b16 %v2385
      %v2879 = vunpack.c.l.b16 %v2386
      %v2880 = vunpack.c.h.b16 %v2386
      %v2881 = vunpack.c.l.b16 %v2387
      %v2882 = vunpack.c.h.b16 %v2387
      %v2883 = vunpack.c.l.b16 %v2388
      %v2884 = vunpack.c.h.b16 %v2388
      %v2885 = vunpack.c.l.b16 %v2389
      %v2886 = vunpack.c.h.b16 %v2389
      %v2887 = vunpack.c.l.b16 %v2390
      %v2888 = vunpack.c.h.b16 %v2390
      %v2889 = vunpack.c.l.b16 %v2391
      %v2890 = vunpack.c.h.b16 %v2391
      %v2891 = vunpack.c.l.b16 %v2392
      %v2892 = vunpack.c.h.b16 %v2392
      %v2893 = vunpack.c.l.b16 %v2393
      %v2894 = vunpack.c.h.b16 %v2393
      %v2895 = vunpack.c.l.b16 %v2394
      %v2896 = vunpack.c.h.b16 %v2394
      %v2897 = vunpack.c.l.b16 %v2395
      %v2898 = vunpack.c.h.b16 %v2395
      %v2899 = vunpack.c.l.b16 %v2396
      %v2900 = vunpack.c.h.b16 %v2396
      %v2901 = vunpack.c.l.b16 %v2397
      %v2902 = vunpack.c.h.b16 %v2397
      %v2903 = vunpack.c.l.b16 %v2398
      %v2904 = vunpack.c.h.b16 %v2398
      %v2905 = vunpack.c.l.b16 %v2399
      %v2906 = vunpack.c.h.b16 %v2399
      %v2907 = vunpack.c.l.b16 %v2400
      %v2908 = vunpack.c.h.b16 %v2400
      %v2909 = vunpack.c.l.b16 %v2401
      %v2910 = vunpack.c.h.b16 %v2401
      %v2911 = vunpack.c.l.b16 %v2402
      %v2912 = vunpack.c.h.b16 %v2402
      %v2913 = vunpack.c.l.b16 %v2403
      %v2914 = vunpack.c.h.b16 %v2403
      %v2915 = vunpack.c.l.b16 %v2404
      %v2916 = vunpack.c.h.b16 %v2404
      %v2917 = vunpack.c.l.b16 %v2405
      %v2918 = vunpack.c.h.b16 %v2405
      %v2919 = vunpack.c.l.b16 %v2406
      %v2920 = vunpack.c.h.b16 %v2406
      %v2921 = vunpack.c.l.b16 %v2407
      %v2922 = vunpack.c.h.b16 %v2407
      %v2923 = vunpack.c.l.b16 %v2408
      %v2924 = vunpack.c.h.b16 %v2408
      %v2925 = vunpack.c.l.b16 %v2409
      %v2926 = vunpack.c.h.b16 %v2409
      %v2927 = vunpack.c.l.b16 %v2410
      %v2928 = vunpack.c.h.b16 %v2410
      %v2929 = vunpack.c.l.b16 %v2411
      %v2930 = vunpack.c.h.b16 %v2411
      %v2931 = vunpack.c.l.b16 %v2412
      %v2932 = vunpack.c.h.b16 %v2412
      %v2933 = vunpack.c.l.b16 %v2413
      %v2934 = vunpack.c.h.b16 %v2413
      %v2935 = vunpack.c.l.b16 %v2414
      %v2936 = vunpack.c.h.b16 %v2414
      %v2937 = vunpack.c.l.b16 %v2415
      %v2938 = vunpack.c.h.b16 %v2415
      %v2939 = vunpack.c.l.b16 %v2416
      %v2940 = vunpack.c.h.b16 %v2416
      %v2941 = vunpack.c.l.b16 %v2417
      %v2942 = vunpack.c.h.b16 %v2417
      %v2943 = vunpack.c.l.b16 %v2418
      %v2944 = vunpack.c.h.b16 %v2418
      %v2945 = vunpack.c.l.b16 %v2419
      %v2946 = vunpack.c.h.b16 %v2419
      %v2947 = vunpack.c.l.b16 %v2420
      %v2948 = vunpack.c.h.b16 %v2420
      %v2949 = vunpack.c.l.b16 %v2421
      %v2950 = vunpack.c.h.b16 %v2421
      %v2951 = vunpack.c.l.b16 %v2422
      %v2952 = vunpack.c.h.b16 %v2422
      %v2953 = vunpack.c.l.b16 %v2423
      %v2954 = vunpack.c.h.b16 %v2423
      %v2955 = vunpack.c.l.b16 %v2424
      %v2956 = vunpack.c.h.b16 %v2424
      %v2957 = vunpack.c.l.b16 %v2425
      %v2958 = vunpack.c.h.b16 %v2425
      %v2959 = vunpack.c.l.b16 %v2426
      %v2960 = vunpack.c.h.b16 %v2426
      %v2961 = vunpack.c.l.b16 %v2427
      %v2962 = vunpack.c.h.b16 %v2427
      %v2963 = vunpack.c.l.b16 %v2428
      %v2964 = vunpack.c.h.b16 %v2428
      %v2965 = vunpack.c.l.b16 %v2429
      %v2966 = vunpack.c.h.b16 %v2429
      %v2967 = vunpack.c.l.b16 %v2430
      %v2968 = vunpack.c.h.b16 %v2430
      %v2969 = vunpack.c.l.b16 %v2431
      %v2970 = vunpack.c.h.b16 %v2431
      %v2971 = vunpack.c.l.b16 %v2432
      %v2972 = vunpack.c.h.b16 %v2432
      %v2973 = vunpack.c.l.b16 %v2433
      %v2974 = vunpack.c.h.b16 %v2433
      %v2975 = vunpack.c.l.b16 %v2434
      %v2976 = vunpack.c.h.b16 %v2434
      %v2977 = vunpack.c.l.b16 %v2435
      %v2978 = vunpack.c.h.b16 %v2435
      %v2979 = vunpack.c.l.b16 %v2436
      %v2980 = vunpack.c.h.b16 %v2436
      %v2981 = vunpack.c.l.b16 %v2437
      %v2982 = vunpack.c.h.b16 %v2437
      %v2983 = vunpack.c.l.b16 %v2438
      %v2984 = vunpack.c.h.b16 %v2438
      %v2985 = vunpack.c.l.b16 %v2439
      %v2986 = vunpack.c.h.b16 %v2439
      %v2987 = vunpack.c.l.b16 %v2440
      %v2988 = vunpack.c.h.b16 %v2440
      %v2989 = vunpack.c.l.b16 %v2441
      %v2990 = vunpack.c.h.b16 %v2441
      %v2991 = vunpack.c.l.b16 %v2442
      %v2992 = vunpack.c.h.b16 %v2442
      %v2993 = vunpack.c.l.b16 %v2443
      %v2994 = vunpack.c.h.b16 %v2443
      %v2995 = vunpack.c.l.b16 %v2444
      %v2996 = vunpack.c.h.b16 %v2444
      %v2997 = vunpack.c.l.b16 %v2445
      %v2998 = vunpack.c.h.b16 %v2445
      %v2999 = vunpack.c.l.b16 %v2446
      %v3000 = vunpack.c.h.b16 %v2446
      %v3001 = vunpack.c.l.b16 %v2447
      %v3002 = vunpack.c.h.b16 %v2447
      %v3003 = vunpack.c.l.b16 %v2448
      %v3004 = vunpack.c.h.b16 %v2448
      %v3005 = vunpack.c.l.b16 %v2449
      %v3006 = vunpack.c.h.b16 %v2449
      %v3007 = vunpack.c.l.b16 %v2450
      %v3008 = vunpack.c.h.b16 %v2450
      %v3009 = vunpack.c.l.b16 %v2451
      %v3010 = vunpack.c.h.b16 %v2451
      %v3011 = vunpack.c.l.b16 %v2452
      %v3012 = vunpack.c.h.b16 %v2452
      %v3013 = vunpack.c.l.b16 %v2453
      %v3014 = vunpack.c.h.b16 %v2453
      %v3015 = vunpack.c.l.b16 %v2454
      %v3016 = vunpack.c.h.b16 %v2454
      %v3017 = vunpack.c.l.b16 %v2455
      %v3018 = vunpack.c.h.b16 %v2455
      %v3019 = vunpack.c.l.b16 %v2456
      %v3020 = vunpack.c.h.b16 %v2456
      %v3021 = vunpack.c.l.b16 %v2457
      %v3022 = vunpack.c.h.b16 %v2457
      %v3023 = vunpack.c.l.b16 %v2458
      %v3024 = vunpack.c.h.b16 %v2458
      %v3025 = vunpack.c.l.b16 %v2459
      %v3026 = vunpack.c.h.b16 %v2459
      %v3027 = vunpack.c.l.b16 %v2460
      %v3028 = vunpack.c.h.b16 %v2460
      %v3029 = vunpack.c.l.b16 %v2461
      %v3030 = vunpack.c.h.b16 %v2461
      %v3031 = vunpack.c.l.b16 %v2462
      %v3032 = vunpack.c.h.b16 %v2462
      %v3033 = vunpack.c.l.b16 %v2463
      %v3034 = vunpack.c.h.b16 %v2463
      %v3035 = vunpack.c.l.b16 %v2464
      %v3036 = vunpack.c.h.b16 %v2464
      %v3037 = vunpack.c.l.b16 %v2465
      %v3038 = vunpack.c.h.b16 %v2465
      %v3039 = vunpack.c.l.b16 %v2466
      %v3040 = vunpack.c.h.b16 %v2466
      %v3041 = vunpack.c.l.b16 %v2467
      %v3042 = vunpack.c.h.b16 %v2467
      %v3043 = vunpack.c.l.b16 %v2468
      %v3044 = vunpack.c.h.b16 %v2468
      %v3045 = vunpack.c.l.b16 %v2469
      %v3046 = vunpack.c.h.b16 %v2469
      %v3047 = vunpack.c.l.b16 %v2470
      %v3048 = vunpack.c.h.b16 %v2470
      %v3049 = vunpack.c.l.b16 %v2471
      %v3050 = vunpack.c.h.b16 %v2471
      %v3051 = vunpack.c.l.b16 %v2472
      %v3052 = vunpack.c.h.b16 %v2472
      %v3053 = vunpack.c.l.b16 %v2473
      %v3054 = vunpack.c.h.b16 %v2473
      %v3055 = vunpack.c.l.b16 %v2474
      %v3056 = vunpack.c.h.b16 %v2474
      %v3057 = vunpack.c.l.b16 %v2475
      %v3058 = vunpack.c.h.b16 %v2475
      %v3059 = vunpack.c.l.b16 %v2476
      %v3060 = vunpack.c.h.b16 %v2476
      %v3061 = vunpack.c.l.b16 %v2477
      %v3062 = vunpack.c.h.b16 %v2477
      %v3063 = vunpack.c.l.b16 %v2478
      %v3064 = vunpack.c.h.b16 %v2478
      %v3065 = vunpack.c.l.b16 %v2479
      %v3066 = vunpack.c.h.b16 %v2479
      %v3067 = vunpack.c.l.b16 %v2480
      %v3068 = vunpack.c.h.b16 %v2480
      %v3069 = vunpack.c.l.b16 %v2481
      %v3070 = vunpack.c.h.b16 %v2481
      %v3071 = vunpack.c.l.b16 %v2482
      %v3072 = vunpack.c.h.b16 %v2482
      %v3073 = vunpack.c.l.b16 %v2483
      %v3074 = vunpack.c.h.b16 %v2483
      %v3075 = vunpack.c.l.b16 %v2484
      %v3076 = vunpack.c.h.b16 %v2484
      %v3077 = vunpack.c.l.b16 %v2485
      %v3078 = vunpack.c.h.b16 %v2485
      %v3079 = vunpack.c.l.b16 %v2486
      %v3080 = vunpack.c.h.b16 %v2486
      %v3081 = vunpack.c.l.b16 %v2487
      %v3082 = vunpack.c.h.b16 %v2487
      %v3083 = vunpack.c.l.b16 %v2488
      %v3084 = vunpack.c.h.b16 %v2488
      %v3085 = vunpack.c.l.b16 %v2489
      %v3086 = vunpack.c.h.b16 %v2489
      %v3087 = vunpack.c.l.b16 %v2490
      %v3088 = vunpack.c.h.b16 %v2490
      %v3089 = vunpack.c.l.b16 %v2491
      %v3090 = vunpack.c.h.b16 %v2491
      %v3091 = vunpack.c.l.b16 %v2492
      %v3092 = vunpack.c.h.b16 %v2492
      %v3093 = vunpack.c.l.b16 %v2493
      %v3094 = vunpack.c.h.b16 %v2493
      %v3095 = vunpack.c.l.b16 %v2494
      %v3096 = vunpack.c.h.b16 %v2494
      %v3097 = vunpack.c.l.b16 %v2495
      %v3098 = vunpack.c.h.b16 %v2495
      %v3099 = vunpack.c.l.b16 %v2496
      %v3100 = vunpack.c.h.b16 %v2496
      %v3101 = vunpack.c.l.b16 %v2497
      %v3102 = vunpack.c.h.b16 %v2497
      %v3103 = vunpack.c.l.b16 %v2498
      %v3104 = vunpack.c.h.b16 %v2498
      %v3105 = vunpack.c.l.b16 %v2499
      %v3106 = vunpack.c.h.b16 %v2499
      %v3107 = vunpack.c.l.b16 %v2500
      %v3108 = vunpack.c.h.b16 %v2500
      %v3109 = vpack.c.b16 %v2731, %v2725
      %v3110 = vpack.c.b16 %v2732, %v2726
      %v3111 = vpack.c.b16 %v2733, %v2727
      %v3112 = vpack.c.b16 %v2734, %v2728
      %v3113 = vpack.c.b16 %v2735, %v2729
      %v3114 = vpack.c.b16 %v2736, %v2730
      %v3115 = vpack.c.b16 %v2743, %v2737
      %v3116 = vpack.c.b16 %v2744, %v2738
      %v3117 = vpack.c.b16 %v2745, %v2739
      %v3118 = vpack.c.b16 %v2746, %v2740
      %v3119 = vpack.c.b16 %v2747, %v2741
      %v3120 = vpack.c.b16 %v2748, %v2742
      %v3121 = vpack.c.b16 %v2755, %v2749
      %v3122 = vpack.c.b16 %v2756, %v2750
      %v3123 = vpack.c.b16 %v2757, %v2751
      %v3124 = vpack.c.b16 %v2758, %v2752
      %v3125 = vpack.c.b16 %v2759, %v2753
      %v3126 = vpack.c.b16 %v2760, %v2754
      %v3127 = vpack.c.b16 %v2767, %v2761
      %v3128 = vpack.c.b16 %v2768, %v2762
      %v3129 = vpack.c.b16 %v2769, %v2763
      %v3130 = vpack.c.b16 %v2770, %v2764
      %v3131 = vpack.c.b16 %v2771, %v2765
      %v3132 = vpack.c.b16 %v2772, %v2766
      %v3133 = vpack.c.b16 %v2779, %v2773
      %v3134 = vpack.c.b16 %v2780, %v2774
      %v3135 = vpack.c.b16 %v2781, %v2775
      %v3136 = vpack.c.b16 %v2782, %v2776
      %v3137 = vpack.c.b16 %v2783, %v2777
      %v3138 = vpack.c.b16 %v2784, %v2778
      %v3139 = vpack.c.b16 %v2791, %v2785
      %v3140 = vpack.c.b16 %v2792, %v2786
      %v3141 = vpack.c.b16 %v2793, %v2787
      %v3142 = vpack.c.b16 %v2794, %v2788
      %v3143 = vpack.c.b16 %v2795, %v2789
      %v3144 = vpack.c.b16 %v2796, %v2790
      %v3145 = vpack.c.b16 %v2803, %v2797
      %v3146 = vpack.c.b16 %v2804, %v2798
      %v3147 = vpack.c.b16 %v2805, %v2799
      %v3148 = vpack.c.b16 %v2806, %v2800
      %v3149 = vpack.c.b16 %v2807, %v2801
      %v3150 = vpack.c.b16 %v2808, %v2802
      %v3151 = vpack.c.b16 %v2815, %v2809
      %v3152 = vpack.c.b16 %v2816, %v2810
      %v3153 = vpack.c.b16 %v2817, %v2811
      %v3154 = vpack.c.b16 %v2818, %v2812
      %v3155 = vpack.c.b16 %v2819, %v2813
      %v3156 = vpack.c.b16 %v2820, %v2814
      %v3157 = vpack.c.b16 %v2827, %v2821
      %v3158 = vpack.c.b16 %v2828, %v2822
      %v3159 = vpack.c.b16 %v2829, %v2823
      %v3160 = vpack.c.b16 %v2830, %v2824
      %v3161 = vpack.c.b16 %v2831, %v2825
      %v3162 = vpack.c.b16 %v2832, %v2826
      %v3163 = vpack.c.b16 %v2839, %v2833
      %v3164 = vpack.c.b16 %v2840, %v2834
      %v3165 = vpack.c.b16 %v2841, %v2835
      %v3166 = vpack.c.b16 %v2842, %v2836
      %v3167 = vpack.c.b16 %v2843, %v2837
      %v3168 = vpack.c.b16 %v2844, %v2838
      %v3169 = vpack.c.b16 %v2851, %v2845
      %v3170 = vpack.c.b16 %v2852, %v2846
      %v3171 = vpack.c.b16 %v2853, %v2847
      %v3172 = vpack.c.b16 %v2854, %v2848
      %v3173 = vpack.c.b16 %v2855, %v2849
      %v3174 = vpack.c.b16 %v2856, %v2850
      %v3175 = vpack.c.b16 %v2863, %v2857
      %v3176 = vpack.c.b16 %v2864, %v2858
      %v3177 = vpack.c.b16 %v2865, %v2859
      %v3178 = vpack.c.b16 %v2866, %v2860
      %v3179 = vpack.c.b16 %v2867, %v2861
      %v3180 = vpack.c.b16 %v2868, %v2862
      %v3181 = vpack.c.b16 %v2875, %v2869
      %v3182 = vpack.c.b16 %v2876, %v2870
      %v3183 = vpack.c.b16 %v2877, %v2871
      %v3184 = vpack.c.b16 %v2878, %v2872
      %v3185 = vpack.c.b16 %v2879, %v2873
      %v3186 = vpack.c.b16 %v2880, %v2874
      %v3187 = vpack.c.b16 %v2887, %v2881
      %v3188 = vpack.c.b16 %v2888, %v2882
      %v3189 = vpack.c.b16 %v2889, %v2883
      %v3190 = vpack.c.b16 %v2890, %v2884
      %v3191 = vpack.c.b16 %v2891, %v2885
      %v3192 = vpack.c.b16 %v2892, %v2886
      %v3193 = vpack.c.b16 %v2899, %v2893
      %v3194 = vpack.c.b16 %v2900, %v2894
      %v3195 = vpack.c.b16 %v2901, %v2895
      %v3196 = vpack.c.b16 %v2902, %v2896
      %v3197 = vpack.c.b16 %v2903, %v2897
      %v3198 = vpack.c.b16 %v2904, %v2898
      %v3199 = vpack.c.b16 %v2911, %v2905
      %v3200 = vpack.c.b16 %v2912, %v2906
      %v3201 = vpack.c.b16 %v2913, %v2907
      %v3202 = vpack.c.b16 %v2914, %v2908
      %v3203 = vpack.c.b16 %v2915, %v2909
      %v3204 = vpack.c.b16 %v2916, %v2910
      %v3205 = vpack.c.b16 %v2923, %v2917
      %v3206 = vpack.c.b16 %v2924, %v2918
      %v3207 = vpack.c.b16 %v2925, %v2919
      %v3208 = vpack.c.b16 %v2926, %v2920
      %v3209 = vpack.c.b16 %v2927, %v2921
      %v3210 = vpack.c.b16 %v2928, %v2922
      %v3211 = vpack.c.b16 %v2935, %v2929
      %v3212 = vpack.c.b16 %v2936, %v2930
      %v3213 = vpack.c.b16 %v2937, %v2931
      %v3214 = vpack.c.b16 %v2938, %v2932
      %v3215 = vpack.c.b16 %v2939, %v2933
      %v3216 = vpack.c.b16 %v2940, %v2934
      %v3217 = vpack.c.b16 %v2947, %v2941
      %v3218 = vpack.c.b16 %v2948, %v2942
      %v3219 = vpack.c.b16 %v2949, %v2943
      %v3220 = vpack.c.b16 %v2950, %v2944
      %v3221 = vpack.c.b16 %v2951, %v2945
      %v3222 = vpack.c.b16 %v2952, %v2946
      %v3223 = vpack.c.b16 %v2959, %v2953
      %v3224 = vpack.c.b16 %v2960, %v2954
      %v3225 = vpack.c.b16 %v2961, %v2955
      %v3226 = vpack.c.b16 %v2962, %v2956
      %v3227 = vpack.c.b16 %v2963, %v2957
      %v3228 = vpack.c.b16 %v2964, %v2958
      %v3229 = vpack.c.b16 %v2971, %v2965
      %v3230 = vpack.c.b16 %v2972, %v2966
      %v3231 = vpack.c.b16 %v2973, %v2967
      %v3232 = vpack.c.b16 %v2974, %v2968
      %v3233 = vpack.c.b16 %v2975, %v2969
      %v3234 = vpack.c.b16 %v2976, %v2970
      %v3235 = vpack.c.b16 %v2983, %v2977
      %v3236 = vpack.c.b16 %v2984, %v2978
      %v3237 = vpack.c.b16 %v2985, %v2979
      %v3238 = vpack.c.b16 %v2986, %v2980
      %v3239 = vpack.c.b16 %v2987, %v2981
      %v3240 = vpack.c.b16 %v2988, %v2982
      %v3241 = vpack.c.b16 %v2995, %v2989
      %v3242 = vpack.c.b16 %v2996, %v2990
      %v3243 = vpack.c.b16 %v2997, %v2991
      %v3244 = vpack.c.b16 %v2998, %v2992
      %v3245 = vpack.c.b16 %v2999, %v2993
      %v3246 = vpack.c.b16 %v3000, %v2994
      %v3247 = vpack.c.b16 %v3007, %v3001
      %v3248 = vpack.c.b16 %v3008, %v3002
      %v3249 = vpack.c.b16 %v3009, %v3003
      %v3250 = vpack.c.b16 %v3010, %v3004
      %v3251 = vpack.c.b16 %v3011, %v3005
      %v3252 = vpack.c.b16 %v3012, %v3006
      %v3253 = vpack.c.b16 %v3019, %v3013
      %v3254 = vpack.c.b16 %v3020, %v3014
      %v3255 = vpack.c.b16 %v3021, %v3015
      %v3256 = vpack.c.b16 %v3022, %v3016
      %v3257 = vpack.c.b16 %v3023, %v3017
      %v3258 = vpack.c.b16 %v3024, %v3018
      %v3259 = vpack.c.b16 %v3031, %v3025
      %v3260 = vpack.c.b16 %v3032, %v3026
      %v3261 = vpack.c.b16 %v3033, %v3027
      %v3262 = vpack.c.b16 %v3034, %v3028
      %v3263 = vpack.c.b16 %v3035, %v3029
      %v3264 = vpack.c.b16 %v3036, %v3030
      %v3265 = vpack.c.b16 %v3043, %v3037
      %v3266 = vpack.c.b16 %v3044, %v3038
      %v3267 = vpack.c.b16 %v3045, %v3039
      %v3268 = vpack.c.b16 %v3046, %v3040
      %v3269 = vpack.c.b16 %v3047, %v3041
      %v3270 = vpack.c.b16 %v3048, %v3042
      %v3271 = vpack.c.b16 %v3055, %v3049
      %v3272 = vpack.c.b16 %v3056, %v3050
      %v3273 = vpack.c.b16 %v3057, %v3051
      %v3274 = vpack.c.b16 %v3058, %v3052
      %v3275 = vpack.c.b16 %v3059, %v3053
      %v3276 = vpack.c.b16 %v3060, %v3054
      %v3277 = vpack.c.b16 %v3067, %v3061
      %v3278 = vpack.c.b16 %v3068, %v3062
      %v3279 = vpack.c.b16 %v3069, %v3063
      %v3280 = vpack.c.b16 %v3070, %v3064
      %v3281 = vpack.c.b16 %v3071, %v3065
      %v3282 = vpack.c.b16 %v3072, %v3066
      %v3283 = vpack.c.b16 %v3079, %v3073
      %v3284 = vpack.c.b16 %v3080, %v3074
      %v3285 = vpack.c.b16 %v3081, %v3075
      %v3286 = vpack.c.b16 %v3082, %v3076
      %v3287 = vpack.c.b16 %v3083, %v3077
      %v3288 = vpack.c.b16 %v3084, %v3078
      %v3289 = vpack.c.b16 %v3091, %v3085
      %v3290 = vpack.c.b16 %v3092, %v3086
      %v3291 = vpack.c.b16 %v3093, %v3087
      %v3292 = vpack.c.b16 %v3094, %v3088
      %v3293 = vpack.c.b16 %v3095, %v3089
      %v3294 = vpack.c.b16 %v3096, %v3090
      %v3295 = vpack.c.b16 %v3103, %v3097
      %v3296 = vpack.c.b16 %v3104, %v3098
      %v3297 = vpack.c.b16 %v3105, %v3099
      %v3298 = vpack.c.b16 %v3106, %v3100
      %v3299 = vpack.c.b16 %v3107, %v3101
      %v3300 = vpack.c.b16 %v3108, %v3102
      %3493 = vmatprep.subr.bf16.mxu0 %v3110
      %3494 = vmatpush1.bf16.msra.mxu0 %v3109
      %3495 = vmatprep.subr.bf16.mxu0 %v3116
      %3496 = vmatpush1.bf16.msra.mxu0 %v3115
      %3497 = vmatprep.subr.bf16.mxu0 %v3122
      %3498 = vmatpush1.bf16.msra.mxu0 %v3121
      %3499 = vmatprep.subr.bf16.mxu0 %v3128
      %3500 = vmatpush1.bf16.msra.mxu0 %v3127
      %3501 = vmatprep.subr.bf16.mxu0 %v3134
      %3502 = vmatpush1.bf16.msra.mxu0 %v3133
      %3503 = vmatprep.subr.bf16.mxu0 %v3140
      %3504 = vmatpush1.bf16.msra.mxu0 %v3139
      %3505 = vmatprep.subr.bf16.mxu0 %v3146
      %3506 = vmatpush1.bf16.msra.mxu0 %v3145
      %3507 = vmatprep.subr.bf16.mxu0 %v3152
      %3508 = vmatpush1.bf16.msra.mxu0 %v3151
      %3509 = vmatprep.subr.bf16.mxu0 %v3158
      %3510 = vmatpush1.bf16.msra.mxu0 %v3157
      %3511 = vmatprep.subr.bf16.mxu0 %v3164
      %3512 = vmatpush1.bf16.msra.mxu0 %v3163
      %3513 = vmatprep.subr.bf16.mxu0 %v3170
      %3514 = vmatpush1.bf16.msra.mxu0 %v3169
      %3515 = vmatprep.subr.bf16.mxu0 %v3176
      %3516 = vmatpush1.bf16.msra.mxu0 %v3175
      %3517 = vmatprep.subr.bf16.mxu0 %v3182
      %3518 = vmatpush1.bf16.msra.mxu0 %v3181
      %3519 = vmatprep.subr.bf16.mxu0 %v3188
      %3520 = vmatpush1.bf16.msra.mxu0 %v3187
      %3521 = vmatprep.subr.bf16.mxu0 %v3194
      %3522 = vmatpush1.bf16.msra.mxu0 %v3193
      %3523 = vmatprep.subr.bf16.mxu0 %v3200
      %3524 = vmatpush1.bf16.msra.mxu0 %v3199
      %3525 = vmatprep.mubr.bf16.mxu0 %v2294
      %3526 = vmatmul.mubr.bf16.gmra.mrb[0].mxu0 %v2293
      %v3527 = vpop.f32.mrb[0].mxu0
      %v3528 = vadd.f32 %v2506, %v3527
      %v3529 = vpop.f32.mrb[0].mxu0
      %v3530 = vadd.f32 %v2510, %v3529
      %v3531 = vpop.f32.mrb[0].mxu0
      %v3532 = vadd.f32 %v2506, %v3531
      %v3533 = vpop.f32.mrb[0].mxu0
      %v3534 = vadd.f32 %v2510, %v3533
      %3535 = vmatprep.mubr.bf16.mxu0 %v2298
      %3536 = vmatmul.mubr.bf16.gmra.mrb[0].mxu0 %v2297
      %v3537 = vpop.f32.mrb[0].mxu0
      %v3538 = vadd.f32 %v2506, %v3537
      %v3539 = vpop.f32.mrb[0].mxu0
      %v3540 = vadd.f32 %v2510, %v3539
      %v3541 = vpop.f32.mrb[0].mxu0
      %v3542 = vadd.f32 %v2506, %v3541
      %v3543 = vpop.f32.mrb[0].mxu0
      %v3544 = vadd.f32 %v2510, %v3543
      %3545 = vmatprep.mubr.bf16.mxu0 %v2302
      %3546 = vmatmul.mubr.bf16.gmra.mrb[0].mxu0 %v2301
      %v3547 = vpop.f32.mrb[0].mxu0
      %v3548 = vadd.f32 %v2506, %v3547
      %v3549 = vpop.f32.mrb[0].mxu0
      %v3550 = vadd.f32 %v2510, %v3549
      %v3551 = vpop.f32.mrb[0].mxu0
      %v3552 = vadd.f32 %v2506, %v3551
      %v3553 = vpop.f32.mrb[0].mxu0
      %v3554 = vadd.f32 %v2510, %v3553
      %3555 = vmatprep.mubr.bf16.mxu0 %v2306
      %3556 = vmatmul.mubr.bf16.gmra.mrb[0].mxu0 %v2305
      %v3557 = vpop.f32.mrb[0].mxu0
      %v3558 = vadd.f32 %v2506, %v3557
      %v3559 = vpop.f32.mrb[0].mxu0
      %v3560 = vadd.f32 %v2510, %v3559
      %v3561 = vpop.f32.mrb[0].mxu0
      %v3562 = vadd.f32 %v2506, %v3561
      %v3563 = vpop.f32.mrb[0].mxu0
      %v3564 = vadd.f32 %v2510, %v3563
      %3565 = vdwg.mxu0
      %3566 = vmatprep.subr.bf16.mxu0 %v3206
      %3567 = vmatpush1.bf16.msra.mxu0 %v3205
      %3568 = vmatprep.subr.bf16.mxu0 %v3212
      %3569 = vmatpush1.bf16.msra.mxu0 %v3211
      %3570 = vmatprep.subr.bf16.mxu0 %v3218
      %3571 = vmatpush1.bf16.msra.mxu0 %v3217
      %3572 = vmatprep.subr.bf16.mxu0 %v3224
      %3573 = vmatpush1.bf16.msra.mxu0 %v3223
      %3574 = vmatprep.subr.bf16.mxu0 %v3230
      %3575 = vmatpush1.bf16.msra.mxu0 %v3229
      %3576 = vmatprep.subr.bf16.mxu0 %v3236
      %3577 = vmatpush1.bf16.msra.mxu0 %v3235
      %3578 = vmatprep.subr.bf16.mxu0 %v3242
      %3579 = vmatpush1.bf16.msra.mxu0 %v3241
      %3580 = vmatprep.subr.bf16.mxu0 %v3248
      %3581 = vmatpush1.bf16.msra.mxu0 %v3247
      %3582 = vmatprep.subr.bf16.mxu0 %v3254
      %3583 = vmatpush1.bf16.msra.mxu0 %v3253
      %3584 = vmatprep.subr.bf16.mxu0 %v3260
      %3585 = vmatpush1.bf16.msra.mxu0 %v3259
      %3586 = vmatprep.subr.bf16.mxu0 %v3266
      %3587 = vmatpush1.bf16.msra.mxu0 %v3265
      %3588 = vmatprep.subr.bf16.mxu0 %v3272
      %3589 = vmatpush1.bf16.msra.mxu0 %v3271
      %3590 = vmatprep.subr.bf16.mxu0 %v3278
      %3591 = vmatpush1.bf16.msra.mxu0 %v3277
      %3592 = vmatprep.subr.bf16.mxu0 %v3284
      %3593 = vmatpush1.bf16.msra.mxu0 %v3283
      %3594 = vmatprep.subr.bf16.mxu0 %v3290
      %3595 = vmatpush1.bf16.msra.mxu0 %v3289
      %3596 = vmatprep.subr.bf16.mxu0 %v3296
      %3597 = vmatpush1.bf16.msra.mxu0 %v3295
      %3598 = vmatprep.mubr.bf16.mxu0 %v2296
      %3599 = vmatmul.mubr.bf16.gmra.mrb[0].mxu0 %v2295
      %v3600 = vpop.f32.mrb[0].mxu0
      %v3601 = vadd.f32 %v3528, %v3600
      %v3602 = vpop.f32.mrb[0].mxu0
      %v3603 = vadd.f32 %v3530, %v3602
      %v3604 = vpop.f32.mrb[0].mxu0
      %v3605 = vadd.f32 %v3532, %v3604
      %v3606 = vpop.f32.mrb[0].mxu0
      %v3607 = vadd.f32 %v3534, %v3606
      %3608 = vmatprep.mubr.bf16.mxu0 %v2300
      %3609 = vmatmul.mubr.bf16.gmra.mrb[0].mxu0 %v2299
      %v3610 = vpop.f32.mrb[0].mxu0
      %v3611 = vadd.f32 %v3538, %v3610
      %v3612 = vpop.f32.mrb[0].mxu0
      %v3613 = vadd.f32 %v3540, %v3612
      %v3614 = vpop.f32.mrb[0].mxu0
      %v3615 = vadd.f32 %v3542, %v3614
      %v3616 = vpop.f32.mrb[0].mxu0
      %v3617 = vadd.f32 %v3544, %v3616
      %3618 = vmatprep.mubr.bf16.mxu0 %v2304
      %3619 = vmatmul.mubr.bf16.gmra.mrb[0].mxu0 %v2303
      %v3620 = vpop.f32.mrb[0].mxu0
      %v3621 = vadd.f32 %v3548, %v3620
      %v3622 = vpop.f32.mrb[0].mxu0
      %v3623 = vadd.f32 %v3550, %v3622
      %v3624 = vpop.f32.mrb[0].mxu0
      %v3625 = vadd.f32 %v3552, %v3624
      %v3626 = vpop.f32.mrb[0].mxu0
      %v3627 = vadd.f32 %v3554, %v3626
      %3628 = vmatprep.mubr.bf16.mxu0 %v2308
      %3629 = vmatmul.mubr.bf16.gmra.mrb[0].mxu0 %v2307
      %v3630 = vpop.f32.mrb[0].mxu0
      %v3631 = vadd.f32 %v3558, %v3630
      %v3632 = vpop.f32.mrb[0].mxu0
      %v3633 = vadd.f32 %v3560, %v3632
      %v3634 = vpop.f32.mrb[0].mxu0
      %v3635 = vadd.f32 %v3562, %v3634
      %v3636 = vpop.f32.mrb[0].mxu0
      %v3637 = vadd.f32 %v3564, %v3636
      %3638 = vdwg.mxu0
      %3639 = vmatprep.subr.bf16.mxu0 %v3112
      %3640 = vmatpush1.bf16.msra.mxu0 %v3111
      %3641 = vmatprep.subr.bf16.mxu0 %v3118
      %3642 = vmatpush1.bf16.msra.mxu0 %v3117
      %3643 = vmatprep.subr.bf16.mxu0 %v3124
      %3644 = vmatpush1.bf16.msra.mxu0 %v3123
      %3645 = vmatprep.subr.bf16.mxu0 %v3130
      %3646 = vmatpush1.bf16.msra.mxu0 %v3129
      %3647 = vmatprep.subr.bf16.mxu0 %v3136
      %3648 = vmatpush1.bf16.msra.mxu0 %v3135
      %3649 = vmatprep.subr.bf16.mxu0 %v3142
      %3650 = vmatpush1.bf16.msra.mxu0 %v3141
      %3651 = vmatprep.subr.bf16.mxu0 %v3148
      %3652 = vmatpush1.bf16.msra.mxu0 %v3147
      %3653 = vmatprep.subr.bf16.mxu0 %v3154
      %3654 = vmatpush1.bf16.msra.mxu0 %v3153
      %3655 = vmatprep.subr.bf16.mxu0 %v3160
      %3656 = vmatpush1.bf16.msra.mxu0 %v3159
      %3657 = vmatprep.subr.bf16.mxu0 %v3166
      %3658 = vmatpush1.bf16.msra.mxu0 %v3165
      %3659 = vmatprep.subr.bf16.mxu0 %v3172
      %3660 = vmatpush1.bf16.msra.mxu0 %v3171
      %3661 = vmatprep.subr.bf16.mxu0 %v3178
      %3662 = vmatpush1.bf16.msra.mxu0 %v3177
      %3663 = vmatprep.subr.bf16.mxu0 %v3184
      %3664 = vmatpush1.bf16.msra.mxu0 %v3183
      %3665 = vmatprep.subr.bf16.mxu0 %v3190
      %3666 = vmatpush1.bf16.msra.mxu0 %v3189
      %3667 = vmatprep.subr.bf16.mxu0 %v3196
      %3668 = vmatpush1.bf16.msra.mxu0 %v3195
      %3669 = vmatprep.subr.bf16.mxu0 %v3202
      %3670 = vmatpush1.bf16.msra.mxu0 %v3201
      %3671 = vmatprep.mubr.bf16.mxu0 %v2294
      %3672 = vmatmul.mubr.bf16.gmra.mrb[0].mxu0 %v2293
      %v3673 = vpop.f32.mrb[0].mxu0
      %v3674 = vadd.f32 %v2514, %v3673
      %v3675 = vpop.f32.mrb[0].mxu0
      %v3676 = vadd.f32 %v2518, %v3675
      %v3677 = vpop.f32.mrb[0].mxu0
      %v3678 = vadd.f32 %v2514, %v3677
      %v3679 = vpop.f32.mrb[0].mxu0
      %v3680 = vadd.f32 %v2518, %v3679
      %3681 = vmatprep.mubr.bf16.mxu0 %v2298
      %3682 = vmatmul.mubr.bf16.gmra.mrb[0].mxu0 %v2297
      %v3683 = vpop.f32.mrb[0].mxu0
      %v3684 = vadd.f32 %v2514, %v3683
      %v3685 = vpop.f32.mrb[0].mxu0
      %v3686 = vadd.f32 %v2518, %v3685
      %v3687 = vpop.f32.mrb[0].mxu0
      %v3688 = vadd.f32 %v2514, %v3687
      %v3689 = vpop.f32.mrb[0].mxu0
      %v3690 = vadd.f32 %v2518, %v3689
      %3691 = vmatprep.mubr.bf16.mxu0 %v2302
      %3692 = vmatmul.mubr.bf16.gmra.mrb[0].mxu0 %v2301
      %v3693 = vpop.f32.mrb[0].mxu0
      %v3694 = vadd.f32 %v2514, %v3693
      %v3695 = vpop.f32.mrb[0].mxu0
      %v3696 = vadd.f32 %v2518, %v3695
      %v3697 = vpop.f32.mrb[0].mxu0
      %v3698 = vadd.f32 %v2514, %v3697
      %v3699 = vpop.f32.mrb[0].mxu0
      %v3700 = vadd.f32 %v2518, %v3699
      %3701 = vmatprep.mubr.bf16.mxu0 %v2306
      %3702 = vmatmul.mubr.bf16.gmra.mrb[0].mxu0 %v2305
      %v3703 = vpop.f32.mrb[0].mxu0
      %v3704 = vadd.f32 %v2514, %v3703
      %v3705 = vpop.f32.mrb[0].mxu0
      %v3706 = vadd.f32 %v2518, %v3705
      %v3707 = vpop.f32.mrb[0].mxu0
      %v3708 = vadd.f32 %v2514, %v3707
      %v3709 = vpop.f32.mrb[0].mxu0
      %v3710 = vadd.f32 %v2518, %v3709
      %3711 = vdwg.mxu0
      %3712 = vmatprep.subr.bf16.mxu0 %v3208
      %3713 = vmatpush1.bf16.msra.mxu0 %v3207
      %3714 = vmatprep.subr.bf16.mxu0 %v3214
      %3715 = vmatpush1.bf16.msra.mxu0 %v3213
      %3716 = vmatprep.subr.bf16.mxu0 %v3220
      %3717 = vmatpush1.bf16.msra.mxu0 %v3219
      %3718 = vmatprep.subr.bf16.mxu0 %v3226
      %3719 = vmatpush1.bf16.msra.mxu0 %v3225
      %3720 = vmatprep.subr.bf16.mxu0 %v3232
      %3721 = vmatpush1.bf16.msra.mxu0 %v3231
      %3722 = vmatprep.subr.bf16.mxu0 %v3238
      %3723 = vmatpush1.bf16.msra.mxu0 %v3237
      %3724 = vmatprep.subr.bf16.mxu0 %v3244
      %3725 = vmatpush1.bf16.msra.mxu0 %v3243
      %3726 = vmatprep.subr.bf16.mxu0 %v3250
      %3727 = vmatpush1.bf16.msra.mxu0 %v3249
      %3728 = vmatprep.subr.bf16.mxu0 %v3256
      %3729 = vmatpush1.bf16.msra.mxu0 %v3255
      %3730 = vmatprep.subr.bf16.mxu0 %v3262
      %3731 = vmatpush1.bf16.msra.mxu0 %v3261
      %3732 = vmatprep.subr.bf16.mxu0 %v3268
      %3733 = vmatpush1.bf16.msra.mxu0 %v3267
      %3734 = vmatprep.subr.bf16.mxu0 %v3274
      %3735 = vmatpush1.bf16.msra.mxu0 %v3273
      %3736 = vmatprep.subr.bf16.mxu0 %v3280
      %3737 = vmatpush1.bf16.msra.mxu0 %v3279
      %3738 = vmatprep.subr.bf16.mxu0 %v3286
      %3739 = vmatpush1.bf16.msra.mxu0 %v3285
      %3740 = vmatprep.subr.bf16.mxu0 %v3292
      %3741 = vmatpush1.bf16.msra.mxu0 %v3291
      %3742 = vmatprep.subr.bf16.mxu0 %v3298
      %3743 = vmatpush1.bf16.msra.mxu0 %v3297
      %3744 = vmatprep.mubr.bf16.mxu0 %v2296
      %3745 = vmatmul.mubr.bf16.gmra.mrb[0].mxu0 %v2295
      %v3746 = vpop.f32.mrb[0].mxu0
      %v3747 = vadd.f32 %v3674, %v3746
      %v3748 = vpop.f32.mrb[0].mxu0
      %v3749 = vadd.f32 %v3676, %v3748
      %v3750 = vpop.f32.mrb[0].mxu0
      %v3751 = vadd.f32 %v3678, %v3750
      %v3752 = vpop.f32.mrb[0].mxu0
      %v3753 = vadd.f32 %v3680, %v3752
      %3754 = vmatprep.mubr.bf16.mxu0 %v2300
      %3755 = vmatmul.mubr.bf16.gmra.mrb[0].mxu0 %v2299
      %v3756 = vpop.f32.mrb[0].mxu0
      %v3757 = vadd.f32 %v3684, %v3756
      %v3758 = vpop.f32.mrb[0].mxu0
      %v3759 = vadd.f32 %v3686, %v3758
      %v3760 = vpop.f32.mrb[0].mxu0
      %v3761 = vadd.f32 %v3688, %v3760
      %v3762 = vpop.f32.mrb[0].mxu0
      %v3763 = vadd.f32 %v3690, %v3762
      %3764 = vmatprep.mubr.bf16.mxu0 %v2304
      %3765 = vmatmul.mubr.bf16.gmra.mrb[0].mxu0 %v2303
      %v3766 = vpop.f32.mrb[0].mxu0
      %v3767 = vadd.f32 %v3694, %v3766
      %v3768 = vpop.f32.mrb[0].mxu0
      %v3769 = vadd.f32 %v3696, %v3768
      %v3770 = vpop.f32.mrb[0].mxu0
      %v3771 = vadd.f32 %v3698, %v3770
      %v3772 = vpop.f32.mrb[0].mxu0
      %v3773 = vadd.f32 %v3700, %v3772
      %3774 = vmatprep.mubr.bf16.mxu0 %v2308
      %3775 = vmatmul.mubr.bf16.gmra.mrb[0].mxu0 %v2307
      %v3776 = vpop.f32.mrb[0].mxu0
      %v3777 = vadd.f32 %v3704, %v3776
      %v3778 = vpop.f32.mrb[0].mxu0
      %v3779 = vadd.f32 %v3706, %v3778
      %v3780 = vpop.f32.mrb[0].mxu0
      %v3781 = vadd.f32 %v3708, %v3780
      %v3782 = vpop.f32.mrb[0].mxu0
      %v3783 = vadd.f32 %v3710, %v3782
      %3784 = vdwg.mxu0
      %3785 = vmatprep.subr.bf16.mxu0 %v3114
      %3786 = vmatpush1.bf16.msra.mxu0 %v3113
      %3787 = vmatprep.subr.bf16.mxu0 %v3120
      %3788 = vmatpush1.bf16.msra.mxu0 %v3119
      %3789 = vmatprep.subr.bf16.mxu0 %v3126
      %3790 = vmatpush1.bf16.msra.mxu0 %v3125
      %3791 = vmatprep.subr.bf16.mxu0 %v3132
      %3792 = vmatpush1.bf16.msra.mxu0 %v3131
      %3793 = vmatprep.subr.bf16.mxu0 %v3138
      %3794 = vmatpush1.bf16.msra.mxu0 %v3137
      %3795 = vmatprep.subr.bf16.mxu0 %v3144
      %3796 = vmatpush1.bf16.msra.mxu0 %v3143
      %3797 = vmatprep.subr.bf16.mxu0 %v3150
      %3798 = vmatpush1.bf16.msra.mxu0 %v3149
      %3799 = vmatprep.subr.bf16.mxu0 %v3156
      %3800 = vmatpush1.bf16.msra.mxu0 %v3155
      %3801 = vmatprep.subr.bf16.mxu0 %v3162
      %3802 = vmatpush1.bf16.msra.mxu0 %v3161
      %3803 = vmatprep.subr.bf16.mxu0 %v3168
      %3804 = vmatpush1.bf16.msra.mxu0 %v3167
      %3805 = vmatprep.subr.bf16.mxu0 %v3174
      %3806 = vmatpush1.bf16.msra.mxu0 %v3173
      %3807 = vmatprep.subr.bf16.mxu0 %v3180
      %3808 = vmatpush1.bf16.msra.mxu0 %v3179
      %3809 = vmatprep.subr.bf16.mxu0 %v3186
      %3810 = vmatpush1.bf16.msra.mxu0 %v3185
      %3811 = vmatprep.subr.bf16.mxu0 %v3192
      %3812 = vmatpush1.bf16.msra.mxu0 %v3191
      %3813 = vmatprep.subr.bf16.mxu0 %v3198
      %3814 = vmatpush1.bf16.msra.mxu0 %v3197
      %3815 = vmatprep.subr.bf16.mxu0 %v3204
      %3816 = vmatpush1.bf16.msra.mxu0 %v3203
      %3817 = vmatprep.mubr.bf16.mxu0 %v2294
      %3818 = vmatmul.mubr.bf16.gmra.mrb[0].mxu0 %v2293
      %v3819 = vpop.f32.mrb[0].mxu0
      %v3820 = vadd.f32 %v2522, %v3819
      %v3821 = vpop.f32.mrb[0].mxu0
      %v3822 = vadd.f32 %v2526, %v3821
      %v3823 = vpop.f32.mrb[0].mxu0
      %v3824 = vadd.f32 %v2522, %v3823
      %v3825 = vpop.f32.mrb[0].mxu0
      %v3826 = vadd.f32 %v2526, %v3825
      %3827 = vmatprep.mubr.bf16.mxu0 %v2298
      %3828 = vmatmul.mubr.bf16.gmra.mrb[0].mxu0 %v2297
      %v3829 = vpop.f32.mrb[0].mxu0
      %v3830 = vadd.f32 %v2522, %v3829
      %v3831 = vpop.f32.mrb[0].mxu0
      %v3832 = vadd.f32 %v2526, %v3831
      %v3833 = vpop.f32.mrb[0].mxu0
      %v3834 = vadd.f32 %v2522, %v3833
      %v3835 = vpop.f32.mrb[0].mxu0
      %v3836 = vadd.f32 %v2526, %v3835
      %3837 = vmatprep.mubr.bf16.mxu0 %v2302
      %3838 = vmatmul.mubr.bf16.gmra.mrb[0].mxu0 %v2301
      %v3839 = vpop.f32.mrb[0].mxu0
      %v3840 = vadd.f32 %v2522, %v3839
      %v3841 = vpop.f32.mrb[0].mxu0
      %v3842 = vadd.f32 %v2526, %v3841
      %v3843 = vpop.f32.mrb[0].mxu0
      %v3844 = vadd.f32 %v2522, %v3843
      %v3845 = vpop.f32.mrb[0].mxu0
      %v3846 = vadd.f32 %v2526, %v3845
      %3847 = vmatprep.mubr.bf16.mxu0 %v2306
      %3848 = vmatmul.mubr.bf16.gmra.mrb[0].mxu0 %v2305
      %v3849 = vpop.f32.mrb[0].mxu0
      %v3850 = vadd.f32 %v2522, %v3849
      %v3851 = vpop.f32.mrb[0].mxu0
      %v3852 = vadd.f32 %v2526, %v3851
      %v3853 = vpop.f32.mrb[0].mxu0
      %v3854 = vadd.f32 %v2522, %v3853
      %v3855 = vpop.f32.mrb[0].mxu0
      %v3856 = vadd.f32 %v2526, %v3855
      %3857 = vdwg.mxu0
      %3858 = vmatprep.subr.bf16.mxu0 %v3210
      %3859 = vmatpush1.bf16.msra.mxu0 %v3209
      %3860 = vmatprep.subr.bf16.mxu0 %v3216
      %3861 = vmatpush1.bf16.msra.mxu0 %v3215
      %3862 = vmatprep.subr.bf16.mxu0 %v3222
      %3863 = vmatpush1.bf16.msra.mxu0 %v3221
      %3864 = vmatprep.subr.bf16.mxu0 %v3228
      %3865 = vmatpush1.bf16.msra.mxu0 %v3227
      %3866 = vmatprep.subr.bf16.mxu0 %v3234
      %3867 = vmatpush1.bf16.msra.mxu0 %v3233
      %3868 = vmatprep.subr.bf16.mxu0 %v3240
      %3869 = vmatpush1.bf16.msra.mxu0 %v3239
      %3870 = vmatprep.subr.bf16.mxu0 %v3246
      %3871 = vmatpush1.bf16.msra.mxu0 %v3245
      %3872 = vmatprep.subr.bf16.mxu0 %v3252
      %3873 = vmatpush1.bf16.msra.mxu0 %v3251
      %3874 = vmatprep.subr.bf16.mxu0 %v3258
      %3875 = vmatpush1.bf16.msra.mxu0 %v3257
      %3876 = vmatprep.subr.bf16.mxu0 %v3264
      %3877 = vmatpush1.bf16.msra.mxu0 %v3263
      %3878 = vmatprep.subr.bf16.mxu0 %v3270
      %3879 = vmatpush1.bf16.msra.mxu0 %v3269
      %3880 = vmatprep.subr.bf16.mxu0 %v3276
      %3881 = vmatpush1.bf16.msra.mxu0 %v3275
      %3882 = vmatprep.subr.bf16.mxu0 %v3282
      %3883 = vmatpush1.bf16.msra.mxu0 %v3281
      %3884 = vmatprep.subr.bf16.mxu0 %v3288
      %3885 = vmatpush1.bf16.msra.mxu0 %v3287
      %3886 = vmatprep.subr.bf16.mxu0 %v3294
      %3887 = vmatpush1.bf16.msra.mxu0 %v3293
      %3888 = vmatprep.subr.bf16.mxu0 %v3300
      %3889 = vmatpush1.bf16.msra.mxu0 %v3299
      %3890 = vmatprep.mubr.bf16.mxu0 %v2296
      %3891 = vmatmul.mubr.bf16.gmra.mrb[0].mxu0 %v2295
      %v3892 = vpop.f32.mrb[0].mxu0
      %v3893 = vadd.f32 %v3820, %v3892
      %v3894 = vpop.f32.mrb[0].mxu0
      %v3895 = vadd.f32 %v3822, %v3894
      %v3896 = vpop.f32.mrb[0].mxu0
      %v3897 = vadd.f32 %v3824, %v3896
      %v3898 = vpop.f32.mrb[0].mxu0
      %v3899 = vadd.f32 %v3826, %v3898
      %3900 = vmatprep.mubr.bf16.mxu0 %v2300
      %3901 = vmatmul.mubr.bf16.gmra.mrb[0].mxu0 %v2299
      %v3902 = vpop.f32.mrb[0].mxu0
      %v3903 = vadd.f32 %v3830, %v3902
      %v3904 = vpop.f32.mrb[0].mxu0
      %v3905 = vadd.f32 %v3832, %v3904
      %v3906 = vpop.f32.mrb[0].mxu0
      %v3907 = vadd.f32 %v3834, %v3906
      %v3908 = vpop.f32.mrb[0].mxu0
      %v3909 = vadd.f32 %v3836, %v3908
      %3910 = vmatprep.mubr.bf16.mxu0 %v2304
      %3911 = vmatmul.mubr.bf16.gmra.mrb[0].mxu0 %v2303
      %v3912 = vpop.f32.mrb[0].mxu0
      %v3913 = vadd.f32 %v3840, %v3912
      %v3914 = vpop.f32.mrb[0].mxu0
      %v3915 = vadd.f32 %v3842, %v3914
      %v3916 = vpop.f32.mrb[0].mxu0
      %v3917 = vadd.f32 %v3844, %v3916
      %v3918 = vpop.f32.mrb[0].mxu0
      %v3919 = vadd.f32 %v3846, %v3918
      %3920 = vmatprep.mubr.bf16.mxu0 %v2308
      %3921 = vmatmul.mubr.bf16.gmra.mrb[0].mxu0 %v2307
      %v3922 = vpop.f32.mrb[0].mxu0
      %v3923 = vadd.f32 %v3850, %v3922
      %v3924 = vpop.f32.mrb[0].mxu0
      %v3925 = vadd.f32 %v3852, %v3924
      %v3926 = vpop.f32.mrb[0].mxu0
      %v3927 = vadd.f32 %v3854, %v3926
      %v3928 = vpop.f32.mrb[0].mxu0
      %v3929 = vadd.f32 %v3856, %v3928
      %3930 = vdwg.mxu0
      %3931 = vst [vmem:[%s447] sm:$0xff] %v3601
      %3932 = vst [vmem:[%s447 + $0x8] sm:$0xff] %v3603
      %3933 = vst [vmem:[%s447 + $0x10] sm:$0xff] %v3747
      %3934 = vst [vmem:[%s447 + $0x18] sm:$0xff] %v3749
      %3935 = vst [vmem:[%s447 + $0x20] sm:$0xff] %v3893
      %3936 = vst [vmem:[%s447 + $0x28] sm:$0xff] %v3895
      %3937 = vst [vmem:[%s447 + $0x30] sm:$0xff] %v3605
      %3938 = vst [vmem:[%s447 + $0x38] sm:$0xff] %v3607
      %3939 = vst [vmem:[%s447 + $0x40] sm:$0xff] %v3751
      %3940 = vst [vmem:[%s447 + $0x48] sm:$0xff] %v3753
      %3941 = vst [vmem:[%s447 + $0x50] sm:$0xff] %v3897
      %3942 = vst [vmem:[%s447 + $0x58] sm:$0xff] %v3899
      %3943 = vst [vmem:[%s447 + $0x60] sm:$0xff] %v3611
      %3944 = vst [vmem:[%s447 + $0x68] sm:$0xff] %v3613
      %3945 = vst [vmem:[%s447 + $0x70] sm:$0xff] %v3757
      %3946 = vst [vmem:[%s447 + $0x78] sm:$0xff] %v3759
      %3947 = vst [vmem:[%s447 + $0x80] sm:$0xff] %v3903
      %3948 = vst [vmem:[%s447 + $0x88] sm:$0xff] %v3905
      %3949 = vst [vmem:[%s447 + $0x90] sm:$0xff] %v3615
      %3950 = vst [vmem:[%s447 + $0x98] sm:$0xff] %v3617
      %3951 = vst [vmem:[%s447 + $0xa0] sm:$0xff] %v3761
      %3952 = vst [vmem:[%s447 + $0xa8] sm:$0xff] %v3763
      %3953 = vst [vmem:[%s447 + $0xb0] sm:$0xff] %v3907
      %3954 = vst [vmem:[%s447 + $0xb8] sm:$0xff] %v3909
      %3955 = vst [vmem:[%s447 + $0xc0] sm:$0xff] %v3621
      %3956 = vst [vmem:[%s447 + $0xc8] sm:$0xff] %v3623
      %3957 = vst [vmem:[%s447 + $0xd0] sm:$0xff] %v3767
      %3958 = vst [vmem:[%s447 + $0xd8] sm:$0xff] %v3769
      %3959 = vst [vmem:[%s447 + $0xe0] sm:$0xff] %v3913
      %3960 = vst [vmem:[%s447 + $0xe8] sm:$0xff] %v3915
      %3961 = vst [vmem:[%s447 + $0xf0] sm:$0xff] %v3625
      %3962 = vst [vmem:[%s447 + $0xf8] sm:$0xff] %v3627
      %3963 = vst [vmem:[%s447 + $0x100] sm:$0xff] %v3771
      %3964 = vst [vmem:[%s447 + $0x108] sm:$0xff] %v3773
      %3965 = vst [vmem:[%s447 + $0x110] sm:$0xff] %v3917
      %3966 = vst [vmem:[%s447 + $0x118] sm:$0xff] %v3919
      %3967 = vst [vmem:[%s447 + $0x120] sm:$0xff] %v3631
      %3968 = vst [vmem:[%s447 + $0x128] sm:$0xff] %v3633
      %3969 = vst [vmem:[%s447 + $0x130] sm:$0xff] %v3777
      %3970 = vst [vmem:[%s447 + $0x138] sm:$0xff] %v3779
      %3971 = vst [vmem:[%s447 + $0x140] sm:$0xff] %v3923
      %3972 = vst [vmem:[%s447 + $0x148] sm:$0xff] %v3925
      %3973 = vst [vmem:[%s447 + $0x150] sm:$0xff] %v3635
      %3974 = vst [vmem:[%s447 + $0x158] sm:$0xff] %v3637
      %3975 = vst [vmem:[%s447 + $0x160] sm:$0xff] %v3781
      %3976 = vst [vmem:[%s447 + $0x168] sm:$0xff] %v3783
      %3977 = vst [vmem:[%s447 + $0x170] sm:$0xff] %v3927
      %3978 = vst [vmem:[%s447 + $0x178] sm:$0xff] %v3929
      %s3979 = smul.u32 8, %s24
      %p3980 = scmp.lt.s32.totalorder %s3979, 15
      %s3981 = scalar_select %p3980, %s3979, 15
      %s3982 = smul.addr %s3981, 6
      %s3983 = smul.addr %s3982, 8
      %s3984 = scalar_lea.vmem %s13, %s3983
      // Predicated region
      $region73: #{decoder_forward.1} parent=71 // pred_check
        %p3985 = pneg %p320
      $region74: #{decoder_forward.1} parent=71 // pred_check_branch
        %3987 = sbr.rel (%p3985) target = $region76
      $region75: #{decoder_forward.1} parent=71 // pred_region
        %s3988 = smul.u32 8, %s24
      $region76: #{decoder_forward.1} parent=71 // pred_fallthru
        _
    $region72: #{decoder_forward.1} parent=5 // pred_fallthru
      _
    %p3989 = scmp.le.s32.totalorder 2, %s19
    // Predicated region
    $region77: #{decoder_forward.1} parent=5 // pred_check
      %p3990 = pneg %p3989
    $region78: #{decoder_forward.1} parent=5 // pred_check_branch
      %3992 = sbr.rel (%p3990) target = $region80
    $region79: #{decoder_forward.1} parent=5 // pred_region
      %s3993 = ssub.s32 %s19, 2
      // Predicated region
      $region81: #{decoder_forward.1} parent=79 // pred_check
        %p3994 = pneg %p326
      $region82: #{decoder_forward.1} parent=79 // pred_check_branch
        %3996 = sbr.rel (%p3994) target = $region84
      $region83: #{decoder_forward.1} parent=79 // pred_region
        %s3997 = smul.u32 8, %s25
        %p3998 = scmp.lt.s32.totalorder %s3997, 15
        %s3999 = scalar_select %p3998, %s3997, 15
        %s4000 = smul.addr %s3999, 6
        %s4001 = smul.addr %s4000, 8
        %s4002 = scalar_lea.vmem %s13, %s4001
      $region84: #{decoder_forward.1} parent=79 // pred_fallthru
        _
    $region80: #{decoder_forward.1} parent=5 // pred_fallthru
      _
  $region6: #{decoder_forward.1} parent=0 // loop_footer
    %s23 = sadd.s32 1, %s19
  $region7: #{decoder_forward.1} parent=0 // loop_footer_branch
    %18 = sbr.rel target = $region3
  $region8: #{decoder_forward.1} parent=0 // loop_exit
    _

</llo_original>
